<compile_context>
chip_gen: v6e
topology: v6e:2x2x1
jax: 0.10.0
libtpu: 0.0.40
codegen_flags: <defaults>
</compile_context>

<pallas_src>
import functools

import jax
import jax.numpy as jnp
from jax.experimental import pallas as pl
from jax.experimental.pallas import tpu as pltpu


def _round_up(x, m):
    return (x + m - 1) // m * m


def _sigmoid(x):
    # Single EUP transcendental (tanh) instead of exp + reciprocal.
    return 0.5 * jnp.tanh(0.5 * x) + 0.5


def _default_vmem_limit():
    """Scoped-VMEM cap derived from the chip generation (v7x: 64 MiB phys, v5e/v6e: 128)."""
    try:
        cap = pltpu.get_tpu_info().vmem_capacity_bytes
    except Exception:
        cap = 64 * 1024 * 1024                      # conservative: v7x per-TC physical
    return int(min(cap * 3 // 4, 96 * 1024 * 1024))  # leave headroom below physical


def lstm_fc_kernel(x_ref, wih_ref, whh_ref, b_ref, wfc_ref, bfc_ref,
                   out_ref, h_scr, c_scr, *, hidden_pad, seq_len):
    """One (batch block, time tile) grid step.

    x_ref   : (tb, bb, D)   bf16  TIME-MAJOR input tile (streamed from HBM)
    wih_ref : (D, 4*Hp)     bf16  W_ih^T, per-gate columns padded to Hp (padding == 0)
    whh_ref : (Hp, 4*Hp)    bf16  W_hh^T, per-gate columns padded to Hp (padding == 0)
    b_ref   : (1, 4*Hp)     f32   b_ih + b_hh, per-gate padded with zeros
    wfc_ref : (Hp, O)       bf16  fc.weight^T (padded rows == 0)
    bfc_ref : (1, O)        f32   fc.bias
    out_ref : (bb, O)       f32
    h_scr   : (bb, Hp)      bf16  recurrent hidden state, persists across the time axis
    c_scr   : (bb, Hp)      f32   recurrent cell state, persists across the time axis
    """
    Hp = hidden_pad
    tb, bb, d = x_ref.shape
    t_blk = pl.program_id(1)
    nt = pl.num_programs(1)

    @pl.when(t_blk == 0)
    def _init():
        h_scr[...] = jnp.zeros_like(h_scr)
        c_scr[...] = jnp.zeros_like(c_scr)

    # ---- Phase 1: batched input projection for the whole time tile (one tall MXU matmul).
    # bf16 collapse of the leading (tb, bb) dims; bias folded in, f32 accumulation.
    x2 = x_ref[...].reshape(tb * bb, d)
    pre = jnp.dot(x2, wih_ref[...], preferred_element_type=jnp.float32) + b_ref[...]
    pre = pre.reshape(tb, bb, 4 * Hp)          # time-major: pre[j] is a dense (bb, 4Hp) slab

    # ---- Phase 2: serial recurrence over the tile (only h @ W_hh^T on the critical path).
    def step(j):
        gates = pre[j] + jnp.dot(h_scr[...], whh_ref[...],
                                 preferred_element_type=jnp.float32)   # (bb, 4Hp) f32
        i_g = _sigmoid(gates[:, 0 * Hp:1 * Hp])     # 128-lane aligned, unmasked slices
        f_g = _sigmoid(gates[:, 1 * Hp:2 * Hp])
        g_g = jnp.tanh(gates[:, 2 * Hp:3 * Hp])
        o_g = _sigmoid(gates[:, 3 * Hp:4 * Hp])
        c_new = f_g * c_scr[...] + i_g * g_g
        c_scr[...] = c_new
        h_scr[...] = (o_g * jnp.tanh(c_new)).astype(jnp.bfloat16)

    rem = seq_len % tb   # only steps j >= rem of the LAST time tile can be padding
    for j in range(tb):
        if rem == 0 or j < rem:
            step(j)                                   # statically always a real step
        else:
            @pl.when(t_blk * tb + j < seq_len)        # skip padded trailing steps
            def _(j=j):
                step(j)

    # ---- Final FC on the last hidden state.
    @pl.when(t_blk == nt - 1)
    def _final():
        out_ref[...] = (jnp.dot(h_scr[...], wfc_ref[...],
                                preferred_element_type=jnp.float32)
                        + bfc_ref[...]).astype(out_ref.dtype)


def prepare_params(raw, input_dim, hidden_dim, output_dim):
    """Pad / transpose PyTorch-layout weights into the kernel layout (bf16, lane-aligned gates)."""
    D, H, O = input_dim, hidden_dim, output_dim
    Hp = _round_up(H, 128)

    w_ih_t = raw["w_ih"].T                 # (D, 4H), gate order [i, f, g, o]
    w_hh_t = raw["w_hh"].T                 # (H, 4H)
    bias = raw["b_ih"] + raw["b_hh"]       # (4H,)
    w_fc_t = raw["w_fc"].T                 # (H, O)

    wih = jnp.zeros((D, 4 * Hp), jnp.float32)
    whh = jnp.zeros((Hp, 4 * Hp), jnp.float32)
    b = jnp.zeros((4 * Hp,), jnp.float32)
    for g in range(4):                     # place each gate block on a 128-lane boundary
        wih = wih.at[:, g * Hp:g * Hp + H].set(w_ih_t[:, g * H:(g + 1) * H])
        whh = whh.at[:H, g * Hp:g * Hp + H].set(w_hh_t[:, g * H:(g + 1) * H])
        b = b.at[g * Hp:g * Hp + H].set(bias[g * H:(g + 1) * H])
    wfc = jnp.zeros((Hp, O), jnp.float32).at[:H, :].set(w_fc_t)

    return {
        "w_ih": wih.astype(jnp.bfloat16),                   # (D, 4Hp)
        "w_hh": whh.astype(jnp.bfloat16),                   # (Hp, 4Hp)
        "bias": b[None, :],                                 # (1, 4Hp) f32
        "w_fc": wfc.astype(jnp.bfloat16),                   # (Hp, O)
        "b_fc": raw["b_fc"][None, :].astype(jnp.float32),   # (1, O)
        "dims": (D, H, O, Hp),
    }


def lstm_model_forward(x, kparams, *, time_block=16, vmem_limit_bytes=None):
    """x: (B, T, D) float32, batch_first like the PyTorch module. Returns (B, O) float32."""
    B, T, D = x.shape
    Din, H, O, Hp = kparams["dims"]
    assert D == Din

    tb = time_block
    B8 = _round_up(B, 8)
    if B8 <= 8:
        bb, B_pad = 8, 8                      # tiny batch: one block (megacore gives nothing)
    elif B8 <= 256:
        B_pad = _round_up(B, 16)
        bb = B_pad // 2                       # >= 2 blocks so v7x can shard the batch axis
    else:
        bb = 128
        B_pad = _round_up(B, 128)
    T_pad = _round_up(T, tb)

    # Time-major streaming layout (T_pad, B_pad, D); D deliberately NOT padded to 128
    # (full last dim satisfies the tiling rule, and small D would otherwise inflate DMA).
    x_tm = jnp.swapaxes(x, 0, 1).astype(jnp.bfloat16)          # (T, B, D)
    if (T_pad, B_pad) == (T, B):
        x_pad = x_tm
    else:
        x_pad = jnp.zeros((T_pad, B_pad, D), jnp.bfloat16).at[:T, :B, :].set(x_tm)

    if vmem_limit_bytes is None:
        vmem_limit_bytes = _default_vmem_limit()

    grid = (B_pad // bb, T_pad // tb)
    kernel = functools.partial(lstm_fc_kernel, hidden_pad=Hp, seq_len=T)

    out = pl.pallas_call(
        kernel,
        out_shape=jax.ShapeDtypeStruct((B_pad, O), jnp.float32),
        grid_spec=pltpu.PrefetchScalarGridSpec(
            num_scalar_prefetch=0,
            grid=grid,
            in_specs=[
                pl.BlockSpec((tb, bb, D), lambda b, t: (t, b, 0)),    # streamed x tile (time-major)
                pl.BlockSpec((D, 4 * Hp), lambda b, t: (0, 0)),       # W_ih^T (VMEM resident)
                pl.BlockSpec((Hp, 4 * Hp), lambda b, t: (0, 0)),      # W_hh^T (VMEM resident)
                pl.BlockSpec((1, 4 * Hp), lambda b, t: (0, 0)),       # bias
                pl.BlockSpec((Hp, O), lambda b, t: (0, 0)),           # fc weight^T
                pl.BlockSpec((1, O), lambda b, t: (0, 0)),            # fc bias
            ],
            out_specs=pl.BlockSpec((bb, O), lambda b, t: (b, 0)),
            scratch_shapes=[
                pltpu.VMEM((bb, Hp), jnp.bfloat16),   # h state (bf16: matmul input dtype)
                pltpu.VMEM((bb, Hp), jnp.float32),    # c state (f32)
            ],
        ),
        compiler_params=pltpu.CompilerParams(
            dimension_semantics=("parallel", "arbitrary"),   # batch || cores (v7x), time serial
            vmem_limit_bytes=vmem_limit_bytes,
        ),
    )(x_pad, kparams["w_ih"], kparams["w_hh"], kparams["bias"],
      kparams["w_fc"], kparams["b_fc"])

    return out[:B]


def init_params(key, input_dim, hidden_dim, output_dim):
    """Deterministic synthetic parameters with nn.LSTM / nn.Linear shapes (PyTorch layout)."""
    k = jax.random.split(key, 6)
    s = 1.0 / jnp.sqrt(hidden_dim)
    return {
        "w_ih": jax.random.uniform(k[0], (4 * hidden_dim, input_dim), jnp.float32, -s, s),
        "w_hh": jax.random.uniform(k[1], (4 * hidden_dim, hidden_dim), jnp.float32, -s, s),
        "b_ih": jax.random.uniform(k[2], (4 * hidden_dim,), jnp.float32, -s, s),
        "b_hh": jax.random.uniform(k[3], (4 * hidden_dim,), jnp.float32, -s, s),
        "w_fc": jax.random.uniform(k[4], (output_dim, hidden_dim), jnp.float32, -s, s),
        "b_fc": jax.random.uniform(k[5], (output_dim,), jnp.float32, -s, s),
    }


def reference_forward(x, p):
    """Pure-JAX f32 reference mirroring PyTorch nn.LSTM + fc(out[:, -1, :])."""
    B, T, D = x.shape
    H = p["w_hh"].shape[1]
    h = jnp.zeros((B, H), jnp.float32)
    c = jnp.zeros((B, H), jnp.float32)
    w_ih_t, w_hh_t = p["w_ih"].T, p["w_hh"].T
    bias = (p["b_ih"] + p["b_hh"])[None, :]
    for t in range(T):
        gates = x[:, t, :] @ w_ih_t + h @ w_hh_t + bias
        i = jax.nn.sigmoid(gates[:, :H])
        f = jax.nn.sigmoid(gates[:, H:2 * H])
        g = jnp.tanh(gates[:, 2 * H:3 * H])
        o = jax.nn.sigmoid(gates[:, 3 * H:])
        c = f * c + i * g
        h = o * jnp.tanh(c)
    return h @ p["w_fc"].T + p["b_fc"][None, :]


if __name__ == "__main__":
    B, T, D, H, O = 4, 8, 16, 32, 8

    key = jax.random.PRNGKey(0)
    k_x, k_p = jax.random.split(key)
    x = jax.random.normal(k_x, (B, T, D), jnp.float32)

    raw = init_params(k_p, D, H, O)
    kparams = prepare_params(raw, D, H, O)

    out = lstm_model_forward(x, kparams)
    out = jax.block_until_ready(out)

    ref = reference_forward(x, raw)
    assert out.shape == (B, O)
    # bf16 weights/activations with f32 accumulation (c kept in f32): expect ~1e-2 agreement
    # vs. the pure-f32 reference at T=8 (error grows with much longer sequences).
    err = jnp.max(jnp.abs(out - ref))
    assert jnp.allclose(out, ref, atol=5e-2, rtol=5e-2), f"mismatch vs reference (max err {err})"

    print("KERNEL_OK")
</pallas_src>

<mosaic_0001>
module attributes {stable_mosaic.version = 11 : i64} {
  func.func @lstm_fc_kernel(%arg0: i32, %arg1: i32, %arg2: memref<16x8x16xbf16, #tpu.memory_space<vmem>>, %arg3: memref<16x512xbf16, #tpu.memory_space<vmem>>, %arg4: memref<128x512xbf16, #tpu.memory_space<vmem>>, %arg5: memref<1x512xf32, #tpu.memory_space<vmem>>, %arg6: memref<128x8xbf16, #tpu.memory_space<vmem>>, %arg7: memref<1x8xf32, #tpu.memory_space<vmem>>, %arg8: memref<8x8xf32, #tpu.memory_space<vmem>>, %arg9: memref<8x128xbf16, #tpu.memory_space<vmem>>, %arg10: memref<8x128xf32, #tpu.memory_space<vmem>>) attributes {dimension_semantics = [#tpu.dimension_semantics<parallel>, #tpu.dimension_semantics<arbitrary>], iteration_bounds = array<i64: 1, 1>, scalar_prefetch = 0 : i64, scratch_operands = 2 : i64, tpu.core_type = #tpu.core_type<tc>, window_params = [{transform_indices = @transform_0, window_bounds = array<i64: 16, 8, 16>}, {pipeline_mode = #tpu.pipeline_mode<synchronous>, transform_indices = @transform_1, window_bounds = array<i64: 16, 512>}, {pipeline_mode = #tpu.pipeline_mode<synchronous>, transform_indices = @transform_2, window_bounds = array<i64: 128, 512>}, {pipeline_mode = #tpu.pipeline_mode<synchronous>, transform_indices = @transform_3, window_bounds = array<i64: 1, 512>}, {pipeline_mode = #tpu.pipeline_mode<synchronous>, transform_indices = @transform_4, window_bounds = array<i64: 128, 8>}, {pipeline_mode = #tpu.pipeline_mode<synchronous>, transform_indices = @transform_5, window_bounds = array<i64: 1, 8>}, {transform_indices = @transform_6, window_bounds = array<i64: 8, 8>}]} {
    %c0_i32 = arith.constant 0 : i32
    %0 = arith.cmpi eq, %arg1, %c0_i32 : i32
    %1 = arith.extui %0 : i1 to i32
    %c0_i32_0 = arith.constant 0 : i32
    %2 = arith.cmpi ne, %1, %c0_i32_0 : i32
    scf.if %2 {
      %cst_192 = arith.constant 0.000000e+00 : bf16
      %382 = vector.broadcast %cst_192 : bf16 to vector<8x128xbf16>
      %c0_193 = arith.constant 0 : index
      %c0_194 = arith.constant 0 : index
      %383 = vector.load %arg9[%c0_193, %c0_194] : memref<8x128xbf16, #tpu.memory_space<vmem>>, vector<8x128xbf16>
      tpu.vector_store %arg9[%c0_193, %c0_194], %382 {strides = array<i32>} : memref<8x128xbf16, #tpu.memory_space<vmem>>, vector<8x128xbf16>,
      %cst_195 = arith.constant 0.000000e+00 : f32
      %384 = vector.broadcast %cst_195 : f32 to vector<8x128xf32>
      %c0_196 = arith.constant 0 : index
      %c0_197 = arith.constant 0 : index
      %385 = vector.load %arg10[%c0_196, %c0_197] : memref<8x128xf32, #tpu.memory_space<vmem>>, vector<8x128xf32>
      tpu.vector_store %arg10[%c0_196, %c0_197], %384 {strides = array<i32>} : memref<8x128xf32, #tpu.memory_space<vmem>>, vector<8x128xf32>,
    } else {
    }
    %c0 = arith.constant 0 : index
    %c0_1 = arith.constant 0 : index
    %c0_2 = arith.constant 0 : index
    %3 = vector.load %arg2[%c0, %c0_1, %c0_2] : memref<16x8x16xbf16, #tpu.memory_space<vmem>>, vector<16x8x16xbf16>
    %4 = vector.shape_cast %3 : vector<16x8x16xbf16> to vector<128x16xbf16>
    %c0_3 = arith.constant 0 : index
    %c0_4 = arith.constant 0 : index
    %5 = vector.load %arg3[%c0_3, %c0_4] : memref<16x512xbf16, #tpu.memory_space<vmem>>, vector<16x512xbf16>
    %cst = arith.constant dense<0.000000e+00> : vector<128x512xf32>
    %6 = tpu.matmul %4, %5, %cst {dimension_numbers = #tpu.dot_dimension_numbers<[1], [0], [0], [1], [0, 0, 1, 1], [], []>} : vector<128x16xbf16>, vector<16x512xbf16>, vector<128x512xf32> -> vector<128x512xf32>
    %c0_5 = arith.constant 0 : index
    %c0_6 = arith.constant 0 : index
    %7 = vector.load %arg5[%c0_5, %c0_6] : memref<1x512xf32, #tpu.memory_space<vmem>>, vector<1x512xf32>
    %8 = vector.broadcast %7 : vector<1x512xf32> to vector<128x512xf32>
    %9 = arith.addf %6, %8 : vector<128x512xf32>
    %10 = vector.shape_cast %9 : vector<128x512xf32> to vector<16x8x512xf32>
    %11 = vector.extract_strided_slice %10 {offsets = [0, 0, 0], sizes = [1, 8, 512], strides = [1, 1, 1]} : vector<16x8x512xf32> to vector<1x8x512xf32>
    %12 = vector.shape_cast %11 : vector<1x8x512xf32> to vector<8x512xf32>
    %c0_7 = arith.constant 0 : index
    %c0_8 = arith.constant 0 : index
    %13 = vector.load %arg9[%c0_7, %c0_8] : memref<8x128xbf16, #tpu.memory_space<vmem>>, vector<8x128xbf16>
    %c0_9 = arith.constant 0 : index
    %c0_10 = arith.constant 0 : index
    %14 = vector.load %arg4[%c0_9, %c0_10] : memref<128x512xbf16, #tpu.memory_space<vmem>>, vector<128x512xbf16>
    %cst_11 = arith.constant dense<0.000000e+00> : vector<8x512xf32>
    %15 = tpu.matmul %13, %14, %cst_11 {dimension_numbers = #tpu.dot_dimension_numbers<[1], [0], [0], [1], [0, 0, 1, 1], [], []>} : vector<8x128xbf16>, vector<128x512xbf16>, vector<8x512xf32> -> vector<8x512xf32>
    %16 = arith.addf %12, %15 : vector<8x512xf32>
    %17 = vector.extract_strided_slice %16 {offsets = [0, 0], sizes = [8, 128], strides = [1, 1]} : vector<8x512xf32> to vector<8x128xf32>
    %cst_12 = arith.constant 5.000000e-01 : f32
    %18 = vector.broadcast %cst_12 : f32 to vector<8x128xf32>
    %19 = arith.mulf %18, %17 : vector<8x128xf32>
    %20 = math.tanh %19 : vector<8x128xf32>
    %cst_13 = arith.constant 5.000000e-01 : f32
    %21 = vector.broadcast %cst_13 : f32 to vector<8x128xf32>
    %22 = arith.mulf %21, %20 : vector<8x128xf32>
    %cst_14 = arith.constant 5.000000e-01 : f32
    %23 = vector.broadcast %cst_14 : f32 to vector<8x128xf32>
    %24 = arith.addf %22, %23 : vector<8x128xf32>
    %25 = vector.extract_strided_slice %16 {offsets = [0, 128], sizes = [8, 128], strides = [1, 1]} : vector<8x512xf32> to vector<8x128xf32>
    %cst_15 = arith.constant 5.000000e-01 : f32
    %26 = vector.broadcast %cst_15 : f32 to vector<8x128xf32>
    %27 = arith.mulf %26, %25 : vector<8x128xf32>
    %28 = math.tanh %27 : vector<8x128xf32>
    %cst_16 = arith.constant 5.000000e-01 : f32
    %29 = vector.broadcast %cst_16 : f32 to vector<8x128xf32>
    %30 = arith.mulf %29, %28 : vector<8x128xf32>
    %cst_17 = arith.constant 5.000000e-01 : f32
    %31 = vector.broadcast %cst_17 : f32 to vector<8x128xf32>
    %32 = arith.addf %30, %31 : vector<8x128xf32>
    %33 = vector.extract_strided_slice %16 {offsets = [0, 256], sizes = [8, 128], strides = [1, 1]} : vector<8x512xf32> to vector<8x128xf32>
    %34 = math.tanh %33 : vector<8x128xf32>
    %35 = vector.extract_strided_slice %16 {offsets = [0, 384], sizes = [8, 128], strides = [1, 1]} : vector<8x512xf32> to vector<8x128xf32>
    %cst_18 = arith.constant 5.000000e-01 : f32
    %36 = vector.broadcast %cst_18 : f32 to vector<8x128xf32>
    %37 = arith.mulf %36, %35 : vector<8x128xf32>
    %38 = math.tanh %37 : vector<8x128xf32>
    %cst_19 = arith.constant 5.000000e-01 : f32
    %39 = vector.broadcast %cst_19 : f32 to vector<8x128xf32>
    %40 = arith.mulf %39, %38 : vector<8x128xf32>
    %cst_20 = arith.constant 5.000000e-01 : f32
    %41 = vector.broadcast %cst_20 : f32 to vector<8x128xf32>
    %42 = arith.addf %40, %41 : vector<8x128xf32>
    %c0_21 = arith.constant 0 : index
    %c0_22 = arith.constant 0 : index
    %43 = vector.load %arg10[%c0_21, %c0_22] : memref<8x128xf32, #tpu.memory_space<vmem>>, vector<8x128xf32>
    %44 = arith.mulf %32, %43 : vector<8x128xf32>
    %45 = arith.mulf %24, %34 : vector<8x128xf32>
    %46 = arith.addf %44, %45 : vector<8x128xf32>
    %c0_23 = arith.constant 0 : index
    %c0_24 = arith.constant 0 : index
    %47 = vector.load %arg10[%c0_23, %c0_24] : memref<8x128xf32, #tpu.memory_space<vmem>>, vector<8x128xf32>
    tpu.vector_store %arg10[%c0_23, %c0_24], %46 {strides = array<i32>} : memref<8x128xf32, #tpu.memory_space<vmem>>, vector<8x128xf32>,
    %48 = math.tanh %46 : vector<8x128xf32>
    %49 = arith.mulf %42, %48 : vector<8x128xf32>
    %50 = arith.truncf %49 : vector<8x128xf32> to vector<8x128xbf16>
    %c0_25 = arith.constant 0 : index
    %c0_26 = arith.constant 0 : index
    %51 = vector.load %arg9[%c0_25, %c0_26] : memref<8x128xbf16, #tpu.memory_space<vmem>>, vector<8x128xbf16>
    tpu.vector_store %arg9[%c0_25, %c0_26], %50 {strides = array<i32>} : memref<8x128xbf16, #tpu.memory_space<vmem>>, vector<8x128xbf16>,
    %52 = vector.extract_strided_slice %10 {offsets = [1, 0, 0], sizes = [1, 8, 512], strides = [1, 1, 1]} : vector<16x8x512xf32> to vector<1x8x512xf32>
    %53 = vector.shape_cast %52 : vector<1x8x512xf32> to vector<8x512xf32>
    %c0_27 = arith.constant 0 : index
    %c0_28 = arith.constant 0 : index
    %54 = vector.load %arg9[%c0_27, %c0_28] : memref<8x128xbf16, #tpu.memory_space<vmem>>, vector<8x128xbf16>
    %c0_29 = arith.constant 0 : index
    %c0_30 = arith.constant 0 : index
    %55 = vector.load %arg4[%c0_29, %c0_30] : memref<128x512xbf16, #tpu.memory_space<vmem>>, vector<128x512xbf16>
    %cst_31 = arith.constant dense<0.000000e+00> : vector<8x512xf32>
    %56 = tpu.matmul %54, %55, %cst_31 {dimension_numbers = #tpu.dot_dimension_numbers<[1], [0], [0], [1], [0, 0, 1, 1], [], []>} : vector<8x128xbf16>, vector<128x512xbf16>, vector<8x512xf32> -> vector<8x512xf32>
    %57 = arith.addf %53, %56 : vector<8x512xf32>
    %58 = vector.extract_strided_slice %57 {offsets = [0, 0], sizes = [8, 128], strides = [1, 1]} : vector<8x512xf32> to vector<8x128xf32>
    %cst_32 = arith.constant 5.000000e-01 : f32
    %59 = vector.broadcast %cst_32 : f32 to vector<8x128xf32>
    %60 = arith.mulf %59, %58 : vector<8x128xf32>
    %61 = math.tanh %60 : vector<8x128xf32>
    %cst_33 = arith.constant 5.000000e-01 : f32
    %62 = vector.broadcast %cst_33 : f32 to vector<8x128xf32>
    %63 = arith.mulf %62, %61 : vector<8x128xf32>
    %cst_34 = arith.constant 5.000000e-01 : f32
    %64 = vector.broadcast %cst_34 : f32 to vector<8x128xf32>
    %65 = arith.addf %63, %64 : vector<8x128xf32>
    %66 = vector.extract_strided_slice %57 {offsets = [0, 128], sizes = [8, 128], strides = [1, 1]} : vector<8x512xf32> to vector<8x128xf32>
    %cst_35 = arith.constant 5.000000e-01 : f32
    %67 = vector.broadcast %cst_35 : f32 to vector<8x128xf32>
    %68 = arith.mulf %67, %66 : vector<8x128xf32>
    %69 = math.tanh %68 : vector<8x128xf32>
    %cst_36 = arith.constant 5.000000e-01 : f32
    %70 = vector.broadcast %cst_36 : f32 to vector<8x128xf32>
    %71 = arith.mulf %70, %69 : vector<8x128xf32>
    %cst_37 = arith.constant 5.000000e-01 : f32
    %72 = vector.broadcast %cst_37 : f32 to vector<8x128xf32>
    %73 = arith.addf %71, %72 : vector<8x128xf32>
    %74 = vector.extract_strided_slice %57 {offsets = [0, 256], sizes = [8, 128], strides = [1, 1]} : vector<8x512xf32> to vector<8x128xf32>
    %75 = math.tanh %74 : vector<8x128xf32>
    %76 = vector.extract_strided_slice %57 {offsets = [0, 384], sizes = [8, 128], strides = [1, 1]} : vector<8x512xf32> to vector<8x128xf32>
    %cst_38 = arith.constant 5.000000e-01 : f32
    %77 = vector.broadcast %cst_38 : f32 to vector<8x128xf32>
    %78 = arith.mulf %77, %76 : vector<8x128xf32>
    %79 = math.tanh %78 : vector<8x128xf32>
    %cst_39 = arith.constant 5.000000e-01 : f32
    %80 = vector.broadcast %cst_39 : f32 to vector<8x128xf32>
    %81 = arith.mulf %80, %79 : vector<8x128xf32>
    %cst_40 = arith.constant 5.000000e-01 : f32
    %82 = vector.broadcast %cst_40 : f32 to vector<8x128xf32>
    %83 = arith.addf %81, %82 : vector<8x128xf32>
    %c0_41 = arith.constant 0 : index
    %c0_42 = arith.constant 0 : index
    %84 = vector.load %arg10[%c0_41, %c0_42] : memref<8x128xf32, #tpu.memory_space<vmem>>, vector<8x128xf32>
    %85 = arith.mulf %73, %84 : vector<8x128xf32>
    %86 = arith.mulf %65, %75 : vector<8x128xf32>
    %87 = arith.addf %85, %86 : vector<8x128xf32>
    %c0_43 = arith.constant 0 : index
    %c0_44 = arith.constant 0 : index
    %88 = vector.load %arg10[%c0_43, %c0_44] : memref<8x128xf32, #tpu.memory_space<vmem>>, vector<8x128xf32>
    tpu.vector_store %arg10[%c0_43, %c0_44], %87 {strides = array<i32>} : memref<8x128xf32, #tpu.memory_space<vmem>>, vector<8x128xf32>,
    %89 = math.tanh %87 : vector<8x128xf32>
    %90 = arith.mulf %83, %89 : vector<8x128xf32>
    %91 = arith.truncf %90 : vector<8x128xf32> to vector<8x128xbf16>
    %c0_45 = arith.constant 0 : index
    %c0_46 = arith.constant 0 : index
    %92 = vector.load %arg9[%c0_45, %c0_46] : memref<8x128xbf16, #tpu.memory_space<vmem>>, vector<8x128xbf16>
    tpu.vector_store %arg9[%c0_45, %c0_46], %91 {strides = array<i32>} : memref<8x128xbf16, #tpu.memory_space<vmem>>, vector<8x128xbf16>,
    %93 = vector.extract_strided_slice %10 {offsets = [2, 0, 0], sizes = [1, 8, 512], strides = [1, 1, 1]} : vector<16x8x512xf32> to vector<1x8x512xf32>
    %94 = vector.shape_cast %93 : vector<1x8x512xf32> to vector<8x512xf32>
    %c0_47 = arith.constant 0 : index
    %c0_48 = arith.constant 0 : index
    %95 = vector.load %arg9[%c0_47, %c0_48] : memref<8x128xbf16, #tpu.memory_space<vmem>>, vector<8x128xbf16>
    %c0_49 = arith.constant 0 : index
    %c0_50 = arith.constant 0 : index
    %96 = vector.load %arg4[%c0_49, %c0_50] : memref<128x512xbf16, #tpu.memory_space<vmem>>, vector<128x512xbf16>
    %cst_51 = arith.constant dense<0.000000e+00> : vector<8x512xf32>
    %97 = tpu.matmul %95, %96, %cst_51 {dimension_numbers = #tpu.dot_dimension_numbers<[1], [0], [0], [1], [0, 0, 1, 1], [], []>} : vector<8x128xbf16>, vector<128x512xbf16>, vector<8x512xf32> -> vector<8x512xf32>
    %98 = arith.addf %94, %97 : vector<8x512xf32>
    %99 = vector.extract_strided_slice %98 {offsets = [0, 0], sizes = [8, 128], strides = [1, 1]} : vector<8x512xf32> to vector<8x128xf32>
    %cst_52 = arith.constant 5.000000e-01 : f32
    %100 = vector.broadcast %cst_52 : f32 to vector<8x128xf32>
    %101 = arith.mulf %100, %99 : vector<8x128xf32>
    %102 = math.tanh %101 : vector<8x128xf32>
    %cst_53 = arith.constant 5.000000e-01 : f32
    %103 = vector.broadcast %cst_53 : f32 to vector<8x128xf32>
    %104 = arith.mulf %103, %102 : vector<8x128xf32>
    %cst_54 = arith.constant 5.000000e-01 : f32
    %105 = vector.broadcast %cst_54 : f32 to vector<8x128xf32>
    %106 = arith.addf %104, %105 : vector<8x128xf32>
    %107 = vector.extract_strided_slice %98 {offsets = [0, 128], sizes = [8, 128], strides = [1, 1]} : vector<8x512xf32> to vector<8x128xf32>
    %cst_55 = arith.constant 5.000000e-01 : f32
    %108 = vector.broadcast %cst_55 : f32 to vector<8x128xf32>
    %109 = arith.mulf %108, %107 : vector<8x128xf32>
    %110 = math.tanh %109 : vector<8x128xf32>
    %cst_56 = arith.constant 5.000000e-01 : f32
    %111 = vector.broadcast %cst_56 : f32 to vector<8x128xf32>
    %112 = arith.mulf %111, %110 : vector<8x128xf32>
    %cst_57 = arith.constant 5.000000e-01 : f32
    %113 = vector.broadcast %cst_57 : f32 to vector<8x128xf32>
    %114 = arith.addf %112, %113 : vector<8x128xf32>
    %115 = vector.extract_strided_slice %98 {offsets = [0, 256], sizes = [8, 128], strides = [1, 1]} : vector<8x512xf32> to vector<8x128xf32>
    %116 = math.tanh %115 : vector<8x128xf32>
    %117 = vector.extract_strided_slice %98 {offsets = [0, 384], sizes = [8, 128], strides = [1, 1]} : vector<8x512xf32> to vector<8x128xf32>
    %cst_58 = arith.constant 5.000000e-01 : f32
    %118 = vector.broadcast %cst_58 : f32 to vector<8x128xf32>
    %119 = arith.mulf %118, %117 : vector<8x128xf32>
    %120 = math.tanh %119 : vector<8x128xf32>
    %cst_59 = arith.constant 5.000000e-01 : f32
    %121 = vector.broadcast %cst_59 : f32 to vector<8x128xf32>
    %122 = arith.mulf %121, %120 : vector<8x128xf32>
    %cst_60 = arith.constant 5.000000e-01 : f32
    %123 = vector.broadcast %cst_60 : f32 to vector<8x128xf32>
    %124 = arith.addf %122, %123 : vector<8x128xf32>
    %c0_61 = arith.constant 0 : index
    %c0_62 = arith.constant 0 : index
    %125 = vector.load %arg10[%c0_61, %c0_62] : memref<8x128xf32, #tpu.memory_space<vmem>>, vector<8x128xf32>
    %126 = arith.mulf %114, %125 : vector<8x128xf32>
    %127 = arith.mulf %106, %116 : vector<8x128xf32>
    %128 = arith.addf %126, %127 : vector<8x128xf32>
    %c0_63 = arith.constant 0 : index
    %c0_64 = arith.constant 0 : index
    %129 = vector.load %arg10[%c0_63, %c0_64] : memref<8x128xf32, #tpu.memory_space<vmem>>, vector<8x128xf32>
    tpu.vector_store %arg10[%c0_63, %c0_64], %128 {strides = array<i32>} : memref<8x128xf32, #tpu.memory_space<vmem>>, vector<8x128xf32>,
    %130 = math.tanh %128 : vector<8x128xf32>
    %131 = arith.mulf %124, %130 : vector<8x128xf32>
    %132 = arith.truncf %131 : vector<8x128xf32> to vector<8x128xbf16>
    %c0_65 = arith.constant 0 : index
    %c0_66 = arith.constant 0 : index
    %133 = vector.load %arg9[%c0_65, %c0_66] : memref<8x128xbf16, #tpu.memory_space<vmem>>, vector<8x128xbf16>
    tpu.vector_store %arg9[%c0_65, %c0_66], %132 {strides = array<i32>} : memref<8x128xbf16, #tpu.memory_space<vmem>>, vector<8x128xbf16>,
    %134 = vector.extract_strided_slice %10 {offsets = [3, 0, 0], sizes = [1, 8, 512], strides = [1, 1, 1]} : vector<16x8x512xf32> to vector<1x8x512xf32>
    %135 = vector.shape_cast %134 : vector<1x8x512xf32> to vector<8x512xf32>
    %c0_67 = arith.constant 0 : index
    %c0_68 = arith.constant 0 : index
    %136 = vector.load %arg9[%c0_67, %c0_68] : memref<8x128xbf16, #tpu.memory_space<vmem>>, vector<8x128xbf16>
    %c0_69 = arith.constant 0 : index
    %c0_70 = arith.constant 0 : index
    %137 = vector.load %arg4[%c0_69, %c0_70] : memref<128x512xbf16, #tpu.memory_space<vmem>>, vector<128x512xbf16>
    %cst_71 = arith.constant dense<0.000000e+00> : vector<8x512xf32>
    %138 = tpu.matmul %136, %137, %cst_71 {dimension_numbers = #tpu.dot_dimension_numbers<[1], [0], [0], [1], [0, 0, 1, 1], [], []>} : vector<8x128xbf16>, vector<128x512xbf16>, vector<8x512xf32> -> vector<8x512xf32>
    %139 = arith.addf %135, %138 : vector<8x512xf32>
    %140 = vector.extract_strided_slice %139 {offsets = [0, 0], sizes = [8, 128], strides = [1, 1]} : vector<8x512xf32> to vector<8x128xf32>
    %cst_72 = arith.constant 5.000000e-01 : f32
    %141 = vector.broadcast %cst_72 : f32 to vector<8x128xf32>
    %142 = arith.mulf %141, %140 : vector<8x128xf32>
    %143 = math.tanh %142 : vector<8x128xf32>
    %cst_73 = arith.constant 5.000000e-01 : f32
    %144 = vector.broadcast %cst_73 : f32 to vector<8x128xf32>
    %145 = arith.mulf %144, %143 : vector<8x128xf32>
    %cst_74 = arith.constant 5.000000e-01 : f32
    %146 = vector.broadcast %cst_74 : f32 to vector<8x128xf32>
    %147 = arith.addf %145, %146 : vector<8x128xf32>
    %148 = vector.extract_strided_slice %139 {offsets = [0, 128], sizes = [8, 128], strides = [1, 1]} : vector<8x512xf32> to vector<8x128xf32>
    %cst_75 = arith.constant 5.000000e-01 : f32
    %149 = vector.broadcast %cst_75 : f32 to vector<8x128xf32>
    %150 = arith.mulf %149, %148 : vector<8x128xf32>
    %151 = math.tanh %150 : vector<8x128xf32>
    %cst_76 = arith.constant 5.000000e-01 : f32
    %152 = vector.broadcast %cst_76 : f32 to vector<8x128xf32>
    %153 = arith.mulf %152, %151 : vector<8x128xf32>
    %cst_77 = arith.constant 5.000000e-01 : f32
    %154 = vector.broadcast %cst_77 : f32 to vector<8x128xf32>
    %155 = arith.addf %153, %154 : vector<8x128xf32>
    %156 = vector.extract_strided_slice %139 {offsets = [0, 256], sizes = [8, 128], strides = [1, 1]} : vector<8x512xf32> to vector<8x128xf32>
    %157 = math.tanh %156 : vector<8x128xf32>
    %158 = vector.extract_strided_slice %139 {offsets = [0, 384], sizes = [8, 128], strides = [1, 1]} : vector<8x512xf32> to vector<8x128xf32>
    %cst_78 = arith.constant 5.000000e-01 : f32
    %159 = vector.broadcast %cst_78 : f32 to vector<8x128xf32>
    %160 = arith.mulf %159, %158 : vector<8x128xf32>
    %161 = math.tanh %160 : vector<8x128xf32>
    %cst_79 = arith.constant 5.000000e-01 : f32
    %162 = vector.broadcast %cst_79 : f32 to vector<8x128xf32>
    %163 = arith.mulf %162, %161 : vector<8x128xf32>
    %cst_80 = arith.constant 5.000000e-01 : f32
    %164 = vector.broadcast %cst_80 : f32 to vector<8x128xf32>
    %165 = arith.addf %163, %164 : vector<8x128xf32>
    %c0_81 = arith.constant 0 : index
    %c0_82 = arith.constant 0 : index
    %166 = vector.load %arg10[%c0_81, %c0_82] : memref<8x128xf32, #tpu.memory_space<vmem>>, vector<8x128xf32>
    %167 = arith.mulf %155, %166 : vector<8x128xf32>
    %168 = arith.mulf %147, %157 : vector<8x128xf32>
    %169 = arith.addf %167, %168 : vector<8x128xf32>
    %c0_83 = arith.constant 0 : index
    %c0_84 = arith.constant 0 : index
    %170 = vector.load %arg10[%c0_83, %c0_84] : memref<8x128xf32, #tpu.memory_space<vmem>>, vector<8x128xf32>
    tpu.vector_store %arg10[%c0_83, %c0_84], %169 {strides = array<i32>} : memref<8x128xf32, #tpu.memory_space<vmem>>, vector<8x128xf32>,
    %171 = math.tanh %169 : vector<8x128xf32>
    %172 = arith.mulf %165, %171 : vector<8x128xf32>
    %173 = arith.truncf %172 : vector<8x128xf32> to vector<8x128xbf16>
    %c0_85 = arith.constant 0 : index
    %c0_86 = arith.constant 0 : index
    %174 = vector.load %arg9[%c0_85, %c0_86] : memref<8x128xbf16, #tpu.memory_space<vmem>>, vector<8x128xbf16>
    tpu.vector_store %arg9[%c0_85, %c0_86], %173 {strides = array<i32>} : memref<8x128xbf16, #tpu.memory_space<vmem>>, vector<8x128xbf16>,
    %175 = vector.extract_strided_slice %10 {offsets = [4, 0, 0], sizes = [1, 8, 512], strides = [1, 1, 1]} : vector<16x8x512xf32> to vector<1x8x512xf32>
    %176 = vector.shape_cast %175 : vector<1x8x512xf32> to vector<8x512xf32>
    %c0_87 = arith.constant 0 : index
    %c0_88 = arith.constant 0 : index
    %177 = vector.load %arg9[%c0_87, %c0_88] : memref<8x128xbf16, #tpu.memory_space<vmem>>, vector<8x128xbf16>
    %c0_89 = arith.constant 0 : index
    %c0_90 = arith.constant 0 : index
    %178 = vector.load %arg4[%c0_89, %c0_90] : memref<128x512xbf16, #tpu.memory_space<vmem>>, vector<128x512xbf16>
    %cst_91 = arith.constant dense<0.000000e+00> : vector<8x512xf32>
    %179 = tpu.matmul %177, %178, %cst_91 {dimension_numbers = #tpu.dot_dimension_numbers<[1], [0], [0], [1], [0, 0, 1, 1], [], []>} : vector<8x128xbf16>, vector<128x512xbf16>, vector<8x512xf32> -> vector<8x512xf32>
    %180 = arith.addf %176, %179 : vector<8x512xf32>
    %181 = vector.extract_strided_slice %180 {offsets = [0, 0], sizes = [8, 128], strides = [1, 1]} : vector<8x512xf32> to vector<8x128xf32>
    %cst_92 = arith.constant 5.000000e-01 : f32
    %182 = vector.broadcast %cst_92 : f32 to vector<8x128xf32>
    %183 = arith.mulf %182, %181 : vector<8x128xf32>
    %184 = math.tanh %183 : vector<8x128xf32>
    %cst_93 = arith.constant 5.000000e-01 : f32
    %185 = vector.broadcast %cst_93 : f32 to vector<8x128xf32>
    %186 = arith.mulf %185, %184 : vector<8x128xf32>
    %cst_94 = arith.constant 5.000000e-01 : f32
    %187 = vector.broadcast %cst_94 : f32 to vector<8x128xf32>
    %188 = arith.addf %186, %187 : vector<8x128xf32>
    %189 = vector.extract_strided_slice %180 {offsets = [0, 128], sizes = [8, 128], strides = [1, 1]} : vector<8x512xf32> to vector<8x128xf32>
    %cst_95 = arith.constant 5.000000e-01 : f32
    %190 = vector.broadcast %cst_95 : f32 to vector<8x128xf32>
    %191 = arith.mulf %190, %189 : vector<8x128xf32>
    %192 = math.tanh %191 : vector<8x128xf32>
    %cst_96 = arith.constant 5.000000e-01 : f32
    %193 = vector.broadcast %cst_96 : f32 to vector<8x128xf32>
    %194 = arith.mulf %193, %192 : vector<8x128xf32>
    %cst_97 = arith.constant 5.000000e-01 : f32
    %195 = vector.broadcast %cst_97 : f32 to vector<8x128xf32>
    %196 = arith.addf %194, %195 : vector<8x128xf32>
    %197 = vector.extract_strided_slice %180 {offsets = [0, 256], sizes = [8, 128], strides = [1, 1]} : vector<8x512xf32> to vector<8x128xf32>
    %198 = math.tanh %197 : vector<8x128xf32>
    %199 = vector.extract_strided_slice %180 {offsets = [0, 384], sizes = [8, 128], strides = [1, 1]} : vector<8x512xf32> to vector<8x128xf32>
    %cst_98 = arith.constant 5.000000e-01 : f32
    %200 = vector.broadcast %cst_98 : f32 to vector<8x128xf32>
    %201 = arith.mulf %200, %199 : vector<8x128xf32>
    %202 = math.tanh %201 : vector<8x128xf32>
    %cst_99 = arith.constant 5.000000e-01 : f32
    %203 = vector.broadcast %cst_99 : f32 to vector<8x128xf32>
    %204 = arith.mulf %203, %202 : vector<8x128xf32>
    %cst_100 = arith.constant 5.000000e-01 : f32
    %205 = vector.broadcast %cst_100 : f32 to vector<8x128xf32>
    %206 = arith.addf %204, %205 : vector<8x128xf32>
    %c0_101 = arith.constant 0 : index
    %c0_102 = arith.constant 0 : index
    %207 = vector.load %arg10[%c0_101, %c0_102] : memref<8x128xf32, #tpu.memory_space<vmem>>, vector<8x128xf32>
    %208 = arith.mulf %196, %207 : vector<8x128xf32>
    %209 = arith.mulf %188, %198 : vector<8x128xf32>
    %210 = arith.addf %208, %209 : vector<8x128xf32>
    %c0_103 = arith.constant 0 : index
    %c0_104 = arith.constant 0 : index
    %211 = vector.load %arg10[%c0_103, %c0_104] : memref<8x128xf32, #tpu.memory_space<vmem>>, vector<8x128xf32>
    tpu.vector_store %arg10[%c0_103, %c0_104], %210 {strides = array<i32>} : memref<8x128xf32, #tpu.memory_space<vmem>>, vector<8x128xf32>,
    %212 = math.tanh %210 : vector<8x128xf32>
    %213 = arith.mulf %206, %212 : vector<8x128xf32>
    %214 = arith.truncf %213 : vector<8x128xf32> to vector<8x128xbf16>
    %c0_105 = arith.constant 0 : index
    %c0_106 = arith.constant 0 : index
    %215 = vector.load %arg9[%c0_105, %c0_106] : memref<8x128xbf16, #tpu.memory_space<vmem>>, vector<8x128xbf16>
    tpu.vector_store %arg9[%c0_105, %c0_106], %214 {strides = array<i32>} : memref<8x128xbf16, #tpu.memory_space<vmem>>, vector<8x128xbf16>,
    %216 = vector.extract_strided_slice %10 {offsets = [5, 0, 0], sizes = [1, 8, 512], strides = [1, 1, 1]} : vector<16x8x512xf32> to vector<1x8x512xf32>
    %217 = vector.shape_cast %216 : vector<1x8x512xf32> to vector<8x512xf32>
    %c0_107 = arith.constant 0 : index
    %c0_108 = arith.constant 0 : index
    %218 = vector.load %arg9[%c0_107, %c0_108] : memref<8x128xbf16, #tpu.memory_space<vmem>>, vector<8x128xbf16>
    %c0_109 = arith.constant 0 : index
    %c0_110 = arith.constant 0 : index
    %219 = vector.load %arg4[%c0_109, %c0_110] : memref<128x512xbf16, #tpu.memory_space<vmem>>, vector<128x512xbf16>
    %cst_111 = arith.constant dense<0.000000e+00> : vector<8x512xf32>
    %220 = tpu.matmul %218, %219, %cst_111 {dimension_numbers = #tpu.dot_dimension_numbers<[1], [0], [0], [1], [0, 0, 1, 1], [], []>} : vector<8x128xbf16>, vector<128x512xbf16>, vector<8x512xf32> -> vector<8x512xf32>
    %221 = arith.addf %217, %220 : vector<8x512xf32>
    %222 = vector.extract_strided_slice %221 {offsets = [0, 0], sizes = [8, 128], strides = [1, 1]} : vector<8x512xf32> to vector<8x128xf32>
    %cst_112 = arith.constant 5.000000e-01 : f32
    %223 = vector.broadcast %cst_112 : f32 to vector<8x128xf32>
    %224 = arith.mulf %223, %222 : vector<8x128xf32>
    %225 = math.tanh %224 : vector<8x128xf32>
    %cst_113 = arith.constant 5.000000e-01 : f32
    %226 = vector.broadcast %cst_113 : f32 to vector<8x128xf32>
    %227 = arith.mulf %226, %225 : vector<8x128xf32>
    %cst_114 = arith.constant 5.000000e-01 : f32
    %228 = vector.broadcast %cst_114 : f32 to vector<8x128xf32>
    %229 = arith.addf %227, %228 : vector<8x128xf32>
    %230 = vector.extract_strided_slice %221 {offsets = [0, 128], sizes = [8, 128], strides = [1, 1]} : vector<8x512xf32> to vector<8x128xf32>
    %cst_115 = arith.constant 5.000000e-01 : f32
    %231 = vector.broadcast %cst_115 : f32 to vector<8x128xf32>
    %232 = arith.mulf %231, %230 : vector<8x128xf32>
    %233 = math.tanh %232 : vector<8x128xf32>
    %cst_116 = arith.constant 5.000000e-01 : f32
    %234 = vector.broadcast %cst_116 : f32 to vector<8x128xf32>
    %235 = arith.mulf %234, %233 : vector<8x128xf32>
    %cst_117 = arith.constant 5.000000e-01 : f32
    %236 = vector.broadcast %cst_117 : f32 to vector<8x128xf32>
    %237 = arith.addf %235, %236 : vector<8x128xf32>
    %238 = vector.extract_strided_slice %221 {offsets = [0, 256], sizes = [8, 128], strides = [1, 1]} : vector<8x512xf32> to vector<8x128xf32>
    %239 = math.tanh %238 : vector<8x128xf32>
    %240 = vector.extract_strided_slice %221 {offsets = [0, 384], sizes = [8, 128], strides = [1, 1]} : vector<8x512xf32> to vector<8x128xf32>
    %cst_118 = arith.constant 5.000000e-01 : f32
    %241 = vector.broadcast %cst_118 : f32 to vector<8x128xf32>
    %242 = arith.mulf %241, %240 : vector<8x128xf32>
    %243 = math.tanh %242 : vector<8x128xf32>
    %cst_119 = arith.constant 5.000000e-01 : f32
    %244 = vector.broadcast %cst_119 : f32 to vector<8x128xf32>
    %245 = arith.mulf %244, %243 : vector<8x128xf32>
    %cst_120 = arith.constant 5.000000e-01 : f32
    %246 = vector.broadcast %cst_120 : f32 to vector<8x128xf32>
    %247 = arith.addf %245, %246 : vector<8x128xf32>
    %c0_121 = arith.constant 0 : index
    %c0_122 = arith.constant 0 : index
    %248 = vector.load %arg10[%c0_121, %c0_122] : memref<8x128xf32, #tpu.memory_space<vmem>>, vector<8x128xf32>
    %249 = arith.mulf %237, %248 : vector<8x128xf32>
    %250 = arith.mulf %229, %239 : vector<8x128xf32>
    %251 = arith.addf %249, %250 : vector<8x128xf32>
    %c0_123 = arith.constant 0 : index
    %c0_124 = arith.constant 0 : index
    %252 = vector.load %arg10[%c0_123, %c0_124] : memref<8x128xf32, #tpu.memory_space<vmem>>, vector<8x128xf32>
    tpu.vector_store %arg10[%c0_123, %c0_124], %251 {strides = array<i32>} : memref<8x128xf32, #tpu.memory_space<vmem>>, vector<8x128xf32>,
    %253 = math.tanh %251 : vector<8x128xf32>
    %254 = arith.mulf %247, %253 : vector<8x128xf32>
    %255 = arith.truncf %254 : vector<8x128xf32> to vector<8x128xbf16>
    %c0_125 = arith.constant 0 : index
    %c0_126 = arith.constant 0 : index
    %256 = vector.load %arg9[%c0_125, %c0_126] : memref<8x128xbf16, #tpu.memory_space<vmem>>, vector<8x128xbf16>
    tpu.vector_store %arg9[%c0_125, %c0_126], %255 {strides = array<i32>} : memref<8x128xbf16, #tpu.memory_space<vmem>>, vector<8x128xbf16>,
    %257 = vector.extract_strided_slice %10 {offsets = [6, 0, 0], sizes = [1, 8, 512], strides = [1, 1, 1]} : vector<16x8x512xf32> to vector<1x8x512xf32>
    %258 = vector.shape_cast %257 : vector<1x8x512xf32> to vector<8x512xf32>
    %c0_127 = arith.constant 0 : index
    %c0_128 = arith.constant 0 : index
    %259 = vector.load %arg9[%c0_127, %c0_128] : memref<8x128xbf16, #tpu.memory_space<vmem>>, vector<8x128xbf16>
    %c0_129 = arith.constant 0 : index
    %c0_130 = arith.constant 0 : index
    %260 = vector.load %arg4[%c0_129, %c0_130] : memref<128x512xbf16, #tpu.memory_space<vmem>>, vector<128x512xbf16>
    %cst_131 = arith.constant dense<0.000000e+00> : vector<8x512xf32>
    %261 = tpu.matmul %259, %260, %cst_131 {dimension_numbers = #tpu.dot_dimension_numbers<[1], [0], [0], [1], [0, 0, 1, 1], [], []>} : vector<8x128xbf16>, vector<128x512xbf16>, vector<8x512xf32> -> vector<8x512xf32>
    %262 = arith.addf %258, %261 : vector<8x512xf32>
    %263 = vector.extract_strided_slice %262 {offsets = [0, 0], sizes = [8, 128], strides = [1, 1]} : vector<8x512xf32> to vector<8x128xf32>
    %cst_132 = arith.constant 5.000000e-01 : f32
    %264 = vector.broadcast %cst_132 : f32 to vector<8x128xf32>
    %265 = arith.mulf %264, %263 : vector<8x128xf32>
    %266 = math.tanh %265 : vector<8x128xf32>
    %cst_133 = arith.constant 5.000000e-01 : f32
    %267 = vector.broadcast %cst_133 : f32 to vector<8x128xf32>
    %268 = arith.mulf %267, %266 : vector<8x128xf32>
    %cst_134 = arith.constant 5.000000e-01 : f32
    %269 = vector.broadcast %cst_134 : f32 to vector<8x128xf32>
    %270 = arith.addf %268, %269 : vector<8x128xf32>
    %271 = vector.extract_strided_slice %262 {offsets = [0, 128], sizes = [8, 128], strides = [1, 1]} : vector<8x512xf32> to vector<8x128xf32>
    %cst_135 = arith.constant 5.000000e-01 : f32
    %272 = vector.broadcast %cst_135 : f32 to vector<8x128xf32>
    %273 = arith.mulf %272, %271 : vector<8x128xf32>
    %274 = math.tanh %273 : vector<8x128xf32>
    %cst_136 = arith.constant 5.000000e-01 : f32
    %275 = vector.broadcast %cst_136 : f32 to vector<8x128xf32>
    %276 = arith.mulf %275, %274 : vector<8x128xf32>
    %cst_137 = arith.constant 5.000000e-01 : f32
    %277 = vector.broadcast %cst_137 : f32 to vector<8x128xf32>
    %278 = arith.addf %276, %277 : vector<8x128xf32>
    %279 = vector.extract_strided_slice %262 {offsets = [0, 256], sizes = [8, 128], strides = [1, 1]} : vector<8x512xf32> to vector<8x128xf32>
    %280 = math.tanh %279 : vector<8x128xf32>
    %281 = vector.extract_strided_slice %262 {offsets = [0, 384], sizes = [8, 128], strides = [1, 1]} : vector<8x512xf32> to vector<8x128xf32>
    %cst_138 = arith.constant 5.000000e-01 : f32
    %282 = vector.broadcast %cst_138 : f32 to vector<8x128xf32>
    %283 = arith.mulf %282, %281 : vector<8x128xf32>
    %284 = math.tanh %283 : vector<8x128xf32>
    %cst_139 = arith.constant 5.000000e-01 : f32
    %285 = vector.broadcast %cst_139 : f32 to vector<8x128xf32>
    %286 = arith.mulf %285, %284 : vector<8x128xf32>
    %cst_140 = arith.constant 5.000000e-01 : f32
    %287 = vector.broadcast %cst_140 : f32 to vector<8x128xf32>
    %288 = arith.addf %286, %287 : vector<8x128xf32>
    %c0_141 = arith.constant 0 : index
    %c0_142 = arith.constant 0 : index
    %289 = vector.load %arg10[%c0_141, %c0_142] : memref<8x128xf32, #tpu.memory_space<vmem>>, vector<8x128xf32>
    %290 = arith.mulf %278, %289 : vector<8x128xf32>
    %291 = arith.mulf %270, %280 : vector<8x128xf32>
    %292 = arith.addf %290, %291 : vector<8x128xf32>
    %c0_143 = arith.constant 0 : index
    %c0_144 = arith.constant 0 : index
    %293 = vector.load %arg10[%c0_143, %c0_144] : memref<8x128xf32, #tpu.memory_space<vmem>>, vector<8x128xf32>
    tpu.vector_store %arg10[%c0_143, %c0_144], %292 {strides = array<i32>} : memref<8x128xf32, #tpu.memory_space<vmem>>, vector<8x128xf32>,
    %294 = math.tanh %292 : vector<8x128xf32>
    %295 = arith.mulf %288, %294 : vector<8x128xf32>
    %296 = arith.truncf %295 : vector<8x128xf32> to vector<8x128xbf16>
    %c0_145 = arith.constant 0 : index
    %c0_146 = arith.constant 0 : index
    %297 = vector.load %arg9[%c0_145, %c0_146] : memref<8x128xbf16, #tpu.memory_space<vmem>>, vector<8x128xbf16>
    tpu.vector_store %arg9[%c0_145, %c0_146], %296 {strides = array<i32>} : memref<8x128xbf16, #tpu.memory_space<vmem>>, vector<8x128xbf16>,
    %298 = vector.extract_strided_slice %10 {offsets = [7, 0, 0], sizes = [1, 8, 512], strides = [1, 1, 1]} : vector<16x8x512xf32> to vector<1x8x512xf32>
    %299 = vector.shape_cast %298 : vector<1x8x512xf32> to vector<8x512xf32>
    %c0_147 = arith.constant 0 : index
    %c0_148 = arith.constant 0 : index
    %300 = vector.load %arg9[%c0_147, %c0_148] : memref<8x128xbf16, #tpu.memory_space<vmem>>, vector<8x128xbf16>
    %c0_149 = arith.constant 0 : index
    %c0_150 = arith.constant 0 : index
    %301 = vector.load %arg4[%c0_149, %c0_150] : memref<128x512xbf16, #tpu.memory_space<vmem>>, vector<128x512xbf16>
    %cst_151 = arith.constant dense<0.000000e+00> : vector<8x512xf32>
    %302 = tpu.matmul %300, %301, %cst_151 {dimension_numbers = #tpu.dot_dimension_numbers<[1], [0], [0], [1], [0, 0, 1, 1], [], []>} : vector<8x128xbf16>, vector<128x512xbf16>, vector<8x512xf32> -> vector<8x512xf32>
    %303 = arith.addf %299, %302 : vector<8x512xf32>
    %304 = vector.extract_strided_slice %303 {offsets = [0, 0], sizes = [8, 128], strides = [1, 1]} : vector<8x512xf32> to vector<8x128xf32>
    %cst_152 = arith.constant 5.000000e-01 : f32
    %305 = vector.broadcast %cst_152 : f32 to vector<8x128xf32>
    %306 = arith.mulf %305, %304 : vector<8x128xf32>
    %307 = math.tanh %306 : vector<8x128xf32>
    %cst_153 = arith.constant 5.000000e-01 : f32
    %308 = vector.broadcast %cst_153 : f32 to vector<8x128xf32>
    %309 = arith.mulf %308, %307 : vector<8x128xf32>
    %cst_154 = arith.constant 5.000000e-01 : f32
    %310 = vector.broadcast %cst_154 : f32 to vector<8x128xf32>
    %311 = arith.addf %309, %310 : vector<8x128xf32>
    %312 = vector.extract_strided_slice %303 {offsets = [0, 128], sizes = [8, 128], strides = [1, 1]} : vector<8x512xf32> to vector<8x128xf32>
    %cst_155 = arith.constant 5.000000e-01 : f32
    %313 = vector.broadcast %cst_155 : f32 to vector<8x128xf32>
    %314 = arith.mulf %313, %312 : vector<8x128xf32>
    %315 = math.tanh %314 : vector<8x128xf32>
    %cst_156 = arith.constant 5.000000e-01 : f32
    %316 = vector.broadcast %cst_156 : f32 to vector<8x128xf32>
    %317 = arith.mulf %316, %315 : vector<8x128xf32>
    %cst_157 = arith.constant 5.000000e-01 : f32
    %318 = vector.broadcast %cst_157 : f32 to vector<8x128xf32>
    %319 = arith.addf %317, %318 : vector<8x128xf32>
    %320 = vector.extract_strided_slice %303 {offsets = [0, 256], sizes = [8, 128], strides = [1, 1]} : vector<8x512xf32> to vector<8x128xf32>
    %321 = math.tanh %320 : vector<8x128xf32>
    %322 = vector.extract_strided_slice %303 {offsets = [0, 384], sizes = [8, 128], strides = [1, 1]} : vector<8x512xf32> to vector<8x128xf32>
    %cst_158 = arith.constant 5.000000e-01 : f32
    %323 = vector.broadcast %cst_158 : f32 to vector<8x128xf32>
    %324 = arith.mulf %323, %322 : vector<8x128xf32>
    %325 = math.tanh %324 : vector<8x128xf32>
    %cst_159 = arith.constant 5.000000e-01 : f32
    %326 = vector.broadcast %cst_159 : f32 to vector<8x128xf32>
    %327 = arith.mulf %326, %325 : vector<8x128xf32>
    %cst_160 = arith.constant 5.000000e-01 : f32
    %328 = vector.broadcast %cst_160 : f32 to vector<8x128xf32>
    %329 = arith.addf %327, %328 : vector<8x128xf32>
    %c0_161 = arith.constant 0 : index
    %c0_162 = arith.constant 0 : index
    %330 = vector.load %arg10[%c0_161, %c0_162] : memref<8x128xf32, #tpu.memory_space<vmem>>, vector<8x128xf32>
    %331 = arith.mulf %319, %330 : vector<8x128xf32>
    %332 = arith.mulf %311, %321 : vector<8x128xf32>
    %333 = arith.addf %331, %332 : vector<8x128xf32>
    %c0_163 = arith.constant 0 : index
    %c0_164 = arith.constant 0 : index
    %334 = vector.load %arg10[%c0_163, %c0_164] : memref<8x128xf32, #tpu.memory_space<vmem>>, vector<8x128xf32>
    tpu.vector_store %arg10[%c0_163, %c0_164], %333 {strides = array<i32>} : memref<8x128xf32, #tpu.memory_space<vmem>>, vector<8x128xf32>,
    %335 = math.tanh %333 : vector<8x128xf32>
    %336 = arith.mulf %329, %335 : vector<8x128xf32>
    %337 = arith.truncf %336 : vector<8x128xf32> to vector<8x128xbf16>
    %c0_165 = arith.constant 0 : index
    %c0_166 = arith.constant 0 : index
    %338 = vector.load %arg9[%c0_165, %c0_166] : memref<8x128xbf16, #tpu.memory_space<vmem>>, vector<8x128xbf16>
    tpu.vector_store %arg9[%c0_165, %c0_166], %337 {strides = array<i32>} : memref<8x128xbf16, #tpu.memory_space<vmem>>, vector<8x128xbf16>,
    %c16_i32 = arith.constant 16 : i32
    %339 = arith.muli %arg1, %c16_i32 : i32
    %c8_i32 = arith.constant 8 : i32
    %340 = arith.addi %339, %c8_i32 : i32
    %c8_i32_167 = arith.constant 8 : i32
    %341 = arith.cmpi slt, %340, %c8_i32_167 : i32
    %342 = arith.extui %341 : i1 to i32
    %c0_i32_168 = arith.constant 0 : i32
    %343 = arith.cmpi ne, %342, %c0_i32_168 : i32
    scf.if %343 {
      %382 = vector.extract_strided_slice %10 {offsets = [8, 0, 0], sizes = [1, 8, 512], strides = [1, 1, 1]} : vector<16x8x512xf32> to vector<1x8x512xf32>
      %383 = vector.shape_cast %382 : vector<1x8x512xf32> to vector<8x512xf32>
      %c0_192 = arith.constant 0 : index
      %c0_193 = arith.constant 0 : index
      %384 = vector.load %arg9[%c0_192, %c0_193] : memref<8x128xbf16, #tpu.memory_space<vmem>>, vector<8x128xbf16>
      %c0_194 = arith.constant 0 : index
      %c0_195 = arith.constant 0 : index
      %385 = vector.load %arg4[%c0_194, %c0_195] : memref<128x512xbf16, #tpu.memory_space<vmem>>, vector<128x512xbf16>
      %cst_196 = arith.constant dense<0.000000e+00> : vector<8x512xf32>
      %386 = tpu.matmul %384, %385, %cst_196 {dimension_numbers = #tpu.dot_dimension_numbers<[1], [0], [0], [1], [0, 0, 1, 1], [], []>} : vector<8x128xbf16>, vector<128x512xbf16>, vector<8x512xf32> -> vector<8x512xf32>
      %387 = arith.addf %383, %386 : vector<8x512xf32>
      %388 = vector.extract_strided_slice %387 {offsets = [0, 0], sizes = [8, 128], strides = [1, 1]} : vector<8x512xf32> to vector<8x128xf32>
      %cst_197 = arith.constant 5.000000e-01 : f32
      %389 = vector.broadcast %cst_197 : f32 to vector<8x128xf32>
      %390 = arith.mulf %389, %388 : vector<8x128xf32>
      %391 = math.tanh %390 : vector<8x128xf32>
      %cst_198 = arith.constant 5.000000e-01 : f32
      %392 = vector.broadcast %cst_198 : f32 to vector<8x128xf32>
      %393 = arith.mulf %392, %391 : vector<8x128xf32>
      %cst_199 = arith.constant 5.000000e-01 : f32
      %394 = vector.broadcast %cst_199 : f32 to vector<8x128xf32>
      %395 = arith.addf %393, %394 : vector<8x128xf32>
      %396 = vector.extract_strided_slice %387 {offsets = [0, 128], sizes = [8, 128], strides = [1, 1]} : vector<8x512xf32> to vector<8x128xf32>
      %cst_200 = arith.constant 5.000000e-01 : f32
      %397 = vector.broadcast %cst_200 : f32 to vector<8x128xf32>
      %398 = arith.mulf %397, %396 : vector<8x128xf32>
      %399 = math.tanh %398 : vector<8x128xf32>
      %cst_201 = arith.constant 5.000000e-01 : f32
      %400 = vector.broadcast %cst_201 : f32 to vector<8x128xf32>
      %401 = arith.mulf %400, %399 : vector<8x128xf32>
      %cst_202 = arith.constant 5.000000e-01 : f32
      %402 = vector.broadcast %cst_202 : f32 to vector<8x128xf32>
      %403 = arith.addf %401, %402 : vector<8x128xf32>
      %404 = vector.extract_strided_slice %387 {offsets = [0, 256], sizes = [8, 128], strides = [1, 1]} : vector<8x512xf32> to vector<8x128xf32>
      %405 = math.tanh %404 : vector<8x128xf32>
      %406 = vector.extract_strided_slice %387 {offsets = [0, 384], sizes = [8, 128], strides = [1, 1]} : vector<8x512xf32> to vector<8x128xf32>
      %cst_203 = arith.constant 5.000000e-01 : f32
      %407 = vector.broadcast %cst_203 : f32 to vector<8x128xf32>
      %408 = arith.mulf %407, %406 : vector<8x128xf32>
      %409 = math.tanh %408 : vector<8x128xf32>
      %cst_204 = arith.constant 5.000000e-01 : f32
      %410 = vector.broadcast %cst_204 : f32 to vector<8x128xf32>
      %411 = arith.mulf %410, %409 : vector<8x128xf32>
      %cst_205 = arith.constant 5.000000e-01 : f32
      %412 = vector.broadcast %cst_205 : f32 to vector<8x128xf32>
      %413 = arith.addf %411, %412 : vector<8x128xf32>
      %c0_206 = arith.constant 0 : index
      %c0_207 = arith.constant 0 : index
      %414 = vector.load %arg10[%c0_206, %c0_207] : memref<8x128xf32, #tpu.memory_space<vmem>>, vector<8x128xf32>
      %415 = arith.mulf %403, %414 : vector<8x128xf32>
      %416 = arith.mulf %395, %405 : vector<8x128xf32>
      %417 = arith.addf %415, %416 : vector<8x128xf32>
      %c0_208 = arith.constant 0 : index
      %c0_209 = arith.constant 0 : index
      %418 = vector.load %arg10[%c0_208, %c0_209] : memref<8x128xf32, #tpu.memory_space<vmem>>, vector<8x128xf32>
      tpu.vector_store %arg10[%c0_208, %c0_209], %417 {strides = array<i32>} : memref<8x128xf32, #tpu.memory_space<vmem>>, vector<8x128xf32>,
      %419 = math.tanh %417 : vector<8x128xf32>
      %420 = arith.mulf %413, %419 : vector<8x128xf32>
      %421 = arith.truncf %420 : vector<8x128xf32> to vector<8x128xbf16>
      %c0_210 = arith.constant 0 : index
      %c0_211 = arith.constant 0 : index
      %422 = vector.load %arg9[%c0_210, %c0_211] : memref<8x128xbf16, #tpu.memory_space<vmem>>, vector<8x128xbf16>
      tpu.vector_store %arg9[%c0_210, %c0_211], %421 {strides = array<i32>} : memref<8x128xbf16, #tpu.memory_space<vmem>>, vector<8x128xbf16>,
    } else {
    }
    %c16_i32_169 = arith.constant 16 : i32
    %344 = arith.muli %arg1, %c16_i32_169 : i32
    %c9_i32 = arith.constant 9 : i32
    %345 = arith.addi %344, %c9_i32 : i32
    %c8_i32_170 = arith.constant 8 : i32
    %346 = arith.cmpi slt, %345, %c8_i32_170 : i32
    %347 = arith.extui %346 : i1 to i32
    %c0_i32_171 = arith.constant 0 : i32
    %348 = arith.cmpi ne, %347, %c0_i32_171 : i32
    scf.if %348 {
      %382 = vector.extract_strided_slice %10 {offsets = [9, 0, 0], sizes = [1, 8, 512], strides = [1, 1, 1]} : vector<16x8x512xf32> to vector<1x8x512xf32>
      %383 = vector.shape_cast %382 : vector<1x8x512xf32> to vector<8x512xf32>
      %c0_192 = arith.constant 0 : index
      %c0_193 = arith.constant 0 : index
      %384 = vector.load %arg9[%c0_192, %c0_193] : memref<8x128xbf16, #tpu.memory_space<vmem>>, vector<8x128xbf16>
      %c0_194 = arith.constant 0 : index
      %c0_195 = arith.constant 0 : index
      %385 = vector.load %arg4[%c0_194, %c0_195] : memref<128x512xbf16, #tpu.memory_space<vmem>>, vector<128x512xbf16>
      %cst_196 = arith.constant dense<0.000000e+00> : vector<8x512xf32>
      %386 = tpu.matmul %384, %385, %cst_196 {dimension_numbers = #tpu.dot_dimension_numbers<[1], [0], [0], [1], [0, 0, 1, 1], [], []>} : vector<8x128xbf16>, vector<128x512xbf16>, vector<8x512xf32> -> vector<8x512xf32>
      %387 = arith.addf %383, %386 : vector<8x512xf32>
      %388 = vector.extract_strided_slice %387 {offsets = [0, 0], sizes = [8, 128], strides = [1, 1]} : vector<8x512xf32> to vector<8x128xf32>
      %cst_197 = arith.constant 5.000000e-01 : f32
      %389 = vector.broadcast %cst_197 : f32 to vector<8x128xf32>
      %390 = arith.mulf %389, %388 : vector<8x128xf32>
      %391 = math.tanh %390 : vector<8x128xf32>
      %cst_198 = arith.constant 5.000000e-01 : f32
      %392 = vector.broadcast %cst_198 : f32 to vector<8x128xf32>
      %393 = arith.mulf %392, %391 : vector<8x128xf32>
      %cst_199 = arith.constant 5.000000e-01 : f32
      %394 = vector.broadcast %cst_199 : f32 to vector<8x128xf32>
      %395 = arith.addf %393, %394 : vector<8x128xf32>
      %396 = vector.extract_strided_slice %387 {offsets = [0, 128], sizes = [8, 128], strides = [1, 1]} : vector<8x512xf32> to vector<8x128xf32>
      %cst_200 = arith.constant 5.000000e-01 : f32
      %397 = vector.broadcast %cst_200 : f32 to vector<8x128xf32>
      %398 = arith.mulf %397, %396 : vector<8x128xf32>
      %399 = math.tanh %398 : vector<8x128xf32>
      %cst_201 = arith.constant 5.000000e-01 : f32
      %400 = vector.broadcast %cst_201 : f32 to vector<8x128xf32>
      %401 = arith.mulf %400, %399 : vector<8x128xf32>
      %cst_202 = arith.constant 5.000000e-01 : f32
      %402 = vector.broadcast %cst_202 : f32 to vector<8x128xf32>
      %403 = arith.addf %401, %402 : vector<8x128xf32>
      %404 = vector.extract_strided_slice %387 {offsets = [0, 256], sizes = [8, 128], strides = [1, 1]} : vector<8x512xf32> to vector<8x128xf32>
      %405 = math.tanh %404 : vector<8x128xf32>
      %406 = vector.extract_strided_slice %387 {offsets = [0, 384], sizes = [8, 128], strides = [1, 1]} : vector<8x512xf32> to vector<8x128xf32>
      %cst_203 = arith.constant 5.000000e-01 : f32
      %407 = vector.broadcast %cst_203 : f32 to vector<8x128xf32>
      %408 = arith.mulf %407, %406 : vector<8x128xf32>
      %409 = math.tanh %408 : vector<8x128xf32>
      %cst_204 = arith.constant 5.000000e-01 : f32
      %410 = vector.broadcast %cst_204 : f32 to vector<8x128xf32>
      %411 = arith.mulf %410, %409 : vector<8x128xf32>
      %cst_205 = arith.constant 5.000000e-01 : f32
      %412 = vector.broadcast %cst_205 : f32 to vector<8x128xf32>
      %413 = arith.addf %411, %412 : vector<8x128xf32>
      %c0_206 = arith.constant 0 : index
      %c0_207 = arith.constant 0 : index
      %414 = vector.load %arg10[%c0_206, %c0_207] : memref<8x128xf32, #tpu.memory_space<vmem>>, vector<8x128xf32>
      %415 = arith.mulf %403, %414 : vector<8x128xf32>
      %416 = arith.mulf %395, %405 : vector<8x128xf32>
      %417 = arith.addf %415, %416 : vector<8x128xf32>
      %c0_208 = arith.constant 0 : index
      %c0_209 = arith.constant 0 : index
      %418 = vector.load %arg10[%c0_208, %c0_209] : memref<8x128xf32, #tpu.memory_space<vmem>>, vector<8x128xf32>
      tpu.vector_store %arg10[%c0_208, %c0_209], %417 {strides = array<i32>} : memref<8x128xf32, #tpu.memory_space<vmem>>, vector<8x128xf32>,
      %419 = math.tanh %417 : vector<8x128xf32>
      %420 = arith.mulf %413, %419 : vector<8x128xf32>
      %421 = arith.truncf %420 : vector<8x128xf32> to vector<8x128xbf16>
      %c0_210 = arith.constant 0 : index
      %c0_211 = arith.constant 0 : index
      %422 = vector.load %arg9[%c0_210, %c0_211] : memref<8x128xbf16, #tpu.memory_space<vmem>>, vector<8x128xbf16>
      tpu.vector_store %arg9[%c0_210, %c0_211], %421 {strides = array<i32>} : memref<8x128xbf16, #tpu.memory_space<vmem>>, vector<8x128xbf16>,
    } else {
    }
    %c16_i32_172 = arith.constant 16 : i32
    %349 = arith.muli %arg1, %c16_i32_172 : i32
    %c10_i32 = arith.constant 10 : i32
    %350 = arith.addi %349, %c10_i32 : i32
    %c8_i32_173 = arith.constant 8 : i32
    %351 = arith.cmpi slt, %350, %c8_i32_173 : i32
    %352 = arith.extui %351 : i1 to i32
    %c0_i32_174 = arith.constant 0 : i32
    %353 = arith.cmpi ne, %352, %c0_i32_174 : i32
    scf.if %353 {
      %382 = vector.extract_strided_slice %10 {offsets = [10, 0, 0], sizes = [1, 8, 512], strides = [1, 1, 1]} : vector<16x8x512xf32> to vector<1x8x512xf32>
      %383 = vector.shape_cast %382 : vector<1x8x512xf32> to vector<8x512xf32>
      %c0_192 = arith.constant 0 : index
      %c0_193 = arith.constant 0 : index
      %384 = vector.load %arg9[%c0_192, %c0_193] : memref<8x128xbf16, #tpu.memory_space<vmem>>, vector<8x128xbf16>
      %c0_194 = arith.constant 0 : index
      %c0_195 = arith.constant 0 : index
      %385 = vector.load %arg4[%c0_194, %c0_195] : memref<128x512xbf16, #tpu.memory_space<vmem>>, vector<128x512xbf16>
      %cst_196 = arith.constant dense<0.000000e+00> : vector<8x512xf32>
      %386 = tpu.matmul %384, %385, %cst_196 {dimension_numbers = #tpu.dot_dimension_numbers<[1], [0], [0], [1], [0, 0, 1, 1], [], []>} : vector<8x128xbf16>, vector<128x512xbf16>, vector<8x512xf32> -> vector<8x512xf32>
      %387 = arith.addf %383, %386 : vector<8x512xf32>
      %388 = vector.extract_strided_slice %387 {offsets = [0, 0], sizes = [8, 128], strides = [1, 1]} : vector<8x512xf32> to vector<8x128xf32>
      %cst_197 = arith.constant 5.000000e-01 : f32
      %389 = vector.broadcast %cst_197 : f32 to vector<8x128xf32>
      %390 = arith.mulf %389, %388 : vector<8x128xf32>
      %391 = math.tanh %390 : vector<8x128xf32>
      %cst_198 = arith.constant 5.000000e-01 : f32
      %392 = vector.broadcast %cst_198 : f32 to vector<8x128xf32>
      %393 = arith.mulf %392, %391 : vector<8x128xf32>
      %cst_199 = arith.constant 5.000000e-01 : f32
      %394 = vector.broadcast %cst_199 : f32 to vector<8x128xf32>
      %395 = arith.addf %393, %394 : vector<8x128xf32>
      %396 = vector.extract_strided_slice %387 {offsets = [0, 128], sizes = [8, 128], strides = [1, 1]} : vector<8x512xf32> to vector<8x128xf32>
      %cst_200 = arith.constant 5.000000e-01 : f32
      %397 = vector.broadcast %cst_200 : f32 to vector<8x128xf32>
      %398 = arith.mulf %397, %396 : vector<8x128xf32>
      %399 = math.tanh %398 : vector<8x128xf32>
      %cst_201 = arith.constant 5.000000e-01 : f32
      %400 = vector.broadcast %cst_201 : f32 to vector<8x128xf32>
      %401 = arith.mulf %400, %399 : vector<8x128xf32>
      %cst_202 = arith.constant 5.000000e-01 : f32
      %402 = vector.broadcast %cst_202 : f32 to vector<8x128xf32>
      %403 = arith.addf %401, %402 : vector<8x128xf32>
      %404 = vector.extract_strided_slice %387 {offsets = [0, 256], sizes = [8, 128], strides = [1, 1]} : vector<8x512xf32> to vector<8x128xf32>
      %405 = math.tanh %404 : vector<8x128xf32>
      %406 = vector.extract_strided_slice %387 {offsets = [0, 384], sizes = [8, 128], strides = [1, 1]} : vector<8x512xf32> to vector<8x128xf32>
      %cst_203 = arith.constant 5.000000e-01 : f32
      %407 = vector.broadcast %cst_203 : f32 to vector<8x128xf32>
      %408 = arith.mulf %407, %406 : vector<8x128xf32>
      %409 = math.tanh %408 : vector<8x128xf32>
      %cst_204 = arith.constant 5.000000e-01 : f32
      %410 = vector.broadcast %cst_204 : f32 to vector<8x128xf32>
      %411 = arith.mulf %410, %409 : vector<8x128xf32>
      %cst_205 = arith.constant 5.000000e-01 : f32
      %412 = vector.broadcast %cst_205 : f32 to vector<8x128xf32>
      %413 = arith.addf %411, %412 : vector<8x128xf32>
      %c0_206 = arith.constant 0 : index
      %c0_207 = arith.constant 0 : index
      %414 = vector.load %arg10[%c0_206, %c0_207] : memref<8x128xf32, #tpu.memory_space<vmem>>, vector<8x128xf32>
      %415 = arith.mulf %403, %414 : vector<8x128xf32>
      %416 = arith.mulf %395, %405 : vector<8x128xf32>
      %417 = arith.addf %415, %416 : vector<8x128xf32>
      %c0_208 = arith.constant 0 : index
      %c0_209 = arith.constant 0 : index
      %418 = vector.load %arg10[%c0_208, %c0_209] : memref<8x128xf32, #tpu.memory_space<vmem>>, vector<8x128xf32>
      tpu.vector_store %arg10[%c0_208, %c0_209], %417 {strides = array<i32>} : memref<8x128xf32, #tpu.memory_space<vmem>>, vector<8x128xf32>,
      %419 = math.tanh %417 : vector<8x128xf32>
      %420 = arith.mulf %413, %419 : vector<8x128xf32>
      %421 = arith.truncf %420 : vector<8x128xf32> to vector<8x128xbf16>
      %c0_210 = arith.constant 0 : index
      %c0_211 = arith.constant 0 : index
      %422 = vector.load %arg9[%c0_210, %c0_211] : memref<8x128xbf16, #tpu.memory_space<vmem>>, vector<8x128xbf16>
      tpu.vector_store %arg9[%c0_210, %c0_211], %421 {strides = array<i32>} : memref<8x128xbf16, #tpu.memory_space<vmem>>, vector<8x128xbf16>,
    } else {
    }
    %c16_i32_175 = arith.constant 16 : i32
    %354 = arith.muli %arg1, %c16_i32_175 : i32
    %c11_i32 = arith.constant 11 : i32
    %355 = arith.addi %354, %c11_i32 : i32
    %c8_i32_176 = arith.constant 8 : i32
    %356 = arith.cmpi slt, %355, %c8_i32_176 : i32
    %357 = arith.extui %356 : i1 to i32
    %c0_i32_177 = arith.constant 0 : i32
    %358 = arith.cmpi ne, %357, %c0_i32_177 : i32
    scf.if %358 {
      %382 = vector.extract_strided_slice %10 {offsets = [11, 0, 0], sizes = [1, 8, 512], strides = [1, 1, 1]} : vector<16x8x512xf32> to vector<1x8x512xf32>
      %383 = vector.shape_cast %382 : vector<1x8x512xf32> to vector<8x512xf32>
      %c0_192 = arith.constant 0 : index
      %c0_193 = arith.constant 0 : index
      %384 = vector.load %arg9[%c0_192, %c0_193] : memref<8x128xbf16, #tpu.memory_space<vmem>>, vector<8x128xbf16>
      %c0_194 = arith.constant 0 : index
      %c0_195 = arith.constant 0 : index
      %385 = vector.load %arg4[%c0_194, %c0_195] : memref<128x512xbf16, #tpu.memory_space<vmem>>, vector<128x512xbf16>
      %cst_196 = arith.constant dense<0.000000e+00> : vector<8x512xf32>
      %386 = tpu.matmul %384, %385, %cst_196 {dimension_numbers = #tpu.dot_dimension_numbers<[1], [0], [0], [1], [0, 0, 1, 1], [], []>} : vector<8x128xbf16>, vector<128x512xbf16>, vector<8x512xf32> -> vector<8x512xf32>
      %387 = arith.addf %383, %386 : vector<8x512xf32>
      %388 = vector.extract_strided_slice %387 {offsets = [0, 0], sizes = [8, 128], strides = [1, 1]} : vector<8x512xf32> to vector<8x128xf32>
      %cst_197 = arith.constant 5.000000e-01 : f32
      %389 = vector.broadcast %cst_197 : f32 to vector<8x128xf32>
      %390 = arith.mulf %389, %388 : vector<8x128xf32>
      %391 = math.tanh %390 : vector<8x128xf32>
      %cst_198 = arith.constant 5.000000e-01 : f32
      %392 = vector.broadcast %cst_198 : f32 to vector<8x128xf32>
      %393 = arith.mulf %392, %391 : vector<8x128xf32>
      %cst_199 = arith.constant 5.000000e-01 : f32
      %394 = vector.broadcast %cst_199 : f32 to vector<8x128xf32>
      %395 = arith.addf %393, %394 : vector<8x128xf32>
      %396 = vector.extract_strided_slice %387 {offsets = [0, 128], sizes = [8, 128], strides = [1, 1]} : vector<8x512xf32> to vector<8x128xf32>
      %cst_200 = arith.constant 5.000000e-01 : f32
      %397 = vector.broadcast %cst_200 : f32 to vector<8x128xf32>
      %398 = arith.mulf %397, %396 : vector<8x128xf32>
      %399 = math.tanh %398 : vector<8x128xf32>
      %cst_201 = arith.constant 5.000000e-01 : f32
      %400 = vector.broadcast %cst_201 : f32 to vector<8x128xf32>
      %401 = arith.mulf %400, %399 : vector<8x128xf32>
      %cst_202 = arith.constant 5.000000e-01 : f32
      %402 = vector.broadcast %cst_202 : f32 to vector<8x128xf32>
      %403 = arith.addf %401, %402 : vector<8x128xf32>
      %404 = vector.extract_strided_slice %387 {offsets = [0, 256], sizes = [8, 128], strides = [1, 1]} : vector<8x512xf32> to vector<8x128xf32>
      %405 = math.tanh %404 : vector<8x128xf32>
      %406 = vector.extract_strided_slice %387 {offsets = [0, 384], sizes = [8, 128], strides = [1, 1]} : vector<8x512xf32> to vector<8x128xf32>
      %cst_203 = arith.constant 5.000000e-01 : f32
      %407 = vector.broadcast %cst_203 : f32 to vector<8x128xf32>
      %408 = arith.mulf %407, %406 : vector<8x128xf32>
      %409 = math.tanh %408 : vector<8x128xf32>
      %cst_204 = arith.constant 5.000000e-01 : f32
      %410 = vector.broadcast %cst_204 : f32 to vector<8x128xf32>
      %411 = arith.mulf %410, %409 : vector<8x128xf32>
      %cst_205 = arith.constant 5.000000e-01 : f32
      %412 = vector.broadcast %cst_205 : f32 to vector<8x128xf32>
      %413 = arith.addf %411, %412 : vector<8x128xf32>
      %c0_206 = arith.constant 0 : index
      %c0_207 = arith.constant 0 : index
      %414 = vector.load %arg10[%c0_206, %c0_207] : memref<8x128xf32, #tpu.memory_space<vmem>>, vector<8x128xf32>
      %415 = arith.mulf %403, %414 : vector<8x128xf32>
      %416 = arith.mulf %395, %405 : vector<8x128xf32>
      %417 = arith.addf %415, %416 : vector<8x128xf32>
      %c0_208 = arith.constant 0 : index
      %c0_209 = arith.constant 0 : index
      %418 = vector.load %arg10[%c0_208, %c0_209] : memref<8x128xf32, #tpu.memory_space<vmem>>, vector<8x128xf32>
      tpu.vector_store %arg10[%c0_208, %c0_209], %417 {strides = array<i32>} : memref<8x128xf32, #tpu.memory_space<vmem>>, vector<8x128xf32>,
      %419 = math.tanh %417 : vector<8x128xf32>
      %420 = arith.mulf %413, %419 : vector<8x128xf32>
      %421 = arith.truncf %420 : vector<8x128xf32> to vector<8x128xbf16>
      %c0_210 = arith.constant 0 : index
      %c0_211 = arith.constant 0 : index
      %422 = vector.load %arg9[%c0_210, %c0_211] : memref<8x128xbf16, #tpu.memory_space<vmem>>, vector<8x128xbf16>
      tpu.vector_store %arg9[%c0_210, %c0_211], %421 {strides = array<i32>} : memref<8x128xbf16, #tpu.memory_space<vmem>>, vector<8x128xbf16>,
    } else {
    }
    %c16_i32_178 = arith.constant 16 : i32
    %359 = arith.muli %arg1, %c16_i32_178 : i32
    %c12_i32 = arith.constant 12 : i32
    %360 = arith.addi %359, %c12_i32 : i32
    %c8_i32_179 = arith.constant 8 : i32
    %361 = arith.cmpi slt, %360, %c8_i32_179 : i32
    %362 = arith.extui %361 : i1 to i32
    %c0_i32_180 = arith.constant 0 : i32
    %363 = arith.cmpi ne, %362, %c0_i32_180 : i32
    scf.if %363 {
      %382 = vector.extract_strided_slice %10 {offsets = [12, 0, 0], sizes = [1, 8, 512], strides = [1, 1, 1]} : vector<16x8x512xf32> to vector<1x8x512xf32>
      %383 = vector.shape_cast %382 : vector<1x8x512xf32> to vector<8x512xf32>
      %c0_192 = arith.constant 0 : index
      %c0_193 = arith.constant 0 : index
      %384 = vector.load %arg9[%c0_192, %c0_193] : memref<8x128xbf16, #tpu.memory_space<vmem>>, vector<8x128xbf16>
      %c0_194 = arith.constant 0 : index
      %c0_195 = arith.constant 0 : index
      %385 = vector.load %arg4[%c0_194, %c0_195] : memref<128x512xbf16, #tpu.memory_space<vmem>>, vector<128x512xbf16>
      %cst_196 = arith.constant dense<0.000000e+00> : vector<8x512xf32>
      %386 = tpu.matmul %384, %385, %cst_196 {dimension_numbers = #tpu.dot_dimension_numbers<[1], [0], [0], [1], [0, 0, 1, 1], [], []>} : vector<8x128xbf16>, vector<128x512xbf16>, vector<8x512xf32> -> vector<8x512xf32>
      %387 = arith.addf %383, %386 : vector<8x512xf32>
      %388 = vector.extract_strided_slice %387 {offsets = [0, 0], sizes = [8, 128], strides = [1, 1]} : vector<8x512xf32> to vector<8x128xf32>
      %cst_197 = arith.constant 5.000000e-01 : f32
      %389 = vector.broadcast %cst_197 : f32 to vector<8x128xf32>
      %390 = arith.mulf %389, %388 : vector<8x128xf32>
      %391 = math.tanh %390 : vector<8x128xf32>
      %cst_198 = arith.constant 5.000000e-01 : f32
      %392 = vector.broadcast %cst_198 : f32 to vector<8x128xf32>
      %393 = arith.mulf %392, %391 : vector<8x128xf32>
      %cst_199 = arith.constant 5.000000e-01 : f32
      %394 = vector.broadcast %cst_199 : f32 to vector<8x128xf32>
      %395 = arith.addf %393, %394 : vector<8x128xf32>
      %396 = vector.extract_strided_slice %387 {offsets = [0, 128], sizes = [8, 128], strides = [1, 1]} : vector<8x512xf32> to vector<8x128xf32>
      %cst_200 = arith.constant 5.000000e-01 : f32
      %397 = vector.broadcast %cst_200 : f32 to vector<8x128xf32>
      %398 = arith.mulf %397, %396 : vector<8x128xf32>
      %399 = math.tanh %398 : vector<8x128xf32>
      %cst_201 = arith.constant 5.000000e-01 : f32
      %400 = vector.broadcast %cst_201 : f32 to vector<8x128xf32>
      %401 = arith.mulf %400, %399 : vector<8x128xf32>
      %cst_202 = arith.constant 5.000000e-01 : f32
      %402 = vector.broadcast %cst_202 : f32 to vector<8x128xf32>
      %403 = arith.addf %401, %402 : vector<8x128xf32>
      %404 = vector.extract_strided_slice %387 {offsets = [0, 256], sizes = [8, 128], strides = [1, 1]} : vector<8x512xf32> to vector<8x128xf32>
      %405 = math.tanh %404 : vector<8x128xf32>
      %406 = vector.extract_strided_slice %387 {offsets = [0, 384], sizes = [8, 128], strides = [1, 1]} : vector<8x512xf32> to vector<8x128xf32>
      %cst_203 = arith.constant 5.000000e-01 : f32
      %407 = vector.broadcast %cst_203 : f32 to vector<8x128xf32>
      %408 = arith.mulf %407, %406 : vector<8x128xf32>
      %409 = math.tanh %408 : vector<8x128xf32>
      %cst_204 = arith.constant 5.000000e-01 : f32
      %410 = vector.broadcast %cst_204 : f32 to vector<8x128xf32>
      %411 = arith.mulf %410, %409 : vector<8x128xf32>
      %cst_205 = arith.constant 5.000000e-01 : f32
      %412 = vector.broadcast %cst_205 : f32 to vector<8x128xf32>
      %413 = arith.addf %411, %412 : vector<8x128xf32>
      %c0_206 = arith.constant 0 : index
      %c0_207 = arith.constant 0 : index
      %414 = vector.load %arg10[%c0_206, %c0_207] : memref<8x128xf32, #tpu.memory_space<vmem>>, vector<8x128xf32>
      %415 = arith.mulf %403, %414 : vector<8x128xf32>
      %416 = arith.mulf %395, %405 : vector<8x128xf32>
      %417 = arith.addf %415, %416 : vector<8x128xf32>
      %c0_208 = arith.constant 0 : index
      %c0_209 = arith.constant 0 : index
      %418 = vector.load %arg10[%c0_208, %c0_209] : memref<8x128xf32, #tpu.memory_space<vmem>>, vector<8x128xf32>
      tpu.vector_store %arg10[%c0_208, %c0_209], %417 {strides = array<i32>} : memref<8x128xf32, #tpu.memory_space<vmem>>, vector<8x128xf32>,
      %419 = math.tanh %417 : vector<8x128xf32>
      %420 = arith.mulf %413, %419 : vector<8x128xf32>
      %421 = arith.truncf %420 : vector<8x128xf32> to vector<8x128xbf16>
      %c0_210 = arith.constant 0 : index
      %c0_211 = arith.constant 0 : index
      %422 = vector.load %arg9[%c0_210, %c0_211] : memref<8x128xbf16, #tpu.memory_space<vmem>>, vector<8x128xbf16>
      tpu.vector_store %arg9[%c0_210, %c0_211], %421 {strides = array<i32>} : memref<8x128xbf16, #tpu.memory_space<vmem>>, vector<8x128xbf16>,
    } else {
    }
    %c16_i32_181 = arith.constant 16 : i32
    %364 = arith.muli %arg1, %c16_i32_181 : i32
    %c13_i32 = arith.constant 13 : i32
    %365 = arith.addi %364, %c13_i32 : i32
    %c8_i32_182 = arith.constant 8 : i32
    %366 = arith.cmpi slt, %365, %c8_i32_182 : i32
    %367 = arith.extui %366 : i1 to i32
    %c0_i32_183 = arith.constant 0 : i32
    %368 = arith.cmpi ne, %367, %c0_i32_183 : i32
    scf.if %368 {
      %382 = vector.extract_strided_slice %10 {offsets = [13, 0, 0], sizes = [1, 8, 512], strides = [1, 1, 1]} : vector<16x8x512xf32> to vector<1x8x512xf32>
      %383 = vector.shape_cast %382 : vector<1x8x512xf32> to vector<8x512xf32>
      %c0_192 = arith.constant 0 : index
      %c0_193 = arith.constant 0 : index
      %384 = vector.load %arg9[%c0_192, %c0_193] : memref<8x128xbf16, #tpu.memory_space<vmem>>, vector<8x128xbf16>
      %c0_194 = arith.constant 0 : index
      %c0_195 = arith.constant 0 : index
      %385 = vector.load %arg4[%c0_194, %c0_195] : memref<128x512xbf16, #tpu.memory_space<vmem>>, vector<128x512xbf16>
      %cst_196 = arith.constant dense<0.000000e+00> : vector<8x512xf32>
      %386 = tpu.matmul %384, %385, %cst_196 {dimension_numbers = #tpu.dot_dimension_numbers<[1], [0], [0], [1], [0, 0, 1, 1], [], []>} : vector<8x128xbf16>, vector<128x512xbf16>, vector<8x512xf32> -> vector<8x512xf32>
      %387 = arith.addf %383, %386 : vector<8x512xf32>
      %388 = vector.extract_strided_slice %387 {offsets = [0, 0], sizes = [8, 128], strides = [1, 1]} : vector<8x512xf32> to vector<8x128xf32>
      %cst_197 = arith.constant 5.000000e-01 : f32
      %389 = vector.broadcast %cst_197 : f32 to vector<8x128xf32>
      %390 = arith.mulf %389, %388 : vector<8x128xf32>
      %391 = math.tanh %390 : vector<8x128xf32>
      %cst_198 = arith.constant 5.000000e-01 : f32
      %392 = vector.broadcast %cst_198 : f32 to vector<8x128xf32>
      %393 = arith.mulf %392, %391 : vector<8x128xf32>
      %cst_199 = arith.constant 5.000000e-01 : f32
      %394 = vector.broadcast %cst_199 : f32 to vector<8x128xf32>
      %395 = arith.addf %393, %394 : vector<8x128xf32>
      %396 = vector.extract_strided_slice %387 {offsets = [0, 128], sizes = [8, 128], strides = [1, 1]} : vector<8x512xf32> to vector<8x128xf32>
      %cst_200 = arith.constant 5.000000e-01 : f32
      %397 = vector.broadcast %cst_200 : f32 to vector<8x128xf32>
      %398 = arith.mulf %397, %396 : vector<8x128xf32>
      %399 = math.tanh %398 : vector<8x128xf32>
      %cst_201 = arith.constant 5.000000e-01 : f32
      %400 = vector.broadcast %cst_201 : f32 to vector<8x128xf32>
      %401 = arith.mulf %400, %399 : vector<8x128xf32>
      %cst_202 = arith.constant 5.000000e-01 : f32
      %402 = vector.broadcast %cst_202 : f32 to vector<8x128xf32>
      %403 = arith.addf %401, %402 : vector<8x128xf32>
      %404 = vector.extract_strided_slice %387 {offsets = [0, 256], sizes = [8, 128], strides = [1, 1]} : vector<8x512xf32> to vector<8x128xf32>
      %405 = math.tanh %404 : vector<8x128xf32>
      %406 = vector.extract_strided_slice %387 {offsets = [0, 384], sizes = [8, 128], strides = [1, 1]} : vector<8x512xf32> to vector<8x128xf32>
      %cst_203 = arith.constant 5.000000e-01 : f32
      %407 = vector.broadcast %cst_203 : f32 to vector<8x128xf32>
      %408 = arith.mulf %407, %406 : vector<8x128xf32>
      %409 = math.tanh %408 : vector<8x128xf32>
      %cst_204 = arith.constant 5.000000e-01 : f32
      %410 = vector.broadcast %cst_204 : f32 to vector<8x128xf32>
      %411 = arith.mulf %410, %409 : vector<8x128xf32>
      %cst_205 = arith.constant 5.000000e-01 : f32
      %412 = vector.broadcast %cst_205 : f32 to vector<8x128xf32>
      %413 = arith.addf %411, %412 : vector<8x128xf32>
      %c0_206 = arith.constant 0 : index
      %c0_207 = arith.constant 0 : index
      %414 = vector.load %arg10[%c0_206, %c0_207] : memref<8x128xf32, #tpu.memory_space<vmem>>, vector<8x128xf32>
      %415 = arith.mulf %403, %414 : vector<8x128xf32>
      %416 = arith.mulf %395, %405 : vector<8x128xf32>
      %417 = arith.addf %415, %416 : vector<8x128xf32>
      %c0_208 = arith.constant 0 : index
      %c0_209 = arith.constant 0 : index
      %418 = vector.load %arg10[%c0_208, %c0_209] : memref<8x128xf32, #tpu.memory_space<vmem>>, vector<8x128xf32>
      tpu.vector_store %arg10[%c0_208, %c0_209], %417 {strides = array<i32>} : memref<8x128xf32, #tpu.memory_space<vmem>>, vector<8x128xf32>,
      %419 = math.tanh %417 : vector<8x128xf32>
      %420 = arith.mulf %413, %419 : vector<8x128xf32>
      %421 = arith.truncf %420 : vector<8x128xf32> to vector<8x128xbf16>
      %c0_210 = arith.constant 0 : index
      %c0_211 = arith.constant 0 : index
      %422 = vector.load %arg9[%c0_210, %c0_211] : memref<8x128xbf16, #tpu.memory_space<vmem>>, vector<8x128xbf16>
      tpu.vector_store %arg9[%c0_210, %c0_211], %421 {strides = array<i32>} : memref<8x128xbf16, #tpu.memory_space<vmem>>, vector<8x128xbf16>,
    } else {
    }
    %c16_i32_184 = arith.constant 16 : i32
    %369 = arith.muli %arg1, %c16_i32_184 : i32
    %c14_i32 = arith.constant 14 : i32
    %370 = arith.addi %369, %c14_i32 : i32
    %c8_i32_185 = arith.constant 8 : i32
    %371 = arith.cmpi slt, %370, %c8_i32_185 : i32
    %372 = arith.extui %371 : i1 to i32
    %c0_i32_186 = arith.constant 0 : i32
    %373 = arith.cmpi ne, %372, %c0_i32_186 : i32
    scf.if %373 {
      %382 = vector.extract_strided_slice %10 {offsets = [14, 0, 0], sizes = [1, 8, 512], strides = [1, 1, 1]} : vector<16x8x512xf32> to vector<1x8x512xf32>
      %383 = vector.shape_cast %382 : vector<1x8x512xf32> to vector<8x512xf32>
      %c0_192 = arith.constant 0 : index
      %c0_193 = arith.constant 0 : index
      %384 = vector.load %arg9[%c0_192, %c0_193] : memref<8x128xbf16, #tpu.memory_space<vmem>>, vector<8x128xbf16>
      %c0_194 = arith.constant 0 : index
      %c0_195 = arith.constant 0 : index
      %385 = vector.load %arg4[%c0_194, %c0_195] : memref<128x512xbf16, #tpu.memory_space<vmem>>, vector<128x512xbf16>
      %cst_196 = arith.constant dense<0.000000e+00> : vector<8x512xf32>
      %386 = tpu.matmul %384, %385, %cst_196 {dimension_numbers = #tpu.dot_dimension_numbers<[1], [0], [0], [1], [0, 0, 1, 1], [], []>} : vector<8x128xbf16>, vector<128x512xbf16>, vector<8x512xf32> -> vector<8x512xf32>
      %387 = arith.addf %383, %386 : vector<8x512xf32>
      %388 = vector.extract_strided_slice %387 {offsets = [0, 0], sizes = [8, 128], strides = [1, 1]} : vector<8x512xf32> to vector<8x128xf32>
      %cst_197 = arith.constant 5.000000e-01 : f32
      %389 = vector.broadcast %cst_197 : f32 to vector<8x128xf32>
      %390 = arith.mulf %389, %388 : vector<8x128xf32>
      %391 = math.tanh %390 : vector<8x128xf32>
      %cst_198 = arith.constant 5.000000e-01 : f32
      %392 = vector.broadcast %cst_198 : f32 to vector<8x128xf32>
      %393 = arith.mulf %392, %391 : vector<8x128xf32>
      %cst_199 = arith.constant 5.000000e-01 : f32
      %394 = vector.broadcast %cst_199 : f32 to vector<8x128xf32>
      %395 = arith.addf %393, %394 : vector<8x128xf32>
      %396 = vector.extract_strided_slice %387 {offsets = [0, 128], sizes = [8, 128], strides = [1, 1]} : vector<8x512xf32> to vector<8x128xf32>
      %cst_200 = arith.constant 5.000000e-01 : f32
      %397 = vector.broadcast %cst_200 : f32 to vector<8x128xf32>
      %398 = arith.mulf %397, %396 : vector<8x128xf32>
      %399 = math.tanh %398 : vector<8x128xf32>
      %cst_201 = arith.constant 5.000000e-01 : f32
      %400 = vector.broadcast %cst_201 : f32 to vector<8x128xf32>
      %401 = arith.mulf %400, %399 : vector<8x128xf32>
      %cst_202 = arith.constant 5.000000e-01 : f32
      %402 = vector.broadcast %cst_202 : f32 to vector<8x128xf32>
      %403 = arith.addf %401, %402 : vector<8x128xf32>
      %404 = vector.extract_strided_slice %387 {offsets = [0, 256], sizes = [8, 128], strides = [1, 1]} : vector<8x512xf32> to vector<8x128xf32>
      %405 = math.tanh %404 : vector<8x128xf32>
      %406 = vector.extract_strided_slice %387 {offsets = [0, 384], sizes = [8, 128], strides = [1, 1]} : vector<8x512xf32> to vector<8x128xf32>
      %cst_203 = arith.constant 5.000000e-01 : f32
      %407 = vector.broadcast %cst_203 : f32 to vector<8x128xf32>
      %408 = arith.mulf %407, %406 : vector<8x128xf32>
      %409 = math.tanh %408 : vector<8x128xf32>
      %cst_204 = arith.constant 5.000000e-01 : f32
      %410 = vector.broadcast %cst_204 : f32 to vector<8x128xf32>
      %411 = arith.mulf %410, %409 : vector<8x128xf32>
      %cst_205 = arith.constant 5.000000e-01 : f32
      %412 = vector.broadcast %cst_205 : f32 to vector<8x128xf32>
      %413 = arith.addf %411, %412 : vector<8x128xf32>
      %c0_206 = arith.constant 0 : index
      %c0_207 = arith.constant 0 : index
      %414 = vector.load %arg10[%c0_206, %c0_207] : memref<8x128xf32, #tpu.memory_space<vmem>>, vector<8x128xf32>
      %415 = arith.mulf %403, %414 : vector<8x128xf32>
      %416 = arith.mulf %395, %405 : vector<8x128xf32>
      %417 = arith.addf %415, %416 : vector<8x128xf32>
      %c0_208 = arith.constant 0 : index
      %c0_209 = arith.constant 0 : index
      %418 = vector.load %arg10[%c0_208, %c0_209] : memref<8x128xf32, #tpu.memory_space<vmem>>, vector<8x128xf32>
      tpu.vector_store %arg10[%c0_208, %c0_209], %417 {strides = array<i32>} : memref<8x128xf32, #tpu.memory_space<vmem>>, vector<8x128xf32>,
      %419 = math.tanh %417 : vector<8x128xf32>
      %420 = arith.mulf %413, %419 : vector<8x128xf32>
      %421 = arith.truncf %420 : vector<8x128xf32> to vector<8x128xbf16>
      %c0_210 = arith.constant 0 : index
      %c0_211 = arith.constant 0 : index
      %422 = vector.load %arg9[%c0_210, %c0_211] : memref<8x128xbf16, #tpu.memory_space<vmem>>, vector<8x128xbf16>
      tpu.vector_store %arg9[%c0_210, %c0_211], %421 {strides = array<i32>} : memref<8x128xbf16, #tpu.memory_space<vmem>>, vector<8x128xbf16>,
    } else {
    }
    %c16_i32_187 = arith.constant 16 : i32
    %374 = arith.muli %arg1, %c16_i32_187 : i32
    %c15_i32 = arith.constant 15 : i32
    %375 = arith.addi %374, %c15_i32 : i32
    %c8_i32_188 = arith.constant 8 : i32
    %376 = arith.cmpi slt, %375, %c8_i32_188 : i32
    %377 = arith.extui %376 : i1 to i32
    %c0_i32_189 = arith.constant 0 : i32
    %378 = arith.cmpi ne, %377, %c0_i32_189 : i32
    scf.if %378 {
      %382 = vector.extract_strided_slice %10 {offsets = [15, 0, 0], sizes = [1, 8, 512], strides = [1, 1, 1]} : vector<16x8x512xf32> to vector<1x8x512xf32>
      %383 = vector.shape_cast %382 : vector<1x8x512xf32> to vector<8x512xf32>
      %c0_192 = arith.constant 0 : index
      %c0_193 = arith.constant 0 : index
      %384 = vector.load %arg9[%c0_192, %c0_193] : memref<8x128xbf16, #tpu.memory_space<vmem>>, vector<8x128xbf16>
      %c0_194 = arith.constant 0 : index
      %c0_195 = arith.constant 0 : index
      %385 = vector.load %arg4[%c0_194, %c0_195] : memref<128x512xbf16, #tpu.memory_space<vmem>>, vector<128x512xbf16>
      %cst_196 = arith.constant dense<0.000000e+00> : vector<8x512xf32>
      %386 = tpu.matmul %384, %385, %cst_196 {dimension_numbers = #tpu.dot_dimension_numbers<[1], [0], [0], [1], [0, 0, 1, 1], [], []>} : vector<8x128xbf16>, vector<128x512xbf16>, vector<8x512xf32> -> vector<8x512xf32>
      %387 = arith.addf %383, %386 : vector<8x512xf32>
      %388 = vector.extract_strided_slice %387 {offsets = [0, 0], sizes = [8, 128], strides = [1, 1]} : vector<8x512xf32> to vector<8x128xf32>
      %cst_197 = arith.constant 5.000000e-01 : f32
      %389 = vector.broadcast %cst_197 : f32 to vector<8x128xf32>
      %390 = arith.mulf %389, %388 : vector<8x128xf32>
      %391 = math.tanh %390 : vector<8x128xf32>
      %cst_198 = arith.constant 5.000000e-01 : f32
      %392 = vector.broadcast %cst_198 : f32 to vector<8x128xf32>
      %393 = arith.mulf %392, %391 : vector<8x128xf32>
      %cst_199 = arith.constant 5.000000e-01 : f32
      %394 = vector.broadcast %cst_199 : f32 to vector<8x128xf32>
      %395 = arith.addf %393, %394 : vector<8x128xf32>
      %396 = vector.extract_strided_slice %387 {offsets = [0, 128], sizes = [8, 128], strides = [1, 1]} : vector<8x512xf32> to vector<8x128xf32>
      %cst_200 = arith.constant 5.000000e-01 : f32
      %397 = vector.broadcast %cst_200 : f32 to vector<8x128xf32>
      %398 = arith.mulf %397, %396 : vector<8x128xf32>
      %399 = math.tanh %398 : vector<8x128xf32>
      %cst_201 = arith.constant 5.000000e-01 : f32
      %400 = vector.broadcast %cst_201 : f32 to vector<8x128xf32>
      %401 = arith.mulf %400, %399 : vector<8x128xf32>
      %cst_202 = arith.constant 5.000000e-01 : f32
      %402 = vector.broadcast %cst_202 : f32 to vector<8x128xf32>
      %403 = arith.addf %401, %402 : vector<8x128xf32>
      %404 = vector.extract_strided_slice %387 {offsets = [0, 256], sizes = [8, 128], strides = [1, 1]} : vector<8x512xf32> to vector<8x128xf32>
      %405 = math.tanh %404 : vector<8x128xf32>
      %406 = vector.extract_strided_slice %387 {offsets = [0, 384], sizes = [8, 128], strides = [1, 1]} : vector<8x512xf32> to vector<8x128xf32>
      %cst_203 = arith.constant 5.000000e-01 : f32
      %407 = vector.broadcast %cst_203 : f32 to vector<8x128xf32>
      %408 = arith.mulf %407, %406 : vector<8x128xf32>
      %409 = math.tanh %408 : vector<8x128xf32>
      %cst_204 = arith.constant 5.000000e-01 : f32
      %410 = vector.broadcast %cst_204 : f32 to vector<8x128xf32>
      %411 = arith.mulf %410, %409 : vector<8x128xf32>
      %cst_205 = arith.constant 5.000000e-01 : f32
      %412 = vector.broadcast %cst_205 : f32 to vector<8x128xf32>
      %413 = arith.addf %411, %412 : vector<8x128xf32>
      %c0_206 = arith.constant 0 : index
      %c0_207 = arith.constant 0 : index
      %414 = vector.load %arg10[%c0_206, %c0_207] : memref<8x128xf32, #tpu.memory_space<vmem>>, vector<8x128xf32>
      %415 = arith.mulf %403, %414 : vector<8x128xf32>
      %416 = arith.mulf %395, %405 : vector<8x128xf32>
      %417 = arith.addf %415, %416 : vector<8x128xf32>
      %c0_208 = arith.constant 0 : index
      %c0_209 = arith.constant 0 : index
      %418 = vector.load %arg10[%c0_208, %c0_209] : memref<8x128xf32, #tpu.memory_space<vmem>>, vector<8x128xf32>
      tpu.vector_store %arg10[%c0_208, %c0_209], %417 {strides = array<i32>} : memref<8x128xf32, #tpu.memory_space<vmem>>, vector<8x128xf32>,
      %419 = math.tanh %417 : vector<8x128xf32>
      %420 = arith.mulf %413, %419 : vector<8x128xf32>
      %421 = arith.truncf %420 : vector<8x128xf32> to vector<8x128xbf16>
      %c0_210 = arith.constant 0 : index
      %c0_211 = arith.constant 0 : index
      %422 = vector.load %arg9[%c0_210, %c0_211] : memref<8x128xbf16, #tpu.memory_space<vmem>>, vector<8x128xbf16>
      tpu.vector_store %arg9[%c0_210, %c0_211], %421 {strides = array<i32>} : memref<8x128xbf16, #tpu.memory_space<vmem>>, vector<8x128xbf16>,
    } else {
    }
    %c0_i32_190 = arith.constant 0 : i32
    %379 = arith.cmpi eq, %arg1, %c0_i32_190 : i32
    %380 = arith.extui %379 : i1 to i32
    %c0_i32_191 = arith.constant 0 : i32
    %381 = arith.cmpi ne, %380, %c0_i32_191 : i32
    scf.if %381 {
      %c0_192 = arith.constant 0 : index
      %c0_193 = arith.constant 0 : index
      %382 = vector.load %arg9[%c0_192, %c0_193] : memref<8x128xbf16, #tpu.memory_space<vmem>>, vector<8x128xbf16>
      %c0_194 = arith.constant 0 : index
      %c0_195 = arith.constant 0 : index
      %383 = vector.load %arg6[%c0_194, %c0_195] : memref<128x8xbf16, #tpu.memory_space<vmem>>, vector<128x8xbf16>
      %cst_196 = arith.constant dense<0.000000e+00> : vector<8x8xf32>
      %384 = tpu.matmul %382, %383, %cst_196 {dimension_numbers = #tpu.dot_dimension_numbers<[1], [0], [0], [1], [0, 0, 1, 1], [], []>} : vector<8x128xbf16>, vector<128x8xbf16>, vector<8x8xf32> -> vector<8x8xf32>
      %c0_197 = arith.constant 0 : index
      %c0_198 = arith.constant 0 : index
      %385 = vector.load %arg7[%c0_197, %c0_198] : memref<1x8xf32, #tpu.memory_space<vmem>>, vector<1x8xf32>
      %386 = vector.broadcast %385 : vector<1x8xf32> to vector<8x8xf32>
      %387 = arith.addf %384, %386 : vector<8x8xf32>
      %c0_199 = arith.constant 0 : index
      %c0_200 = arith.constant 0 : index
      %388 = vector.load %arg8[%c0_199, %c0_200] : memref<8x8xf32, #tpu.memory_space<vmem>>, vector<8x8xf32>
      tpu.vector_store %arg8[%c0_199, %c0_200], %387 {strides = array<i32>} : memref<8x8xf32, #tpu.memory_space<vmem>>, vector<8x8xf32>,
    } else {
    }
    return
  }
  func.func @transform_0(%arg0: i32, %arg1: i32) -> (i32, i32, i32) {
    %c0_i32 = arith.constant 0 : i32
    %c0_i32_0 = arith.constant 0 : i32
    return %arg1, %arg0, %c0_i32 : i32, i32, i32
  }
  func.func @transform_1(%arg0: i32, %arg1: i32) -> (i32, i32) {
    %c0_i32 = arith.constant 0 : i32
    %c0_i32_0 = arith.constant 0 : i32
    %c0_i32_1 = arith.constant 0 : i32
    return %c0_i32, %c0_i32_0 : i32, i32
  }
  func.func @transform_2(%arg0: i32, %arg1: i32) -> (i32, i32) {
    %c0_i32 = arith.constant 0 : i32
    %c0_i32_0 = arith.constant 0 : i32
    %c0_i32_1 = arith.constant 0 : i32
    return %c0_i32, %c0_i32_0 : i32, i32
  }
  func.func @transform_3(%arg0: i32, %arg1: i32) -> (i32, i32) {
    %c0_i32 = arith.constant 0 : i32
    %c0_i32_0 = arith.constant 0 : i32
    %c0_i32_1 = arith.constant 0 : i32
    return %c0_i32, %c0_i32_0 : i32, i32
  }
  func.func @transform_4(%arg0: i32, %arg1: i32) -> (i32, i32) {
    %c0_i32 = arith.constant 0 : i32
    %c0_i32_0 = arith.constant 0 : i32
    %c0_i32_1 = arith.constant 0 : i32
    return %c0_i32, %c0_i32_0 : i32, i32
  }
  func.func @transform_5(%arg0: i32, %arg1: i32) -> (i32, i32) {
    %c0_i32 = arith.constant 0 : i32
    %c0_i32_0 = arith.constant 0 : i32
    %c0_i32_1 = arith.constant 0 : i32
    return %c0_i32, %c0_i32_0 : i32, i32
  }
  func.func @transform_6(%arg0: i32, %arg1: i32) -> (i32, i32) {
    %c0_i32 = arith.constant 0 : i32
    %c0_i32_0 = arith.constant 0 : i32
    return %arg0, %c0_i32 : i32, i32
  }
}

</mosaic_0001>

<llo_original>
// kernel: tpu_custom_call.1
$region0: #{tpu_custom_call.1}
  #allocation0 [shape = 'u32[]', space=smem, size = 0x4, offset = 0x4, fixed_abs, tag = 'smem constant byte address 0x4 - core index']
  #allocation1 [shape = 'u32[144,128]{1,0:T(1,128)}', space=vmem, size = 0x12000, scoped, tag = 'internal scratch']
  #allocation2 [shape = 'bf16[8,128]{1,0:T(8,128)(2,1)}', space=vmem, size = 0x800, scoped, tag = 'scratch operand']
  #allocation3 [shape = 'f32[8,128]{1,0:T(8,128)}', space=vmem, size = 0x1000, scoped, tag = 'scratch operand']
  %s0 = inlined_call_operand.vmem [shape: bf16[16,8,16], index: 0, kind: input, shape index: {}]
  %s1 = inlined_call_operand.hbm [shape: bf16[16,512], index: 1, kind: input, shape index: {}]
  %s2 = inlined_call_operand.hbm [shape: bf16[128,512], index: 2, kind: input, shape index: {}]
  %s3 = inlined_call_operand.vmem [shape: f32[1,512], index: 3, kind: input, shape index: {}]
  %s4 = inlined_call_operand.vmem [shape: bf16[128,8], index: 4, kind: input, shape index: {}]
  %s5 = inlined_call_operand.vmem [shape: f32[1,8], index: 5, kind: input, shape index: {}]
  %s6 = inlined_call_operand.hbm [shape: f32[8,8], index: 6, kind: output, shape index: {}]
  %s7 = sld [smem:[#allocation0]]
  $region82: #{tpu_custom_call.1} parent=0
    _
  %s9 = ssub.s32 1, %s7
  %s10 = scalar_select 0, %s9, %s7
  $region1: #{tpu_custom_call.1} parent=0
    #allocation4 [shape = 'u8[16384]{0}', space=vmem, size = 0x4000, scoped, tag = 'input window, operand 1, single buffered']
    #allocation5 [shape = 's32[1]{0}', space=sflag, size = 0x4, scoped, tag = 'scoped memory for tpu_custom_call.1']
    #allocation6 [shape = 's32[1]{0}', space=sflag, size = 0x4, scoped, tag = 'scoped memory for tpu_custom_call.1']
    #allocation7 [shape = 'u8[131072]{0}', space=vmem, size = 0x20000, scoped, tag = 'input window, operand 2, single buffered']
    #allocation8 [shape = 's32[1]{0}', space=sflag, size = 0x4, scoped, tag = 'scoped memory for tpu_custom_call.1']
    #allocation9 [shape = 'u8[4096]{0}', space=vmem, size = 0x1000, scoped, tag = 'output window, operand 0, single buffered']
    %11 = vsyncpa [#allocation5], 0
    %12 = vsyncpa [#allocation8], 0
    %13 = vsyncpa [#allocation6], 0
    // Predicated region
    $region2: #{tpu_custom_call.1} parent=1 // pred_check
      _
    $region3: #{tpu_custom_call.1} parent=1 // pred_check_branch
      %15 = sbr.rel (0) target = $region5
    $region4: #{tpu_custom_call.1} parent=1 // pred_region
      _
    $region5: #{tpu_custom_call.1} parent=1 // pred_fallthru
      _
    // Predicated region
    $region6: #{tpu_custom_call.1} parent=1 // pred_check
      _
    $region7: #{tpu_custom_call.1} parent=1 // pred_check_branch
      %17 = sbr.rel (0) target = $region9
    $region8: #{tpu_custom_call.1} parent=1 // pred_region
      %s19 = ssub.s32 512, 512
      %20 = vsyncadd [#allocation5], %s19
      %s21 = sshll.u32 [#allocation4], 4
      %s22 = int_to_ptr.vmem [resolvable:$true] %s21
      %27 = dma.hbm_to_vmem [thread:$0]  %s1, 512, %s22, [#allocation5], 256, 256, 16
    $region9: #{tpu_custom_call.1} parent=1 // pred_fallthru
      _
    // Predicated region
    $region10: #{tpu_custom_call.1} parent=1 // pred_check
      _
    $region11: #{tpu_custom_call.1} parent=1 // pred_check_branch
      %29 = sbr.rel (0) target = $region13
    $region12: #{tpu_custom_call.1} parent=1 // pred_region
      %s31 = ssub.s32 4096, 4096
      %32 = vsyncadd [#allocation8], %s31
      %s33 = sshll.u32 [#allocation7], 4
      %s34 = int_to_ptr.vmem [resolvable:$true] %s33
      %39 = dma.hbm_to_vmem [thread:$0]  %s2, 4096, %s34, [#allocation8], 256, 256, 16
    $region13: #{tpu_custom_call.1} parent=1 // pred_fallthru
      _
    // Predicated region
    $region14: #{tpu_custom_call.1} parent=1 // pred_check
      _
    $region15: #{tpu_custom_call.1} parent=1 // pred_check_branch
      %41 = sbr.rel (0) target = $region17
    $region16: #{tpu_custom_call.1} parent=1 // pred_region
      _
    $region17: #{tpu_custom_call.1} parent=1 // pred_fallthru
      _
    // Predicated region
    $region18: #{tpu_custom_call.1} parent=1 // pred_check
      _
    $region19: #{tpu_custom_call.1} parent=1 // pred_check_branch
      %43 = sbr.rel (0) target = $region21
    $region20: #{tpu_custom_call.1} parent=1 // pred_region
      _
    $region21: #{tpu_custom_call.1} parent=1 // pred_fallthru
      _
    // Predicated region
    $region22: #{tpu_custom_call.1} parent=1 // pred_check
      _
    $region23: #{tpu_custom_call.1} parent=1 // pred_check_branch
      %45 = sbr.rel (0) target = $region25
    $region24: #{tpu_custom_call.1} parent=1 // pred_region
      _
    $region25: #{tpu_custom_call.1} parent=1 // pred_fallthru
      _
    // Predicated region
    $region26: #{tpu_custom_call.1} parent=1 // pred_check
      _
    $region27: #{tpu_custom_call.1} parent=1 // pred_check_branch
      %47 = sbr.rel (0) target = $region29
    $region28: #{tpu_custom_call.1} parent=1 // pred_region
      %48 = dma.done [#allocation5], 512
    $region29: #{tpu_custom_call.1} parent=1 // pred_fallthru
      _
    // Predicated region
    $region30: #{tpu_custom_call.1} parent=1 // pred_check
      _
    $region31: #{tpu_custom_call.1} parent=1 // pred_check_branch
      %50 = sbr.rel (0) target = $region33
    $region32: #{tpu_custom_call.1} parent=1 // pred_region
      %51 = dma.done [#allocation8], 4096
    $region33: #{tpu_custom_call.1} parent=1 // pred_fallthru
      _
    %p53 = scmp.eq.s32.totalorder 0, 0
    // Predicated region
    $region34: #{tpu_custom_call.1} parent=1 // pred_check
      %p54 = pneg %p53
    $region35: #{tpu_custom_call.1} parent=1 // pred_check_branch
      %56 = sbr.rel (%p54) target = $region37
    $region36: #{tpu_custom_call.1} parent=1 // pred_region
      %57 = vst [vmem:[#allocation2] sm:$0xf] 0
      %58 = vst [vmem:[#allocation3] sm:$0xff] 0.0
    $region37: #{tpu_custom_call.1} parent=1 // pred_fallthru
      _
    %v59 = vld [vmem:[%s0] sm:$0xf]
    %v60 = vld [vmem:[%s0 + $0x4] sm:$0xf]
    %v61 = vld [vmem:[%s0 + $0x8] sm:$0xf]
    %v62 = vld [vmem:[%s0 + $0xc] sm:$0xf]
    %v63 = vld [vmem:[%s0 + $0x10] sm:$0xf]
    %v64 = vld [vmem:[%s0 + $0x14] sm:$0xf]
    %v65 = vld [vmem:[%s0 + $0x18] sm:$0xf]
    %v66 = vld [vmem:[%s0 + $0x1c] sm:$0xf]
    %v67 = vld [vmem:[%s0 + $0x20] sm:$0xf]
    %v68 = vld [vmem:[%s0 + $0x24] sm:$0xf]
    %v69 = vld [vmem:[%s0 + $0x28] sm:$0xf]
    %v70 = vld [vmem:[%s0 + $0x2c] sm:$0xf]
    %v71 = vld [vmem:[%s0 + $0x30] sm:$0xf]
    %v72 = vld [vmem:[%s0 + $0x34] sm:$0xf]
    %v73 = vld [vmem:[%s0 + $0x38] sm:$0xf]
    %v74 = vld [vmem:[%s0 + $0x3c] sm:$0xf]
    %v75 = vld [vmem:[#allocation4] sm:$0xff]
    %v76 = vld [vmem:[#allocation4 + $0x8] sm:$0xff]
    %v77 = vld [vmem:[#allocation4 + $0x10] sm:$0xff]
    %v78 = vld [vmem:[#allocation4 + $0x18] sm:$0xff]
    %v79 = vld [vmem:[%s3] sm:$0xf]
    %v81 = vlaneseq
    %v82 = vshrl.u32 %v81, 7
    %v83 = vsub.s32 0, %v82
    %v84 = vrot.slane %v79, %v83
    %v85 = vlaneseq
    %v86 = vshrl.u32 %v85, 7
    %v87 = vsub.s32 1, %v86
    %v88 = vrot.slane %v79, %v87
    %v89 = vlaneseq
    %v90 = vshrl.u32 %v89, 7
    %v91 = vsub.s32 2, %v90
    %v92 = vrot.slane %v79, %v91
    %v93 = vlaneseq
    %v94 = vshrl.u32 %v93, 7
    %v95 = vsub.s32 3, %v94
    %v96 = vrot.slane %v79, %v95
    %v117 = vunpack.c.l.b16 %v59
    %v118 = vunpack.c.l.b16 %v60
    %v119 = vunpack.c.l.b16 %v61
    %v120 = vunpack.c.l.b16 %v62
    %v121 = vunpack.c.l.b16 %v63
    %v122 = vunpack.c.l.b16 %v64
    %v123 = vunpack.c.l.b16 %v65
    %v124 = vunpack.c.l.b16 %v66
    %v125 = vunpack.c.l.b16 %v67
    %v126 = vunpack.c.l.b16 %v68
    %v127 = vunpack.c.l.b16 %v69
    %v128 = vunpack.c.l.b16 %v70
    %v129 = vunpack.c.l.b16 %v71
    %v130 = vunpack.c.l.b16 %v72
    %v131 = vunpack.c.l.b16 %v73
    %v132 = vunpack.c.l.b16 %v74
    %v133 = vpack.c.b16 %v118, %v117
    %v134 = vpack.c.b16 %v120, %v119
    %v135 = vpack.c.b16 %v122, %v121
    %v136 = vpack.c.b16 %v124, %v123
    %v137 = vpack.c.b16 %v126, %v125
    %v138 = vpack.c.b16 %v128, %v127
    %v139 = vpack.c.b16 %v130, %v129
    %v140 = vpack.c.b16 %v132, %v131
    %v145 = vunpack.c.l.b16 %v75
    %v146 = vunpack.c.h.b16 %v75
    %v147 = vunpack.c.l.b16 %v76
    %v148 = vunpack.c.h.b16 %v76
    %v149 = vunpack.c.l.b16 %v77
    %v150 = vunpack.c.h.b16 %v77
    %v151 = vunpack.c.l.b16 %v78
    %v152 = vunpack.c.h.b16 %v78
    %v153 = vpack.c.b16 %v149, %v145
    %v154 = vpack.c.b16 %v150, %v146
    %v155 = vpack.c.b16 %v151, %v147
    %v156 = vpack.c.b16 %v152, %v148
    %vm161 = vcmask 130048
    %v163 = vsel %vm161, %v133, 0
    %v166 = vsel %vm161, %v134, 0
    %v169 = vsel %vm161, %v135, 0
    %v172 = vsel %vm161, %v136, 0
    %v175 = vsel %vm161, %v137, 0
    %v178 = vsel %vm161, %v138, 0
    %v181 = vsel %vm161, %v139, 0
    %v184 = vsel %vm161, %v140, 0
    %186 = vmatprep.subr.bf16.mxu0 0
    %187 = vmatpush1.bf16.msra.mxu0 0
    %188 = vmatprep.subr.bf16.mxu0 0
    %189 = vmatpush1.bf16.msra.mxu0 0
    %190 = vmatprep.subr.bf16.mxu0 0
    %191 = vmatpush1.bf16.msra.mxu0 0
    %192 = vmatprep.subr.bf16.mxu0 0
    %193 = vmatpush1.bf16.msra.mxu0 0
    %194 = vmatprep.subr.bf16.mxu0 0
    %195 = vmatpush1.bf16.msra.mxu0 0
    %196 = vmatprep.subr.bf16.mxu0 0
    %197 = vmatpush1.bf16.msra.mxu0 0
    %198 = vmatprep.subr.bf16.mxu0 0
    %199 = vmatpush1.bf16.msra.mxu0 0
    %200 = vmatprep.subr.bf16.mxu0 %v154
    %201 = vmatpush1.bf16.msra.mxu0 %v153
    %202 = vmatprep.subr.bf16.mxu0 0
    %203 = vmatpush2.bf16.msra.mxu0 0
    %204 = vmatprep.subr.bf16.mxu0 0
    %205 = vmatpush2.bf16.msra.mxu0 0
    %206 = vmatprep.subr.bf16.mxu0 0
    %207 = vmatpush2.bf16.msra.mxu0 0
    %208 = vmatprep.subr.bf16.mxu0 0
    %209 = vmatpush2.bf16.msra.mxu0 0
    %210 = vmatprep.subr.bf16.mxu0 0
    %211 = vmatpush2.bf16.msra.mxu0 0
    %212 = vmatprep.subr.bf16.mxu0 0
    %213 = vmatpush2.bf16.msra.mxu0 0
    %214 = vmatprep.subr.bf16.mxu0 0
    %215 = vmatpush2.bf16.msra.mxu0 0
    %216 = vmatprep.subr.bf16.mxu0 0
    %217 = vmatpush2.bf16.msra.mxu0 0
    %218 = vmatprep.mubr.bf16.mxu0 0
    %219 = vmatmul.mubr.bf16.gmra.mxu0 %v163
    %v220 = vpop.f32.mrf.mxu0
    %v221 = vadd.f32 %v84, %v220
    %v222 = vpop.f32.mrf.mxu0
    %v223 = vadd.f32 %v88, %v222
    %v224 = vpop.f32.mrf.mxu0
    %v225 = vadd.f32 %v84, %v224
    %v226 = vpop.f32.mrf.mxu0
    %v227 = vadd.f32 %v88, %v226
    %228 = vmatprep.mubr.bf16.mxu0 0
    %229 = vmatmul.mubr.bf16.gmra.mxu0 %v166
    %v230 = vpop.f32.mrf.mxu0
    %v231 = vadd.f32 %v84, %v230
    %v232 = vpop.f32.mrf.mxu0
    %v233 = vadd.f32 %v88, %v232
    %v234 = vpop.f32.mrf.mxu0
    %v235 = vadd.f32 %v84, %v234
    %v236 = vpop.f32.mrf.mxu0
    %v237 = vadd.f32 %v88, %v236
    %238 = vmatprep.mubr.bf16.mxu0 0
    %239 = vmatmul.mubr.bf16.gmra.mxu0 %v169
    %v240 = vpop.f32.mrf.mxu0
    %v241 = vadd.f32 %v84, %v240
    %v242 = vpop.f32.mrf.mxu0
    %v243 = vadd.f32 %v88, %v242
    %v244 = vpop.f32.mrf.mxu0
    %v245 = vadd.f32 %v84, %v244
    %v246 = vpop.f32.mrf.mxu0
    %v247 = vadd.f32 %v88, %v246
    %248 = vmatprep.mubr.bf16.mxu0 0
    %249 = vmatmul.mubr.bf16.gmra.mxu0 %v172
    %v250 = vpop.f32.mrf.mxu0
    %v251 = vadd.f32 %v84, %v250
    %v252 = vpop.f32.mrf.mxu0
    %v253 = vadd.f32 %v88, %v252
    %v254 = vpop.f32.mrf.mxu0
    %v255 = vadd.f32 %v84, %v254
    %v256 = vpop.f32.mrf.mxu0
    %v257 = vadd.f32 %v88, %v256
    %258 = vmatprep.mubr.bf16.mxu0 0
    %259 = vmatmul.mubr.bf16.gmra.mxu0 %v175
    %v260 = vpop.f32.mrf.mxu0
    %v261 = vadd.f32 %v84, %v260
    %v262 = vpop.f32.mrf.mxu0
    %v263 = vadd.f32 %v88, %v262
    %v264 = vpop.f32.mrf.mxu0
    %v265 = vadd.f32 %v84, %v264
    %v266 = vpop.f32.mrf.mxu0
    %v267 = vadd.f32 %v88, %v266
    %268 = vmatprep.mubr.bf16.mxu0 0
    %269 = vmatmul.mubr.bf16.gmra.mxu0 %v178
    %v270 = vpop.f32.mrf.mxu0
    %v271 = vadd.f32 %v84, %v270
    %v272 = vpop.f32.mrf.mxu0
    %v273 = vadd.f32 %v88, %v272
    %v274 = vpop.f32.mrf.mxu0
    %v275 = vadd.f32 %v84, %v274
    %v276 = vpop.f32.mrf.mxu0
    %v277 = vadd.f32 %v88, %v276
    %278 = vmatprep.mubr.bf16.mxu0 0
    %279 = vmatmul.mubr.bf16.gmra.mxu0 %v181
    %v280 = vpop.f32.mrf.mxu0
    %v281 = vadd.f32 %v84, %v280
    %v282 = vpop.f32.mrf.mxu0
    %v283 = vadd.f32 %v88, %v282
    %v284 = vpop.f32.mrf.mxu0
    %v285 = vadd.f32 %v84, %v284
    %v286 = vpop.f32.mrf.mxu0
    %v287 = vadd.f32 %v88, %v286
    %288 = vmatprep.mubr.bf16.mxu0 0
    %289 = vmatmul.mubr.bf16.gmra.mxu0 %v184
    %v290 = vpop.f32.mrf.mxu0
    %v291 = vadd.f32 %v84, %v290
    %v292 = vpop.f32.mrf.mxu0
    %v293 = vadd.f32 %v88, %v292
    %v294 = vpop.f32.mrf.mxu0
    %v295 = vadd.f32 %v84, %v294
    %v296 = vpop.f32.mrf.mxu0
    %v297 = vadd.f32 %v88, %v296
    %298 = vdwg.mxu0
    %299 = vmatprep.subr.bf16.mxu0 0
    %300 = vmatpush1.bf16.msra.mxu0 0
    %301 = vmatprep.subr.bf16.mxu0 0
    %302 = vmatpush1.bf16.msra.mxu0 0
    %303 = vmatprep.subr.bf16.mxu0 0
    %304 = vmatpush1.bf16.msra.mxu0 0
    %305 = vmatprep.subr.bf16.mxu0 0
    %306 = vmatpush1.bf16.msra.mxu0 0
    %307 = vmatprep.subr.bf16.mxu0 0
    %308 = vmatpush1.bf16.msra.mxu0 0
    %309 = vmatprep.subr.bf16.mxu0 0
    %310 = vmatpush1.bf16.msra.mxu0 0
    %311 = vmatprep.subr.bf16.mxu0 0
    %312 = vmatpush1.bf16.msra.mxu0 0
    %313 = vmatprep.subr.bf16.mxu0 %v156
    %314 = vmatpush1.bf16.msra.mxu0 %v155
    %315 = vmatprep.subr.bf16.mxu0 0
    %316 = vmatpush2.bf16.msra.mxu0 0
    %317 = vmatprep.subr.bf16.mxu0 0
    %318 = vmatpush2.bf16.msra.mxu0 0
    %319 = vmatprep.subr.bf16.mxu0 0
    %320 = vmatpush2.bf16.msra.mxu0 0
    %321 = vmatprep.subr.bf16.mxu0 0
    %322 = vmatpush2.bf16.msra.mxu0 0
    %323 = vmatprep.subr.bf16.mxu0 0
    %324 = vmatpush2.bf16.msra.mxu0 0
    %325 = vmatprep.subr.bf16.mxu0 0
    %326 = vmatpush2.bf16.msra.mxu0 0
    %327 = vmatprep.subr.bf16.mxu0 0
    %328 = vmatpush2.bf16.msra.mxu0 0
    %329 = vmatprep.subr.bf16.mxu0 0
    %330 = vmatpush2.bf16.msra.mxu0 0
    %331 = vmatprep.mubr.bf16.mxu0 0
    %332 = vmatmul.mubr.bf16.gmra.mxu0 %v163
    %v333 = vpop.f32.mrf.mxu0
    %v334 = vadd.f32 %v92, %v333
    %v335 = vpop.f32.mrf.mxu0
    %v336 = vadd.f32 %v96, %v335
    %v337 = vpop.f32.mrf.mxu0
    %v338 = vadd.f32 %v92, %v337
    %v339 = vpop.f32.mrf.mxu0
    %v340 = vadd.f32 %v96, %v339
    %341 = vmatprep.mubr.bf16.mxu0 0
    %342 = vmatmul.mubr.bf16.gmra.mxu0 %v166
    %v343 = vpop.f32.mrf.mxu0
    %v344 = vadd.f32 %v92, %v343
    %v345 = vpop.f32.mrf.mxu0
    %v346 = vadd.f32 %v96, %v345
    %v347 = vpop.f32.mrf.mxu0
    %v348 = vadd.f32 %v92, %v347
    %v349 = vpop.f32.mrf.mxu0
    %v350 = vadd.f32 %v96, %v349
    %351 = vmatprep.mubr.bf16.mxu0 0
    %352 = vmatmul.mubr.bf16.gmra.mxu0 %v169
    %v353 = vpop.f32.mrf.mxu0
    %v354 = vadd.f32 %v92, %v353
    %v355 = vpop.f32.mrf.mxu0
    %v356 = vadd.f32 %v96, %v355
    %v357 = vpop.f32.mrf.mxu0
    %v358 = vadd.f32 %v92, %v357
    %v359 = vpop.f32.mrf.mxu0
    %v360 = vadd.f32 %v96, %v359
    %361 = vmatprep.mubr.bf16.mxu0 0
    %362 = vmatmul.mubr.bf16.gmra.mxu0 %v172
    %v363 = vpop.f32.mrf.mxu0
    %v364 = vadd.f32 %v92, %v363
    %v365 = vpop.f32.mrf.mxu0
    %v366 = vadd.f32 %v96, %v365
    %v367 = vpop.f32.mrf.mxu0
    %v368 = vadd.f32 %v92, %v367
    %v369 = vpop.f32.mrf.mxu0
    %v370 = vadd.f32 %v96, %v369
    %371 = vmatprep.mubr.bf16.mxu0 0
    %372 = vmatmul.mubr.bf16.gmra.mxu0 %v175
    %v373 = vpop.f32.mrf.mxu0
    %v374 = vadd.f32 %v92, %v373
    %v375 = vpop.f32.mrf.mxu0
    %v376 = vadd.f32 %v96, %v375
    %v377 = vpop.f32.mrf.mxu0
    %v378 = vadd.f32 %v92, %v377
    %v379 = vpop.f32.mrf.mxu0
    %v380 = vadd.f32 %v96, %v379
    %381 = vmatprep.mubr.bf16.mxu0 0
    %382 = vmatmul.mubr.bf16.gmra.mxu0 %v178
    %v383 = vpop.f32.mrf.mxu0
    %v384 = vadd.f32 %v92, %v383
    %v385 = vpop.f32.mrf.mxu0
    %v386 = vadd.f32 %v96, %v385
    %v387 = vpop.f32.mrf.mxu0
    %v388 = vadd.f32 %v92, %v387
    %v389 = vpop.f32.mrf.mxu0
    %v390 = vadd.f32 %v96, %v389
    %391 = vmatprep.mubr.bf16.mxu0 0
    %392 = vmatmul.mubr.bf16.gmra.mxu0 %v181
    %v393 = vpop.f32.mrf.mxu0
    %v394 = vadd.f32 %v92, %v393
    %v395 = vpop.f32.mrf.mxu0
    %v396 = vadd.f32 %v96, %v395
    %v397 = vpop.f32.mrf.mxu0
    %v398 = vadd.f32 %v92, %v397
    %v399 = vpop.f32.mrf.mxu0
    %v400 = vadd.f32 %v96, %v399
    %401 = vmatprep.mubr.bf16.mxu0 0
    %402 = vmatmul.mubr.bf16.gmra.mxu0 %v184
    %v403 = vpop.f32.mrf.mxu0
    %v404 = vadd.f32 %v92, %v403
    %v405 = vpop.f32.mrf.mxu0
    %v406 = vadd.f32 %v96, %v405
    %v407 = vpop.f32.mrf.mxu0
    %v408 = vadd.f32 %v92, %v407
    %v409 = vpop.f32.mrf.mxu0
    %v410 = vadd.f32 %v96, %v409
    %411 = vdwg.mxu0
    %v412 = vld [vmem:[#allocation2] sm:$0xf]
    %v413 = vld [vmem:[#allocation7] sm:$0xff]
    %v414 = vld [vmem:[#allocation7 + $0x8] sm:$0xff]
    %v415 = vld [vmem:[#allocation7 + $0x10] sm:$0xff]
    %v416 = vld [vmem:[#allocation7 + $0x18] sm:$0xff]
    %v417 = vld [vmem:[#allocation7 + $0x20] sm:$0xff]
    %v418 = vld [vmem:[#allocation7 + $0x28] sm:$0xff]
    %v419 = vld [vmem:[#allocation7 + $0x30] sm:$0xff]
    %v420 = vld [vmem:[#allocation7 + $0x38] sm:$0xff]
    %v421 = vld [vmem:[#allocation7 + $0x40] sm:$0xff]
    %v422 = vld [vmem:[#allocation7 + $0x48] sm:$0xff]
    %v423 = vld [vmem:[#allocation7 + $0x50] sm:$0xff]
    %v424 = vld [vmem:[#allocation7 + $0x58] sm:$0xff]
    %v425 = vld [vmem:[#allocation7 + $0x60] sm:$0xff]
    %v426 = vld [vmem:[#allocation7 + $0x68] sm:$0xff]
    %v427 = vld [vmem:[#allocation7 + $0x70] sm:$0xff]
    %v428 = vld [vmem:[#allocation7 + $0x78] sm:$0xff]
    %v429 = vld [vmem:[#allocation7 + $0x80] sm:$0xff]
    %v430 = vld [vmem:[#allocation7 + $0x88] sm:$0xff]
    %v431 = vld [vmem:[#allocation7 + $0x90] sm:$0xff]
    %v432 = vld [vmem:[#allocation7 + $0x98] sm:$0xff]
    %v433 = vld [vmem:[#allocation7 + $0xa0] sm:$0xff]
    %v434 = vld [vmem:[#allocation7 + $0xa8] sm:$0xff]
    %v435 = vld [vmem:[#allocation7 + $0xb0] sm:$0xff]
    %v436 = vld [vmem:[#allocation7 + $0xb8] sm:$0xff]
    %v437 = vld [vmem:[#allocation7 + $0xc0] sm:$0xff]
    %v438 = vld [vmem:[#allocation7 + $0xc8] sm:$0xff]
    %v439 = vld [vmem:[#allocation7 + $0xd0] sm:$0xff]
    %v440 = vld [vmem:[#allocation7 + $0xd8] sm:$0xff]
    %v441 = vld [vmem:[#allocation7 + $0xe0] sm:$0xff]
    %v442 = vld [vmem:[#allocation7 + $0xe8] sm:$0xff]
    %v443 = vld [vmem:[#allocation7 + $0xf0] sm:$0xff]
    %v444 = vld [vmem:[#allocation7 + $0xf8] sm:$0xff]
    %v477 = vunpack.c.l.b16 %v413
    %v478 = vunpack.c.h.b16 %v413
    %v479 = vunpack.c.l.b16 %v414
    %v480 = vunpack.c.h.b16 %v414
    %v481 = vunpack.c.l.b16 %v415
    %v482 = vunpack.c.h.b16 %v415
    %v483 = vunpack.c.l.b16 %v416
    %v484 = vunpack.c.h.b16 %v416
    %v485 = vunpack.c.l.b16 %v417
    %v486 = vunpack.c.h.b16 %v417
    %v487 = vunpack.c.l.b16 %v418
    %v488 = vunpack.c.h.b16 %v418
    %v489 = vunpack.c.l.b16 %v419
    %v490 = vunpack.c.h.b16 %v419
    %v491 = vunpack.c.l.b16 %v420
    %v492 = vunpack.c.h.b16 %v420
    %v493 = vunpack.c.l.b16 %v421
    %v494 = vunpack.c.h.b16 %v421
    %v495 = vunpack.c.l.b16 %v422
    %v496 = vunpack.c.h.b16 %v422
    %v497 = vunpack.c.l.b16 %v423
    %v498 = vunpack.c.h.b16 %v423
    %v499 = vunpack.c.l.b16 %v424
    %v500 = vunpack.c.h.b16 %v424
    %v501 = vunpack.c.l.b16 %v425
    %v502 = vunpack.c.h.b16 %v425
    %v503 = vunpack.c.l.b16 %v426
    %v504 = vunpack.c.h.b16 %v426
    %v505 = vunpack.c.l.b16 %v427
    %v506 = vunpack.c.h.b16 %v427
    %v507 = vunpack.c.l.b16 %v428
    %v508 = vunpack.c.h.b16 %v428
    %v509 = vunpack.c.l.b16 %v429
    %v510 = vunpack.c.h.b16 %v429
    %v511 = vunpack.c.l.b16 %v430
    %v512 = vunpack.c.h.b16 %v430
    %v513 = vunpack.c.l.b16 %v431
    %v514 = vunpack.c.h.b16 %v431
    %v515 = vunpack.c.l.b16 %v432
    %v516 = vunpack.c.h.b16 %v432
    %v517 = vunpack.c.l.b16 %v433
    %v518 = vunpack.c.h.b16 %v433
    %v519 = vunpack.c.l.b16 %v434
    %v520 = vunpack.c.h.b16 %v434
    %v521 = vunpack.c.l.b16 %v435
    %v522 = vunpack.c.h.b16 %v435
    %v523 = vunpack.c.l.b16 %v436
    %v524 = vunpack.c.h.b16 %v436
    %v525 = vunpack.c.l.b16 %v437
    %v526 = vunpack.c.h.b16 %v437
    %v527 = vunpack.c.l.b16 %v438
    %v528 = vunpack.c.h.b16 %v438
    %v529 = vunpack.c.l.b16 %v439
    %v530 = vunpack.c.h.b16 %v439
    %v531 = vunpack.c.l.b16 %v440
    %v532 = vunpack.c.h.b16 %v440
    %v533 = vunpack.c.l.b16 %v441
    %v534 = vunpack.c.h.b16 %v441
    %v535 = vunpack.c.l.b16 %v442
    %v536 = vunpack.c.h.b16 %v442
    %v537 = vunpack.c.l.b16 %v443
    %v538 = vunpack.c.h.b16 %v443
    %v539 = vunpack.c.l.b16 %v444
    %v540 = vunpack.c.h.b16 %v444
    %v541 = vpack.c.b16 %v481, %v477
    %v542 = vpack.c.b16 %v482, %v478
    %v543 = vpack.c.b16 %v483, %v479
    %v544 = vpack.c.b16 %v484, %v480
    %v545 = vpack.c.b16 %v489, %v485
    %v546 = vpack.c.b16 %v490, %v486
    %v547 = vpack.c.b16 %v491, %v487
    %v548 = vpack.c.b16 %v492, %v488
    %v549 = vpack.c.b16 %v497, %v493
    %v550 = vpack.c.b16 %v498, %v494
    %v551 = vpack.c.b16 %v499, %v495
    %v552 = vpack.c.b16 %v500, %v496
    %v553 = vpack.c.b16 %v505, %v501
    %v554 = vpack.c.b16 %v506, %v502
    %v555 = vpack.c.b16 %v507, %v503
    %v556 = vpack.c.b16 %v508, %v504
    %v557 = vpack.c.b16 %v513, %v509
    %v558 = vpack.c.b16 %v514, %v510
    %v559 = vpack.c.b16 %v515, %v511
    %v560 = vpack.c.b16 %v516, %v512
    %v561 = vpack.c.b16 %v521, %v517
    %v562 = vpack.c.b16 %v522, %v518
    %v563 = vpack.c.b16 %v523, %v519
    %v564 = vpack.c.b16 %v524, %v520
    %v565 = vpack.c.b16 %v529, %v525
    %v566 = vpack.c.b16 %v530, %v526
    %v567 = vpack.c.b16 %v531, %v527
    %v568 = vpack.c.b16 %v532, %v528
    %v569 = vpack.c.b16 %v537, %v533
    %v570 = vpack.c.b16 %v538, %v534
    %v571 = vpack.c.b16 %v539, %v535
    %v572 = vpack.c.b16 %v540, %v536
    %605 = vmatprep.subr.bf16.mxu0 %v570
    %606 = vmatpush1.bf16.msra.mxu0 %v569
    %607 = vmatprep.subr.bf16.mxu0 %v566
    %608 = vmatpush1.bf16.msra.mxu0 %v565
    %609 = vmatprep.subr.bf16.mxu0 %v562
    %610 = vmatpush1.bf16.msra.mxu0 %v561
    %611 = vmatprep.subr.bf16.mxu0 %v558
    %612 = vmatpush1.bf16.msra.mxu0 %v557
    %613 = vmatprep.subr.bf16.mxu0 %v554
    %614 = vmatpush1.bf16.msra.mxu0 %v553
    %615 = vmatprep.subr.bf16.mxu0 %v550
    %616 = vmatpush1.bf16.msra.mxu0 %v549
    %617 = vmatprep.subr.bf16.mxu0 %v546
    %618 = vmatpush1.bf16.msra.mxu0 %v545
    %619 = vmatprep.subr.bf16.mxu0 %v542
    %620 = vmatpush1.bf16.msra.mxu0 %v541
    %621 = vmatprep.subr.bf16.mxu0 0
    %622 = vmatpush2.bf16.msra.mxu0 0
    %623 = vmatprep.subr.bf16.mxu0 0
    %624 = vmatpush2.bf16.msra.mxu0 0
    %625 = vmatprep.subr.bf16.mxu0 0
    %626 = vmatpush2.bf16.msra.mxu0 0
    %627 = vmatprep.subr.bf16.mxu0 0
    %628 = vmatpush2.bf16.msra.mxu0 0
    %629 = vmatprep.subr.bf16.mxu0 0
    %630 = vmatpush2.bf16.msra.mxu0 0
    %631 = vmatprep.subr.bf16.mxu0 0
    %632 = vmatpush2.bf16.msra.mxu0 0
    %633 = vmatprep.subr.bf16.mxu0 0
    %634 = vmatpush2.bf16.msra.mxu0 0
    %635 = vmatprep.subr.bf16.mxu0 0
    %636 = vmatpush2.bf16.msra.mxu0 0
    %637 = vmatprep.mubr.bf16.mxu0 0
    %638 = vmatmul.mubr.bf16.gmra.mxu0 %v412
    %v639 = vpop.f32.mrf.mxu0
    %v640 = vadd.f32 0.0, %v639
    %v641 = vpop.f32.mrf.mxu0
    %v642 = vadd.f32 0.0, %v641
    %v643 = vpop.f32.mrf.mxu0
    %v644 = vpop.f32.mrf.mxu0
    %645 = vdwg.mxu0
    %646 = vmatprep.subr.bf16.mxu0 %v572
    %647 = vmatpush1.bf16.msra.mxu0 %v571
    %648 = vmatprep.subr.bf16.mxu0 %v568
    %649 = vmatpush1.bf16.msra.mxu0 %v567
    %650 = vmatprep.subr.bf16.mxu0 %v564
    %651 = vmatpush1.bf16.msra.mxu0 %v563
    %652 = vmatprep.subr.bf16.mxu0 %v560
    %653 = vmatpush1.bf16.msra.mxu0 %v559
    %654 = vmatprep.subr.bf16.mxu0 %v556
    %655 = vmatpush1.bf16.msra.mxu0 %v555
    %656 = vmatprep.subr.bf16.mxu0 %v552
    %657 = vmatpush1.bf16.msra.mxu0 %v551
    %658 = vmatprep.subr.bf16.mxu0 %v548
    %659 = vmatpush1.bf16.msra.mxu0 %v547
    %660 = vmatprep.subr.bf16.mxu0 %v544
    %661 = vmatpush1.bf16.msra.mxu0 %v543
    %662 = vmatprep.subr.bf16.mxu0 0
    %663 = vmatpush2.bf16.msra.mxu0 0
    %664 = vmatprep.subr.bf16.mxu0 0
    %665 = vmatpush2.bf16.msra.mxu0 0
    %666 = vmatprep.subr.bf16.mxu0 0
    %667 = vmatpush2.bf16.msra.mxu0 0
    %668 = vmatprep.subr.bf16.mxu0 0
    %669 = vmatpush2.bf16.msra.mxu0 0
    %670 = vmatprep.subr.bf16.mxu0 0
    %671 = vmatpush2.bf16.msra.mxu0 0
    %672 = vmatprep.subr.bf16.mxu0 0
    %673 = vmatpush2.bf16.msra.mxu0 0
    %674 = vmatprep.subr.bf16.mxu0 0
    %675 = vmatpush2.bf16.msra.mxu0 0
    %676 = vmatprep.subr.bf16.mxu0 0
    %677 = vmatpush2.bf16.msra.mxu0 0
    %678 = vmatprep.mubr.bf16.mxu0 0
    %679 = vmatmul.mubr.bf16.gmra.mxu0 %v412
    %v680 = vpop.f32.mrf.mxu0
    %v681 = vadd.f32 0.0, %v680
    %v682 = vpop.f32.mrf.mxu0
    %v683 = vadd.f32 0.0, %v682
    %v684 = vpop.f32.mrf.mxu0
    %v685 = vpop.f32.mrf.mxu0
    %686 = vdwg.mxu0
    %v687 = vadd.f32 %v221, %v640
    %v688 = vadd.f32 %v223, %v642
    %v689 = vadd.f32 %v334, %v681
    %v690 = vadd.f32 %v336, %v683
    %v691 = vmul.f32 %v687, 0.5
    %v692 = vtanh.pop %v691
    %v693 = vmul.f32 %v692, 0.5
    %v694 = vadd.f32 %v693, 0.5
    %v695 = vmul.f32 %v688, 0.5
    %v696 = vtanh.pop %v695
    %v697 = vmul.f32 %v696, 0.5
    %v698 = vadd.f32 %v697, 0.5
    %v699 = vtanh.pop %v689
    %v700 = vmul.f32 %v690, 0.5
    %v701 = vtanh.pop %v700
    %v702 = vmul.f32 %v701, 0.5
    %v703 = vadd.f32 %v702, 0.5
    %v704 = vld [vmem:[#allocation3] sm:$0xff]
    %v705 = vmul.f32 %v698, %v704
    %v706 = vmul.f32 %v694, %v699
    %v707 = vadd.f32 %v705, %v706
    %708 = vst [vmem:[#allocation3] sm:$0xff] %v707
    %v709 = vtanh.pop %v707
    %v710 = vmul.f32 %v703, %v709
    %v711 = vpack.c.bf16 %v710, %v710
    %712 = vst [vmem:[#allocation2] sm:$0xf] %v711
    %v713 = vld [vmem:[#allocation2] sm:$0xf]
    %v714 = vld [vmem:[#allocation7] sm:$0xff]
    %v715 = vld [vmem:[#allocation7 + $0x8] sm:$0xff]
    %v716 = vld [vmem:[#allocation7 + $0x10] sm:$0xff]
    %v717 = vld [vmem:[#allocation7 + $0x18] sm:$0xff]
    %v718 = vld [vmem:[#allocation7 + $0x20] sm:$0xff]
    %v719 = vld [vmem:[#allocation7 + $0x28] sm:$0xff]
    %v720 = vld [vmem:[#allocation7 + $0x30] sm:$0xff]
    %v721 = vld [vmem:[#allocation7 + $0x38] sm:$0xff]
    %v722 = vld [vmem:[#allocation7 + $0x40] sm:$0xff]
    %v723 = vld [vmem:[#allocation7 + $0x48] sm:$0xff]
    %v724 = vld [vmem:[#allocation7 + $0x50] sm:$0xff]
    %v725 = vld [vmem:[#allocation7 + $0x58] sm:$0xff]
    %v726 = vld [vmem:[#allocation7 + $0x60] sm:$0xff]
    %v727 = vld [vmem:[#allocation7 + $0x68] sm:$0xff]
    %v728 = vld [vmem:[#allocation7 + $0x70] sm:$0xff]
    %v729 = vld [vmem:[#allocation7 + $0x78] sm:$0xff]
    %v730 = vld [vmem:[#allocation7 + $0x80] sm:$0xff]
    %v731 = vld [vmem:[#allocation7 + $0x88] sm:$0xff]
    %v732 = vld [vmem:[#allocation7 + $0x90] sm:$0xff]
    %v733 = vld [vmem:[#allocation7 + $0x98] sm:$0xff]
    %v734 = vld [vmem:[#allocation7 + $0xa0] sm:$0xff]
    %v735 = vld [vmem:[#allocation7 + $0xa8] sm:$0xff]
    %v736 = vld [vmem:[#allocation7 + $0xb0] sm:$0xff]
    %v737 = vld [vmem:[#allocation7 + $0xb8] sm:$0xff]
    %v738 = vld [vmem:[#allocation7 + $0xc0] sm:$0xff]
    %v739 = vld [vmem:[#allocation7 + $0xc8] sm:$0xff]
    %v740 = vld [vmem:[#allocation7 + $0xd0] sm:$0xff]
    %v741 = vld [vmem:[#allocation7 + $0xd8] sm:$0xff]
    %v742 = vld [vmem:[#allocation7 + $0xe0] sm:$0xff]
    %v743 = vld [vmem:[#allocation7 + $0xe8] sm:$0xff]
    %v744 = vld [vmem:[#allocation7 + $0xf0] sm:$0xff]
    %v745 = vld [vmem:[#allocation7 + $0xf8] sm:$0xff]
    %v778 = vunpack.c.l.b16 %v714
    %v779 = vunpack.c.h.b16 %v714
    %v780 = vunpack.c.l.b16 %v715
    %v781 = vunpack.c.h.b16 %v715
    %v782 = vunpack.c.l.b16 %v716
    %v783 = vunpack.c.h.b16 %v716
    %v784 = vunpack.c.l.b16 %v717
    %v785 = vunpack.c.h.b16 %v717
    %v786 = vunpack.c.l.b16 %v718
    %v787 = vunpack.c.h.b16 %v718
    %v788 = vunpack.c.l.b16 %v719
    %v789 = vunpack.c.h.b16 %v719
    %v790 = vunpack.c.l.b16 %v720
    %v791 = vunpack.c.h.b16 %v720
    %v792 = vunpack.c.l.b16 %v721
    %v793 = vunpack.c.h.b16 %v721
    %v794 = vunpack.c.l.b16 %v722
    %v795 = vunpack.c.h.b16 %v722
    %v796 = vunpack.c.l.b16 %v723
    %v797 = vunpack.c.h.b16 %v723
    %v798 = vunpack.c.l.b16 %v724
    %v799 = vunpack.c.h.b16 %v724
    %v800 = vunpack.c.l.b16 %v725
    %v801 = vunpack.c.h.b16 %v725
    %v802 = vunpack.c.l.b16 %v726
    %v803 = vunpack.c.h.b16 %v726
    %v804 = vunpack.c.l.b16 %v727
    %v805 = vunpack.c.h.b16 %v727
    %v806 = vunpack.c.l.b16 %v728
    %v807 = vunpack.c.h.b16 %v728
    %v808 = vunpack.c.l.b16 %v729
    %v809 = vunpack.c.h.b16 %v729
    %v810 = vunpack.c.l.b16 %v730
    %v811 = vunpack.c.h.b16 %v730
    %v812 = vunpack.c.l.b16 %v731
    %v813 = vunpack.c.h.b16 %v731
    %v814 = vunpack.c.l.b16 %v732
    %v815 = vunpack.c.h.b16 %v732
    %v816 = vunpack.c.l.b16 %v733
    %v817 = vunpack.c.h.b16 %v733
    %v818 = vunpack.c.l.b16 %v734
    %v819 = vunpack.c.h.b16 %v734
    %v820 = vunpack.c.l.b16 %v735
    %v821 = vunpack.c.h.b16 %v735
    %v822 = vunpack.c.l.b16 %v736
    %v823 = vunpack.c.h.b16 %v736
    %v824 = vunpack.c.l.b16 %v737
    %v825 = vunpack.c.h.b16 %v737
    %v826 = vunpack.c.l.b16 %v738
    %v827 = vunpack.c.h.b16 %v738
    %v828 = vunpack.c.l.b16 %v739
    %v829 = vunpack.c.h.b16 %v739
    %v830 = vunpack.c.l.b16 %v740
    %v831 = vunpack.c.h.b16 %v740
    %v832 = vunpack.c.l.b16 %v741
    %v833 = vunpack.c.h.b16 %v741
    %v834 = vunpack.c.l.b16 %v742
    %v835 = vunpack.c.h.b16 %v742
    %v836 = vunpack.c.l.b16 %v743
    %v837 = vunpack.c.h.b16 %v743
    %v838 = vunpack.c.l.b16 %v744
    %v839 = vunpack.c.h.b16 %v744
    %v840 = vunpack.c.l.b16 %v745
    %v841 = vunpack.c.h.b16 %v745
    %v842 = vpack.c.b16 %v782, %v778
    %v843 = vpack.c.b16 %v783, %v779
    %v844 = vpack.c.b16 %v784, %v780
    %v845 = vpack.c.b16 %v785, %v781
    %v846 = vpack.c.b16 %v790, %v786
    %v847 = vpack.c.b16 %v791, %v787
    %v848 = vpack.c.b16 %v792, %v788
    %v849 = vpack.c.b16 %v793, %v789
    %v850 = vpack.c.b16 %v798, %v794
    %v851 = vpack.c.b16 %v799, %v795
    %v852 = vpack.c.b16 %v800, %v796
    %v853 = vpack.c.b16 %v801, %v797
    %v854 = vpack.c.b16 %v806, %v802
    %v855 = vpack.c.b16 %v807, %v803
    %v856 = vpack.c.b16 %v808, %v804
    %v857 = vpack.c.b16 %v809, %v805
    %v858 = vpack.c.b16 %v814, %v810
    %v859 = vpack.c.b16 %v815, %v811
    %v860 = vpack.c.b16 %v816, %v812
    %v861 = vpack.c.b16 %v817, %v813
    %v862 = vpack.c.b16 %v822, %v818
    %v863 = vpack.c.b16 %v823, %v819
    %v864 = vpack.c.b16 %v824, %v820
    %v865 = vpack.c.b16 %v825, %v821
    %v866 = vpack.c.b16 %v830, %v826
    %v867 = vpack.c.b16 %v831, %v827
    %v868 = vpack.c.b16 %v832, %v828
    %v869 = vpack.c.b16 %v833, %v829
    %v870 = vpack.c.b16 %v838, %v834
    %v871 = vpack.c.b16 %v839, %v835
    %v872 = vpack.c.b16 %v840, %v836
    %v873 = vpack.c.b16 %v841, %v837
    %906 = vmatprep.subr.bf16.mxu0 %v871
    %907 = vmatpush1.bf16.msra.mxu0 %v870
    %908 = vmatprep.subr.bf16.mxu0 %v867
    %909 = vmatpush1.bf16.msra.mxu0 %v866
    %910 = vmatprep.subr.bf16.mxu0 %v863
    %911 = vmatpush1.bf16.msra.mxu0 %v862
    %912 = vmatprep.subr.bf16.mxu0 %v859
    %913 = vmatpush1.bf16.msra.mxu0 %v858
    %914 = vmatprep.subr.bf16.mxu0 %v855
    %915 = vmatpush1.bf16.msra.mxu0 %v854
    %916 = vmatprep.subr.bf16.mxu0 %v851
    %917 = vmatpush1.bf16.msra.mxu0 %v850
    %918 = vmatprep.subr.bf16.mxu0 %v847
    %919 = vmatpush1.bf16.msra.mxu0 %v846
    %920 = vmatprep.subr.bf16.mxu0 %v843
    %921 = vmatpush1.bf16.msra.mxu0 %v842
    %922 = vmatprep.subr.bf16.mxu0 0
    %923 = vmatpush2.bf16.msra.mxu0 0
    %924 = vmatprep.subr.bf16.mxu0 0
    %925 = vmatpush2.bf16.msra.mxu0 0
    %926 = vmatprep.subr.bf16.mxu0 0
    %927 = vmatpush2.bf16.msra.mxu0 0
    %928 = vmatprep.subr.bf16.mxu0 0
    %929 = vmatpush2.bf16.msra.mxu0 0
    %930 = vmatprep.subr.bf16.mxu0 0
    %931 = vmatpush2.bf16.msra.mxu0 0
    %932 = vmatprep.subr.bf16.mxu0 0
    %933 = vmatpush2.bf16.msra.mxu0 0
    %934 = vmatprep.subr.bf16.mxu0 0
    %935 = vmatpush2.bf16.msra.mxu0 0
    %936 = vmatprep.subr.bf16.mxu0 0
    %937 = vmatpush2.bf16.msra.mxu0 0
    %938 = vmatprep.mubr.bf16.mxu0 0
    %939 = vmatmul.mubr.bf16.gmra.mxu0 %v713
    %v940 = vpop.f32.mrf.mxu0
    %v941 = vadd.f32 0.0, %v940
    %v942 = vpop.f32.mrf.mxu0
    %v943 = vadd.f32 0.0, %v942
    %v944 = vpop.f32.mrf.mxu0
    %v945 = vpop.f32.mrf.mxu0
    %946 = vdwg.mxu0
    %947 = vmatprep.subr.bf16.mxu0 %v873
    %948 = vmatpush1.bf16.msra.mxu0 %v872
    %949 = vmatprep.subr.bf16.mxu0 %v869
    %950 = vmatpush1.bf16.msra.mxu0 %v868
    %951 = vmatprep.subr.bf16.mxu0 %v865
    %952 = vmatpush1.bf16.msra.mxu0 %v864
    %953 = vmatprep.subr.bf16.mxu0 %v861
    %954 = vmatpush1.bf16.msra.mxu0 %v860
    %955 = vmatprep.subr.bf16.mxu0 %v857
    %956 = vmatpush1.bf16.msra.mxu0 %v856
    %957 = vmatprep.subr.bf16.mxu0 %v853
    %958 = vmatpush1.bf16.msra.mxu0 %v852
    %959 = vmatprep.subr.bf16.mxu0 %v849
    %960 = vmatpush1.bf16.msra.mxu0 %v848
    %961 = vmatprep.subr.bf16.mxu0 %v845
    %962 = vmatpush1.bf16.msra.mxu0 %v844
    %963 = vmatprep.subr.bf16.mxu0 0
    %964 = vmatpush2.bf16.msra.mxu0 0
    %965 = vmatprep.subr.bf16.mxu0 0
    %966 = vmatpush2.bf16.msra.mxu0 0
    %967 = vmatprep.subr.bf16.mxu0 0
    %968 = vmatpush2.bf16.msra.mxu0 0
    %969 = vmatprep.subr.bf16.mxu0 0
    %970 = vmatpush2.bf16.msra.mxu0 0
    %971 = vmatprep.subr.bf16.mxu0 0
    %972 = vmatpush2.bf16.msra.mxu0 0
    %973 = vmatprep.subr.bf16.mxu0 0
    %974 = vmatpush2.bf16.msra.mxu0 0
    %975 = vmatprep.subr.bf16.mxu0 0
    %976 = vmatpush2.bf16.msra.mxu0 0
    %977 = vmatprep.subr.bf16.mxu0 0
    %978 = vmatpush2.bf16.msra.mxu0 0
    %979 = vmatprep.mubr.bf16.mxu0 0
    %980 = vmatmul.mubr.bf16.gmra.mxu0 %v713
    %v981 = vpop.f32.mrf.mxu0
    %v982 = vadd.f32 0.0, %v981
    %v983 = vpop.f32.mrf.mxu0
    %v984 = vadd.f32 0.0, %v983
    %v985 = vpop.f32.mrf.mxu0
    %v986 = vpop.f32.mrf.mxu0
    %987 = vdwg.mxu0
    %v988 = vadd.f32 %v225, %v941
    %v989 = vadd.f32 %v227, %v943
    %v990 = vadd.f32 %v338, %v982
    %v991 = vadd.f32 %v340, %v984
    %v992 = vmul.f32 %v988, 0.5
    %v993 = vtanh.pop %v992
    %v994 = vmul.f32 %v993, 0.5
    %v995 = vadd.f32 %v994, 0.5
    %v996 = vmul.f32 %v989, 0.5
    %v997 = vtanh.pop %v996
    %v998 = vmul.f32 %v997, 0.5
    %v999 = vadd.f32 %v998, 0.5
    %v1000 = vtanh.pop %v990
    %v1001 = vmul.f32 %v991, 0.5
    %v1002 = vtanh.pop %v1001
    %v1003 = vmul.f32 %v1002, 0.5
    %v1004 = vadd.f32 %v1003, 0.5
    %v1005 = vld [vmem:[#allocation3] sm:$0xff]
    %v1006 = vmul.f32 %v999, %v1005
    %v1007 = vmul.f32 %v995, %v1000
    %v1008 = vadd.f32 %v1006, %v1007
    %1009 = vst [vmem:[#allocation3] sm:$0xff] %v1008
    %v1010 = vtanh.pop %v1008
    %v1011 = vmul.f32 %v1004, %v1010
    %v1012 = vpack.c.bf16 %v1011, %v1011
    %1013 = vst [vmem:[#allocation2] sm:$0xf] %v1012
    %v1014 = vld [vmem:[#allocation2] sm:$0xf]
    %v1015 = vld [vmem:[#allocation7] sm:$0xff]
    %v1016 = vld [vmem:[#allocation7 + $0x8] sm:$0xff]
    %v1017 = vld [vmem:[#allocation7 + $0x10] sm:$0xff]
    %v1018 = vld [vmem:[#allocation7 + $0x18] sm:$0xff]
    %v1019 = vld [vmem:[#allocation7 + $0x20] sm:$0xff]
    %v1020 = vld [vmem:[#allocation7 + $0x28] sm:$0xff]
    %v1021 = vld [vmem:[#allocation7 + $0x30] sm:$0xff]
    %v1022 = vld [vmem:[#allocation7 + $0x38] sm:$0xff]
    %v1023 = vld [vmem:[#allocation7 + $0x40] sm:$0xff]
    %v1024 = vld [vmem:[#allocation7 + $0x48] sm:$0xff]
    %v1025 = vld [vmem:[#allocation7 + $0x50] sm:$0xff]
    %v1026 = vld [vmem:[#allocation7 + $0x58] sm:$0xff]
    %v1027 = vld [vmem:[#allocation7 + $0x60] sm:$0xff]
    %v1028 = vld [vmem:[#allocation7 + $0x68] sm:$0xff]
    %v1029 = vld [vmem:[#allocation7 + $0x70] sm:$0xff]
    %v1030 = vld [vmem:[#allocation7 + $0x78] sm:$0xff]
    %v1031 = vld [vmem:[#allocation7 + $0x80] sm:$0xff]
    %v1032 = vld [vmem:[#allocation7 + $0x88] sm:$0xff]
    %v1033 = vld [vmem:[#allocation7 + $0x90] sm:$0xff]
    %v1034 = vld [vmem:[#allocation7 + $0x98] sm:$0xff]
    %v1035 = vld [vmem:[#allocation7 + $0xa0] sm:$0xff]
    %v1036 = vld [vmem:[#allocation7 + $0xa8] sm:$0xff]
    %v1037 = vld [vmem:[#allocation7 + $0xb0] sm:$0xff]
    %v1038 = vld [vmem:[#allocation7 + $0xb8] sm:$0xff]
    %v1039 = vld [vmem:[#allocation7 + $0xc0] sm:$0xff]
    %v1040 = vld [vmem:[#allocation7 + $0xc8] sm:$0xff]
    %v1041 = vld [vmem:[#allocation7 + $0xd0] sm:$0xff]
    %v1042 = vld [vmem:[#allocation7 + $0xd8] sm:$0xff]
    %v1043 = vld [vmem:[#allocation7 + $0xe0] sm:$0xff]
    %v1044 = vld [vmem:[#allocation7 + $0xe8] sm:$0xff]
    %v1045 = vld [vmem:[#allocation7 + $0xf0] sm:$0xff]
    %v1046 = vld [vmem:[#allocation7 + $0xf8] sm:$0xff]
    %v1079 = vunpack.c.l.b16 %v1015
    %v1080 = vunpack.c.h.b16 %v1015
    %v1081 = vunpack.c.l.b16 %v1016
    %v1082 = vunpack.c.h.b16 %v1016
    %v1083 = vunpack.c.l.b16 %v1017
    %v1084 = vunpack.c.h.b16 %v1017
    %v1085 = vunpack.c.l.b16 %v1018
    %v1086 = vunpack.c.h.b16 %v1018
    %v1087 = vunpack.c.l.b16 %v1019
    %v1088 = vunpack.c.h.b16 %v1019
    %v1089 = vunpack.c.l.b16 %v1020
    %v1090 = vunpack.c.h.b16 %v1020
    %v1091 = vunpack.c.l.b16 %v1021
    %v1092 = vunpack.c.h.b16 %v1021
    %v1093 = vunpack.c.l.b16 %v1022
    %v1094 = vunpack.c.h.b16 %v1022
    %v1095 = vunpack.c.l.b16 %v1023
    %v1096 = vunpack.c.h.b16 %v1023
    %v1097 = vunpack.c.l.b16 %v1024
    %v1098 = vunpack.c.h.b16 %v1024
    %v1099 = vunpack.c.l.b16 %v1025
    %v1100 = vunpack.c.h.b16 %v1025
    %v1101 = vunpack.c.l.b16 %v1026
    %v1102 = vunpack.c.h.b16 %v1026
    %v1103 = vunpack.c.l.b16 %v1027
    %v1104 = vunpack.c.h.b16 %v1027
    %v1105 = vunpack.c.l.b16 %v1028
    %v1106 = vunpack.c.h.b16 %v1028
    %v1107 = vunpack.c.l.b16 %v1029
    %v1108 = vunpack.c.h.b16 %v1029
    %v1109 = vunpack.c.l.b16 %v1030
    %v1110 = vunpack.c.h.b16 %v1030
    %v1111 = vunpack.c.l.b16 %v1031
    %v1112 = vunpack.c.h.b16 %v1031
    %v1113 = vunpack.c.l.b16 %v1032
    %v1114 = vunpack.c.h.b16 %v1032
    %v1115 = vunpack.c.l.b16 %v1033
    %v1116 = vunpack.c.h.b16 %v1033
    %v1117 = vunpack.c.l.b16 %v1034
    %v1118 = vunpack.c.h.b16 %v1034
    %v1119 = vunpack.c.l.b16 %v1035
    %v1120 = vunpack.c.h.b16 %v1035
    %v1121 = vunpack.c.l.b16 %v1036
    %v1122 = vunpack.c.h.b16 %v1036
    %v1123 = vunpack.c.l.b16 %v1037
    %v1124 = vunpack.c.h.b16 %v1037
    %v1125 = vunpack.c.l.b16 %v1038
    %v1126 = vunpack.c.h.b16 %v1038
    %v1127 = vunpack.c.l.b16 %v1039
    %v1128 = vunpack.c.h.b16 %v1039
    %v1129 = vunpack.c.l.b16 %v1040
    %v1130 = vunpack.c.h.b16 %v1040
    %v1131 = vunpack.c.l.b16 %v1041
    %v1132 = vunpack.c.h.b16 %v1041
    %v1133 = vunpack.c.l.b16 %v1042
    %v1134 = vunpack.c.h.b16 %v1042
    %v1135 = vunpack.c.l.b16 %v1043
    %v1136 = vunpack.c.h.b16 %v1043
    %v1137 = vunpack.c.l.b16 %v1044
    %v1138 = vunpack.c.h.b16 %v1044
    %v1139 = vunpack.c.l.b16 %v1045
    %v1140 = vunpack.c.h.b16 %v1045
    %v1141 = vunpack.c.l.b16 %v1046
    %v1142 = vunpack.c.h.b16 %v1046
    %v1143 = vpack.c.b16 %v1083, %v1079
    %v1144 = vpack.c.b16 %v1084, %v1080
    %v1145 = vpack.c.b16 %v1085, %v1081
    %v1146 = vpack.c.b16 %v1086, %v1082
    %v1147 = vpack.c.b16 %v1091, %v1087
    %v1148 = vpack.c.b16 %v1092, %v1088
    %v1149 = vpack.c.b16 %v1093, %v1089
    %v1150 = vpack.c.b16 %v1094, %v1090
    %v1151 = vpack.c.b16 %v1099, %v1095
    %v1152 = vpack.c.b16 %v1100, %v1096
    %v1153 = vpack.c.b16 %v1101, %v1097
    %v1154 = vpack.c.b16 %v1102, %v1098
    %v1155 = vpack.c.b16 %v1107, %v1103
    %v1156 = vpack.c.b16 %v1108, %v1104
    %v1157 = vpack.c.b16 %v1109, %v1105
    %v1158 = vpack.c.b16 %v1110, %v1106
    %v1159 = vpack.c.b16 %v1115, %v1111
    %v1160 = vpack.c.b16 %v1116, %v1112
    %v1161 = vpack.c.b16 %v1117, %v1113
    %v1162 = vpack.c.b16 %v1118, %v1114
    %v1163 = vpack.c.b16 %v1123, %v1119
    %v1164 = vpack.c.b16 %v1124, %v1120
    %v1165 = vpack.c.b16 %v1125, %v1121
    %v1166 = vpack.c.b16 %v1126, %v1122
    %v1167 = vpack.c.b16 %v1131, %v1127
    %v1168 = vpack.c.b16 %v1132, %v1128
    %v1169 = vpack.c.b16 %v1133, %v1129
    %v1170 = vpack.c.b16 %v1134, %v1130
    %v1171 = vpack.c.b16 %v1139, %v1135
    %v1172 = vpack.c.b16 %v1140, %v1136
    %v1173 = vpack.c.b16 %v1141, %v1137
    %v1174 = vpack.c.b16 %v1142, %v1138
    %1207 = vmatprep.subr.bf16.mxu0 %v1172
    %1208 = vmatpush1.bf16.msra.mxu0 %v1171
    %1209 = vmatprep.subr.bf16.mxu0 %v1168
    %1210 = vmatpush1.bf16.msra.mxu0 %v1167
    %1211 = vmatprep.subr.bf16.mxu0 %v1164
    %1212 = vmatpush1.bf16.msra.mxu0 %v1163
    %1213 = vmatprep.subr.bf16.mxu0 %v1160
    %1214 = vmatpush1.bf16.msra.mxu0 %v1159
    %1215 = vmatprep.subr.bf16.mxu0 %v1156
    %1216 = vmatpush1.bf16.msra.mxu0 %v1155
    %1217 = vmatprep.subr.bf16.mxu0 %v1152
    %1218 = vmatpush1.bf16.msra.mxu0 %v1151
    %1219 = vmatprep.subr.bf16.mxu0 %v1148
    %1220 = vmatpush1.bf16.msra.mxu0 %v1147
    %1221 = vmatprep.subr.bf16.mxu0 %v1144
    %1222 = vmatpush1.bf16.msra.mxu0 %v1143
    %1223 = vmatprep.subr.bf16.mxu0 0
    %1224 = vmatpush2.bf16.msra.mxu0 0
    %1225 = vmatprep.subr.bf16.mxu0 0
    %1226 = vmatpush2.bf16.msra.mxu0 0
    %1227 = vmatprep.subr.bf16.mxu0 0
    %1228 = vmatpush2.bf16.msra.mxu0 0
    %1229 = vmatprep.subr.bf16.mxu0 0
    %1230 = vmatpush2.bf16.msra.mxu0 0
    %1231 = vmatprep.subr.bf16.mxu0 0
    %1232 = vmatpush2.bf16.msra.mxu0 0
    %1233 = vmatprep.subr.bf16.mxu0 0
    %1234 = vmatpush2.bf16.msra.mxu0 0
    %1235 = vmatprep.subr.bf16.mxu0 0
    %1236 = vmatpush2.bf16.msra.mxu0 0
    %1237 = vmatprep.subr.bf16.mxu0 0
    %1238 = vmatpush2.bf16.msra.mxu0 0
    %1239 = vmatprep.mubr.bf16.mxu0 0
    %1240 = vmatmul.mubr.bf16.gmra.mxu0 %v1014
    %v1241 = vpop.f32.mrf.mxu0
    %v1242 = vadd.f32 0.0, %v1241
    %v1243 = vpop.f32.mrf.mxu0
    %v1244 = vadd.f32 0.0, %v1243
    %v1245 = vpop.f32.mrf.mxu0
    %v1246 = vpop.f32.mrf.mxu0
    %1247 = vdwg.mxu0
    %1248 = vmatprep.subr.bf16.mxu0 %v1174
    %1249 = vmatpush1.bf16.msra.mxu0 %v1173
    %1250 = vmatprep.subr.bf16.mxu0 %v1170
    %1251 = vmatpush1.bf16.msra.mxu0 %v1169
    %1252 = vmatprep.subr.bf16.mxu0 %v1166
    %1253 = vmatpush1.bf16.msra.mxu0 %v1165
    %1254 = vmatprep.subr.bf16.mxu0 %v1162
    %1255 = vmatpush1.bf16.msra.mxu0 %v1161
    %1256 = vmatprep.subr.bf16.mxu0 %v1158
    %1257 = vmatpush1.bf16.msra.mxu0 %v1157
    %1258 = vmatprep.subr.bf16.mxu0 %v1154
    %1259 = vmatpush1.bf16.msra.mxu0 %v1153
    %1260 = vmatprep.subr.bf16.mxu0 %v1150
    %1261 = vmatpush1.bf16.msra.mxu0 %v1149
    %1262 = vmatprep.subr.bf16.mxu0 %v1146
    %1263 = vmatpush1.bf16.msra.mxu0 %v1145
    %1264 = vmatprep.subr.bf16.mxu0 0
    %1265 = vmatpush2.bf16.msra.mxu0 0
    %1266 = vmatprep.subr.bf16.mxu0 0
    %1267 = vmatpush2.bf16.msra.mxu0 0
    %1268 = vmatprep.subr.bf16.mxu0 0
    %1269 = vmatpush2.bf16.msra.mxu0 0
    %1270 = vmatprep.subr.bf16.mxu0 0
    %1271 = vmatpush2.bf16.msra.mxu0 0
    %1272 = vmatprep.subr.bf16.mxu0 0
    %1273 = vmatpush2.bf16.msra.mxu0 0
    %1274 = vmatprep.subr.bf16.mxu0 0
    %1275 = vmatpush2.bf16.msra.mxu0 0
    %1276 = vmatprep.subr.bf16.mxu0 0
    %1277 = vmatpush2.bf16.msra.mxu0 0
    %1278 = vmatprep.subr.bf16.mxu0 0
    %1279 = vmatpush2.bf16.msra.mxu0 0
    %1280 = vmatprep.mubr.bf16.mxu0 0
    %1281 = vmatmul.mubr.bf16.gmra.mxu0 %v1014
    %v1282 = vpop.f32.mrf.mxu0
    %v1283 = vadd.f32 0.0, %v1282
    %v1284 = vpop.f32.mrf.mxu0
    %v1285 = vadd.f32 0.0, %v1284
    %v1286 = vpop.f32.mrf.mxu0
    %v1287 = vpop.f32.mrf.mxu0
    %1288 = vdwg.mxu0
    %v1289 = vadd.f32 %v231, %v1242
    %v1290 = vadd.f32 %v233, %v1244
    %v1291 = vadd.f32 %v344, %v1283
    %v1292 = vadd.f32 %v346, %v1285
    %v1293 = vmul.f32 %v1289, 0.5
    %v1294 = vtanh.pop %v1293
    %v1295 = vmul.f32 %v1294, 0.5
    %v1296 = vadd.f32 %v1295, 0.5
    %v1297 = vmul.f32 %v1290, 0.5
    %v1298 = vtanh.pop %v1297
    %v1299 = vmul.f32 %v1298, 0.5
    %v1300 = vadd.f32 %v1299, 0.5
    %v1301 = vtanh.pop %v1291
    %v1302 = vmul.f32 %v1292, 0.5
    %v1303 = vtanh.pop %v1302
    %v1304 = vmul.f32 %v1303, 0.5
    %v1305 = vadd.f32 %v1304, 0.5
    %v1306 = vld [vmem:[#allocation3] sm:$0xff]
    %v1307 = vmul.f32 %v1300, %v1306
    %v1308 = vmul.f32 %v1296, %v1301
    %v1309 = vadd.f32 %v1307, %v1308
    %1310 = vst [vmem:[#allocation3] sm:$0xff] %v1309
    %v1311 = vtanh.pop %v1309
    %v1312 = vmul.f32 %v1305, %v1311
    %v1313 = vpack.c.bf16 %v1312, %v1312
    %1314 = vst [vmem:[#allocation2] sm:$0xf] %v1313
    %v1315 = vld [vmem:[#allocation2] sm:$0xf]
    %v1316 = vld [vmem:[#allocation7] sm:$0xff]
    %v1317 = vld [vmem:[#allocation7 + $0x8] sm:$0xff]
    %v1318 = vld [vmem:[#allocation7 + $0x10] sm:$0xff]
    %v1319 = vld [vmem:[#allocation7 + $0x18] sm:$0xff]
    %v1320 = vld [vmem:[#allocation7 + $0x20] sm:$0xff]
    %v1321 = vld [vmem:[#allocation7 + $0x28] sm:$0xff]
    %v1322 = vld [vmem:[#allocation7 + $0x30] sm:$0xff]
    %v1323 = vld [vmem:[#allocation7 + $0x38] sm:$0xff]
    %v1324 = vld [vmem:[#allocation7 + $0x40] sm:$0xff]
    %v1325 = vld [vmem:[#allocation7 + $0x48] sm:$0xff]
    %v1326 = vld [vmem:[#allocation7 + $0x50] sm:$0xff]
    %v1327 = vld [vmem:[#allocation7 + $0x58] sm:$0xff]
    %v1328 = vld [vmem:[#allocation7 + $0x60] sm:$0xff]
    %v1329 = vld [vmem:[#allocation7 + $0x68] sm:$0xff]
    %v1330 = vld [vmem:[#allocation7 + $0x70] sm:$0xff]
    %v1331 = vld [vmem:[#allocation7 + $0x78] sm:$0xff]
    %v1332 = vld [vmem:[#allocation7 + $0x80] sm:$0xff]
    %v1333 = vld [vmem:[#allocation7 + $0x88] sm:$0xff]
    %v1334 = vld [vmem:[#allocation7 + $0x90] sm:$0xff]
    %v1335 = vld [vmem:[#allocation7 + $0x98] sm:$0xff]
    %v1336 = vld [vmem:[#allocation7 + $0xa0] sm:$0xff]
    %v1337 = vld [vmem:[#allocation7 + $0xa8] sm:$0xff]
    %v1338 = vld [vmem:[#allocation7 + $0xb0] sm:$0xff]
    %v1339 = vld [vmem:[#allocation7 + $0xb8] sm:$0xff]
    %v1340 = vld [vmem:[#allocation7 + $0xc0] sm:$0xff]
    %v1341 = vld [vmem:[#allocation7 + $0xc8] sm:$0xff]
    %v1342 = vld [vmem:[#allocation7 + $0xd0] sm:$0xff]
    %v1343 = vld [vmem:[#allocation7 + $0xd8] sm:$0xff]
    %v1344 = vld [vmem:[#allocation7 + $0xe0] sm:$0xff]
    %v1345 = vld [vmem:[#allocation7 + $0xe8] sm:$0xff]
    %v1346 = vld [vmem:[#allocation7 + $0xf0] sm:$0xff]
    %v1347 = vld [vmem:[#allocation7 + $0xf8] sm:$0xff]
    %v1380 = vunpack.c.l.b16 %v1316
    %v1381 = vunpack.c.h.b16 %v1316
    %v1382 = vunpack.c.l.b16 %v1317
    %v1383 = vunpack.c.h.b16 %v1317
    %v1384 = vunpack.c.l.b16 %v1318
    %v1385 = vunpack.c.h.b16 %v1318
    %v1386 = vunpack.c.l.b16 %v1319
    %v1387 = vunpack.c.h.b16 %v1319
    %v1388 = vunpack.c.l.b16 %v1320
    %v1389 = vunpack.c.h.b16 %v1320
    %v1390 = vunpack.c.l.b16 %v1321
    %v1391 = vunpack.c.h.b16 %v1321
    %v1392 = vunpack.c.l.b16 %v1322
    %v1393 = vunpack.c.h.b16 %v1322
    %v1394 = vunpack.c.l.b16 %v1323
    %v1395 = vunpack.c.h.b16 %v1323
    %v1396 = vunpack.c.l.b16 %v1324
    %v1397 = vunpack.c.h.b16 %v1324
    %v1398 = vunpack.c.l.b16 %v1325
    %v1399 = vunpack.c.h.b16 %v1325
    %v1400 = vunpack.c.l.b16 %v1326
    %v1401 = vunpack.c.h.b16 %v1326
    %v1402 = vunpack.c.l.b16 %v1327
    %v1403 = vunpack.c.h.b16 %v1327
    %v1404 = vunpack.c.l.b16 %v1328
    %v1405 = vunpack.c.h.b16 %v1328
    %v1406 = vunpack.c.l.b16 %v1329
    %v1407 = vunpack.c.h.b16 %v1329
    %v1408 = vunpack.c.l.b16 %v1330
    %v1409 = vunpack.c.h.b16 %v1330
    %v1410 = vunpack.c.l.b16 %v1331
    %v1411 = vunpack.c.h.b16 %v1331
    %v1412 = vunpack.c.l.b16 %v1332
    %v1413 = vunpack.c.h.b16 %v1332
    %v1414 = vunpack.c.l.b16 %v1333
    %v1415 = vunpack.c.h.b16 %v1333
    %v1416 = vunpack.c.l.b16 %v1334
    %v1417 = vunpack.c.h.b16 %v1334
    %v1418 = vunpack.c.l.b16 %v1335
    %v1419 = vunpack.c.h.b16 %v1335
    %v1420 = vunpack.c.l.b16 %v1336
    %v1421 = vunpack.c.h.b16 %v1336
    %v1422 = vunpack.c.l.b16 %v1337
    %v1423 = vunpack.c.h.b16 %v1337
    %v1424 = vunpack.c.l.b16 %v1338
    %v1425 = vunpack.c.h.b16 %v1338
    %v1426 = vunpack.c.l.b16 %v1339
    %v1427 = vunpack.c.h.b16 %v1339
    %v1428 = vunpack.c.l.b16 %v1340
    %v1429 = vunpack.c.h.b16 %v1340
    %v1430 = vunpack.c.l.b16 %v1341
    %v1431 = vunpack.c.h.b16 %v1341
    %v1432 = vunpack.c.l.b16 %v1342
    %v1433 = vunpack.c.h.b16 %v1342
    %v1434 = vunpack.c.l.b16 %v1343
    %v1435 = vunpack.c.h.b16 %v1343
    %v1436 = vunpack.c.l.b16 %v1344
    %v1437 = vunpack.c.h.b16 %v1344
    %v1438 = vunpack.c.l.b16 %v1345
    %v1439 = vunpack.c.h.b16 %v1345
    %v1440 = vunpack.c.l.b16 %v1346
    %v1441 = vunpack.c.h.b16 %v1346
    %v1442 = vunpack.c.l.b16 %v1347
    %v1443 = vunpack.c.h.b16 %v1347
    %v1444 = vpack.c.b16 %v1384, %v1380
    %v1445 = vpack.c.b16 %v1385, %v1381
    %v1446 = vpack.c.b16 %v1386, %v1382
    %v1447 = vpack.c.b16 %v1387, %v1383
    %v1448 = vpack.c.b16 %v1392, %v1388
    %v1449 = vpack.c.b16 %v1393, %v1389
    %v1450 = vpack.c.b16 %v1394, %v1390
    %v1451 = vpack.c.b16 %v1395, %v1391
    %v1452 = vpack.c.b16 %v1400, %v1396
    %v1453 = vpack.c.b16 %v1401, %v1397
    %v1454 = vpack.c.b16 %v1402, %v1398
    %v1455 = vpack.c.b16 %v1403, %v1399
    %v1456 = vpack.c.b16 %v1408, %v1404
    %v1457 = vpack.c.b16 %v1409, %v1405
    %v1458 = vpack.c.b16 %v1410, %v1406
    %v1459 = vpack.c.b16 %v1411, %v1407
    %v1460 = vpack.c.b16 %v1416, %v1412
    %v1461 = vpack.c.b16 %v1417, %v1413
    %v1462 = vpack.c.b16 %v1418, %v1414
    %v1463 = vpack.c.b16 %v1419, %v1415
    %v1464 = vpack.c.b16 %v1424, %v1420
    %v1465 = vpack.c.b16 %v1425, %v1421
    %v1466 = vpack.c.b16 %v1426, %v1422
    %v1467 = vpack.c.b16 %v1427, %v1423
    %v1468 = vpack.c.b16 %v1432, %v1428
    %v1469 = vpack.c.b16 %v1433, %v1429
    %v1470 = vpack.c.b16 %v1434, %v1430
    %v1471 = vpack.c.b16 %v1435, %v1431
    %v1472 = vpack.c.b16 %v1440, %v1436
    %v1473 = vpack.c.b16 %v1441, %v1437
    %v1474 = vpack.c.b16 %v1442, %v1438
    %v1475 = vpack.c.b16 %v1443, %v1439
    %1508 = vmatprep.subr.bf16.mxu0 %v1473
    %1509 = vmatpush1.bf16.msra.mxu0 %v1472
    %1510 = vmatprep.subr.bf16.mxu0 %v1469
    %1511 = vmatpush1.bf16.msra.mxu0 %v1468
    %1512 = vmatprep.subr.bf16.mxu0 %v1465
    %1513 = vmatpush1.bf16.msra.mxu0 %v1464
    %1514 = vmatprep.subr.bf16.mxu0 %v1461
    %1515 = vmatpush1.bf16.msra.mxu0 %v1460
    %1516 = vmatprep.subr.bf16.mxu0 %v1457
    %1517 = vmatpush1.bf16.msra.mxu0 %v1456
    %1518 = vmatprep.subr.bf16.mxu0 %v1453
    %1519 = vmatpush1.bf16.msra.mxu0 %v1452
    %1520 = vmatprep.subr.bf16.mxu0 %v1449
    %1521 = vmatpush1.bf16.msra.mxu0 %v1448
    %1522 = vmatprep.subr.bf16.mxu0 %v1445
    %1523 = vmatpush1.bf16.msra.mxu0 %v1444
    %1524 = vmatprep.subr.bf16.mxu0 0
    %1525 = vmatpush2.bf16.msra.mxu0 0
    %1526 = vmatprep.subr.bf16.mxu0 0
    %1527 = vmatpush2.bf16.msra.mxu0 0
    %1528 = vmatprep.subr.bf16.mxu0 0
    %1529 = vmatpush2.bf16.msra.mxu0 0
    %1530 = vmatprep.subr.bf16.mxu0 0
    %1531 = vmatpush2.bf16.msra.mxu0 0
    %1532 = vmatprep.subr.bf16.mxu0 0
    %1533 = vmatpush2.bf16.msra.mxu0 0
    %1534 = vmatprep.subr.bf16.mxu0 0
    %1535 = vmatpush2.bf16.msra.mxu0 0
    %1536 = vmatprep.subr.bf16.mxu0 0
    %1537 = vmatpush2.bf16.msra.mxu0 0
    %1538 = vmatprep.subr.bf16.mxu0 0
    %1539 = vmatpush2.bf16.msra.mxu0 0
    %1540 = vmatprep.mubr.bf16.mxu0 0
    %1541 = vmatmul.mubr.bf16.gmra.mxu0 %v1315
    %v1542 = vpop.f32.mrf.mxu0
    %v1543 = vadd.f32 0.0, %v1542
    %v1544 = vpop.f32.mrf.mxu0
    %v1545 = vadd.f32 0.0, %v1544
    %v1546 = vpop.f32.mrf.mxu0
    %v1547 = vpop.f32.mrf.mxu0
    %1548 = vdwg.mxu0
    %1549 = vmatprep.subr.bf16.mxu0 %v1475
    %1550 = vmatpush1.bf16.msra.mxu0 %v1474
    %1551 = vmatprep.subr.bf16.mxu0 %v1471
    %1552 = vmatpush1.bf16.msra.mxu0 %v1470
    %1553 = vmatprep.subr.bf16.mxu0 %v1467
    %1554 = vmatpush1.bf16.msra.mxu0 %v1466
    %1555 = vmatprep.subr.bf16.mxu0 %v1463
    %1556 = vmatpush1.bf16.msra.mxu0 %v1462
    %1557 = vmatprep.subr.bf16.mxu0 %v1459
    %1558 = vmatpush1.bf16.msra.mxu0 %v1458
    %1559 = vmatprep.subr.bf16.mxu0 %v1455
    %1560 = vmatpush1.bf16.msra.mxu0 %v1454
    %1561 = vmatprep.subr.bf16.mxu0 %v1451
    %1562 = vmatpush1.bf16.msra.mxu0 %v1450
    %1563 = vmatprep.subr.bf16.mxu0 %v1447
    %1564 = vmatpush1.bf16.msra.mxu0 %v1446
    %1565 = vmatprep.subr.bf16.mxu0 0
    %1566 = vmatpush2.bf16.msra.mxu0 0
    %1567 = vmatprep.subr.bf16.mxu0 0
    %1568 = vmatpush2.bf16.msra.mxu0 0
    %1569 = vmatprep.subr.bf16.mxu0 0
    %1570 = vmatpush2.bf16.msra.mxu0 0
    %1571 = vmatprep.subr.bf16.mxu0 0
    %1572 = vmatpush2.bf16.msra.mxu0 0
    %1573 = vmatprep.subr.bf16.mxu0 0
    %1574 = vmatpush2.bf16.msra.mxu0 0
    %1575 = vmatprep.subr.bf16.mxu0 0
    %1576 = vmatpush2.bf16.msra.mxu0 0
    %1577 = vmatprep.subr.bf16.mxu0 0
    %1578 = vmatpush2.bf16.msra.mxu0 0
    %1579 = vmatprep.subr.bf16.mxu0 0
    %1580 = vmatpush2.bf16.msra.mxu0 0
    %1581 = vmatprep.mubr.bf16.mxu0 0
    %1582 = vmatmul.mubr.bf16.gmra.mxu0 %v1315
    %v1583 = vpop.f32.mrf.mxu0
    %v1584 = vadd.f32 0.0, %v1583
    %v1585 = vpop.f32.mrf.mxu0
    %v1586 = vadd.f32 0.0, %v1585
    %v1587 = vpop.f32.mrf.mxu0
    %v1588 = vpop.f32.mrf.mxu0
    %1589 = vdwg.mxu0
    %v1590 = vadd.f32 %v235, %v1543
    %v1591 = vadd.f32 %v237, %v1545
    %v1592 = vadd.f32 %v348, %v1584
    %v1593 = vadd.f32 %v350, %v1586
    %v1594 = vmul.f32 %v1590, 0.5
    %v1595 = vtanh.pop %v1594
    %v1596 = vmul.f32 %v1595, 0.5
    %v1597 = vadd.f32 %v1596, 0.5
    %v1598 = vmul.f32 %v1591, 0.5
    %v1599 = vtanh.pop %v1598
    %v1600 = vmul.f32 %v1599, 0.5
    %v1601 = vadd.f32 %v1600, 0.5
    %v1602 = vtanh.pop %v1592
    %v1603 = vmul.f32 %v1593, 0.5
    %v1604 = vtanh.pop %v1603
    %v1605 = vmul.f32 %v1604, 0.5
    %v1606 = vadd.f32 %v1605, 0.5
    %v1607 = vld [vmem:[#allocation3] sm:$0xff]
    %v1608 = vmul.f32 %v1601, %v1607
    %v1609 = vmul.f32 %v1597, %v1602
    %v1610 = vadd.f32 %v1608, %v1609
    %1611 = vst [vmem:[#allocation3] sm:$0xff] %v1610
    %v1612 = vtanh.pop %v1610
    %v1613 = vmul.f32 %v1606, %v1612
    %v1614 = vpack.c.bf16 %v1613, %v1613
    %1615 = vst [vmem:[#allocation2] sm:$0xf] %v1614
    %v1616 = vld [vmem:[#allocation2] sm:$0xf]
    %v1617 = vld [vmem:[#allocation7] sm:$0xff]
    %v1618 = vld [vmem:[#allocation7 + $0x8] sm:$0xff]
    %v1619 = vld [vmem:[#allocation7 + $0x10] sm:$0xff]
    %v1620 = vld [vmem:[#allocation7 + $0x18] sm:$0xff]
    %v1621 = vld [vmem:[#allocation7 + $0x20] sm:$0xff]
    %v1622 = vld [vmem:[#allocation7 + $0x28] sm:$0xff]
    %v1623 = vld [vmem:[#allocation7 + $0x30] sm:$0xff]
    %v1624 = vld [vmem:[#allocation7 + $0x38] sm:$0xff]
    %v1625 = vld [vmem:[#allocation7 + $0x40] sm:$0xff]
    %v1626 = vld [vmem:[#allocation7 + $0x48] sm:$0xff]
    %v1627 = vld [vmem:[#allocation7 + $0x50] sm:$0xff]
    %v1628 = vld [vmem:[#allocation7 + $0x58] sm:$0xff]
    %v1629 = vld [vmem:[#allocation7 + $0x60] sm:$0xff]
    %v1630 = vld [vmem:[#allocation7 + $0x68] sm:$0xff]
    %v1631 = vld [vmem:[#allocation7 + $0x70] sm:$0xff]
    %v1632 = vld [vmem:[#allocation7 + $0x78] sm:$0xff]
    %v1633 = vld [vmem:[#allocation7 + $0x80] sm:$0xff]
    %v1634 = vld [vmem:[#allocation7 + $0x88] sm:$0xff]
    %v1635 = vld [vmem:[#allocation7 + $0x90] sm:$0xff]
    %v1636 = vld [vmem:[#allocation7 + $0x98] sm:$0xff]
    %v1637 = vld [vmem:[#allocation7 + $0xa0] sm:$0xff]
    %v1638 = vld [vmem:[#allocation7 + $0xa8] sm:$0xff]
    %v1639 = vld [vmem:[#allocation7 + $0xb0] sm:$0xff]
    %v1640 = vld [vmem:[#allocation7 + $0xb8] sm:$0xff]
    %v1641 = vld [vmem:[#allocation7 + $0xc0] sm:$0xff]
    %v1642 = vld [vmem:[#allocation7 + $0xc8] sm:$0xff]
    %v1643 = vld [vmem:[#allocation7 + $0xd0] sm:$0xff]
    %v1644 = vld [vmem:[#allocation7 + $0xd8] sm:$0xff]
    %v1645 = vld [vmem:[#allocation7 + $0xe0] sm:$0xff]
    %v1646 = vld [vmem:[#allocation7 + $0xe8] sm:$0xff]
    %v1647 = vld [vmem:[#allocation7 + $0xf0] sm:$0xff]
    %v1648 = vld [vmem:[#allocation7 + $0xf8] sm:$0xff]
    %v1681 = vunpack.c.l.b16 %v1617
    %v1682 = vunpack.c.h.b16 %v1617
    %v1683 = vunpack.c.l.b16 %v1618
    %v1684 = vunpack.c.h.b16 %v1618
    %v1685 = vunpack.c.l.b16 %v1619
    %v1686 = vunpack.c.h.b16 %v1619
    %v1687 = vunpack.c.l.b16 %v1620
    %v1688 = vunpack.c.h.b16 %v1620
    %v1689 = vunpack.c.l.b16 %v1621
    %v1690 = vunpack.c.h.b16 %v1621
    %v1691 = vunpack.c.l.b16 %v1622
    %v1692 = vunpack.c.h.b16 %v1622
    %v1693 = vunpack.c.l.b16 %v1623
    %v1694 = vunpack.c.h.b16 %v1623
    %v1695 = vunpack.c.l.b16 %v1624
    %v1696 = vunpack.c.h.b16 %v1624
    %v1697 = vunpack.c.l.b16 %v1625
    %v1698 = vunpack.c.h.b16 %v1625
    %v1699 = vunpack.c.l.b16 %v1626
    %v1700 = vunpack.c.h.b16 %v1626
    %v1701 = vunpack.c.l.b16 %v1627
    %v1702 = vunpack.c.h.b16 %v1627
    %v1703 = vunpack.c.l.b16 %v1628
    %v1704 = vunpack.c.h.b16 %v1628
    %v1705 = vunpack.c.l.b16 %v1629
    %v1706 = vunpack.c.h.b16 %v1629
    %v1707 = vunpack.c.l.b16 %v1630
    %v1708 = vunpack.c.h.b16 %v1630
    %v1709 = vunpack.c.l.b16 %v1631
    %v1710 = vunpack.c.h.b16 %v1631
    %v1711 = vunpack.c.l.b16 %v1632
    %v1712 = vunpack.c.h.b16 %v1632
    %v1713 = vunpack.c.l.b16 %v1633
    %v1714 = vunpack.c.h.b16 %v1633
    %v1715 = vunpack.c.l.b16 %v1634
    %v1716 = vunpack.c.h.b16 %v1634
    %v1717 = vunpack.c.l.b16 %v1635
    %v1718 = vunpack.c.h.b16 %v1635
    %v1719 = vunpack.c.l.b16 %v1636
    %v1720 = vunpack.c.h.b16 %v1636
    %v1721 = vunpack.c.l.b16 %v1637
    %v1722 = vunpack.c.h.b16 %v1637
    %v1723 = vunpack.c.l.b16 %v1638
    %v1724 = vunpack.c.h.b16 %v1638
    %v1725 = vunpack.c.l.b16 %v1639
    %v1726 = vunpack.c.h.b16 %v1639
    %v1727 = vunpack.c.l.b16 %v1640
    %v1728 = vunpack.c.h.b16 %v1640
    %v1729 = vunpack.c.l.b16 %v1641
    %v1730 = vunpack.c.h.b16 %v1641
    %v1731 = vunpack.c.l.b16 %v1642
    %v1732 = vunpack.c.h.b16 %v1642
    %v1733 = vunpack.c.l.b16 %v1643
    %v1734 = vunpack.c.h.b16 %v1643
    %v1735 = vunpack.c.l.b16 %v1644
    %v1736 = vunpack.c.h.b16 %v1644
    %v1737 = vunpack.c.l.b16 %v1645
    %v1738 = vunpack.c.h.b16 %v1645
    %v1739 = vunpack.c.l.b16 %v1646
    %v1740 = vunpack.c.h.b16 %v1646
    %v1741 = vunpack.c.l.b16 %v1647
    %v1742 = vunpack.c.h.b16 %v1647
    %v1743 = vunpack.c.l.b16 %v1648
    %v1744 = vunpack.c.h.b16 %v1648
    %v1745 = vpack.c.b16 %v1685, %v1681
    %v1746 = vpack.c.b16 %v1686, %v1682
    %v1747 = vpack.c.b16 %v1687, %v1683
    %v1748 = vpack.c.b16 %v1688, %v1684
    %v1749 = vpack.c.b16 %v1693, %v1689
    %v1750 = vpack.c.b16 %v1694, %v1690
    %v1751 = vpack.c.b16 %v1695, %v1691
    %v1752 = vpack.c.b16 %v1696, %v1692
    %v1753 = vpack.c.b16 %v1701, %v1697
    %v1754 = vpack.c.b16 %v1702, %v1698
    %v1755 = vpack.c.b16 %v1703, %v1699
    %v1756 = vpack.c.b16 %v1704, %v1700
    %v1757 = vpack.c.b16 %v1709, %v1705
    %v1758 = vpack.c.b16 %v1710, %v1706
    %v1759 = vpack.c.b16 %v1711, %v1707
    %v1760 = vpack.c.b16 %v1712, %v1708
    %v1761 = vpack.c.b16 %v1717, %v1713
    %v1762 = vpack.c.b16 %v1718, %v1714
    %v1763 = vpack.c.b16 %v1719, %v1715
    %v1764 = vpack.c.b16 %v1720, %v1716
    %v1765 = vpack.c.b16 %v1725, %v1721
    %v1766 = vpack.c.b16 %v1726, %v1722
    %v1767 = vpack.c.b16 %v1727, %v1723
    %v1768 = vpack.c.b16 %v1728, %v1724
    %v1769 = vpack.c.b16 %v1733, %v1729
    %v1770 = vpack.c.b16 %v1734, %v1730
    %v1771 = vpack.c.b16 %v1735, %v1731
    %v1772 = vpack.c.b16 %v1736, %v1732
    %v1773 = vpack.c.b16 %v1741, %v1737
    %v1774 = vpack.c.b16 %v1742, %v1738
    %v1775 = vpack.c.b16 %v1743, %v1739
    %v1776 = vpack.c.b16 %v1744, %v1740
    %1809 = vmatprep.subr.bf16.mxu0 %v1774
    %1810 = vmatpush1.bf16.msra.mxu0 %v1773
    %1811 = vmatprep.subr.bf16.mxu0 %v1770
    %1812 = vmatpush1.bf16.msra.mxu0 %v1769
    %1813 = vmatprep.subr.bf16.mxu0 %v1766
    %1814 = vmatpush1.bf16.msra.mxu0 %v1765
    %1815 = vmatprep.subr.bf16.mxu0 %v1762
    %1816 = vmatpush1.bf16.msra.mxu0 %v1761
    %1817 = vmatprep.subr.bf16.mxu0 %v1758
    %1818 = vmatpush1.bf16.msra.mxu0 %v1757
    %1819 = vmatprep.subr.bf16.mxu0 %v1754
    %1820 = vmatpush1.bf16.msra.mxu0 %v1753
    %1821 = vmatprep.subr.bf16.mxu0 %v1750
    %1822 = vmatpush1.bf16.msra.mxu0 %v1749
    %1823 = vmatprep.subr.bf16.mxu0 %v1746
    %1824 = vmatpush1.bf16.msra.mxu0 %v1745
    %1825 = vmatprep.subr.bf16.mxu0 0
    %1826 = vmatpush2.bf16.msra.mxu0 0
    %1827 = vmatprep.subr.bf16.mxu0 0
    %1828 = vmatpush2.bf16.msra.mxu0 0
    %1829 = vmatprep.subr.bf16.mxu0 0
    %1830 = vmatpush2.bf16.msra.mxu0 0
    %1831 = vmatprep.subr.bf16.mxu0 0
    %1832 = vmatpush2.bf16.msra.mxu0 0
    %1833 = vmatprep.subr.bf16.mxu0 0
    %1834 = vmatpush2.bf16.msra.mxu0 0
    %1835 = vmatprep.subr.bf16.mxu0 0
    %1836 = vmatpush2.bf16.msra.mxu0 0
    %1837 = vmatprep.subr.bf16.mxu0 0
    %1838 = vmatpush2.bf16.msra.mxu0 0
    %1839 = vmatprep.subr.bf16.mxu0 0
    %1840 = vmatpush2.bf16.msra.mxu0 0
    %1841 = vmatprep.mubr.bf16.mxu0 0
    %1842 = vmatmul.mubr.bf16.gmra.mxu0 %v1616
    %v1843 = vpop.f32.mrf.mxu0
    %v1844 = vadd.f32 0.0, %v1843
    %v1845 = vpop.f32.mrf.mxu0
    %v1846 = vadd.f32 0.0, %v1845
    %v1847 = vpop.f32.mrf.mxu0
    %v1848 = vpop.f32.mrf.mxu0
    %1849 = vdwg.mxu0
    %1850 = vmatprep.subr.bf16.mxu0 %v1776
    %1851 = vmatpush1.bf16.msra.mxu0 %v1775
    %1852 = vmatprep.subr.bf16.mxu0 %v1772
    %1853 = vmatpush1.bf16.msra.mxu0 %v1771
    %1854 = vmatprep.subr.bf16.mxu0 %v1768
    %1855 = vmatpush1.bf16.msra.mxu0 %v1767
    %1856 = vmatprep.subr.bf16.mxu0 %v1764
    %1857 = vmatpush1.bf16.msra.mxu0 %v1763
    %1858 = vmatprep.subr.bf16.mxu0 %v1760
    %1859 = vmatpush1.bf16.msra.mxu0 %v1759
    %1860 = vmatprep.subr.bf16.mxu0 %v1756
    %1861 = vmatpush1.bf16.msra.mxu0 %v1755
    %1862 = vmatprep.subr.bf16.mxu0 %v1752
    %1863 = vmatpush1.bf16.msra.mxu0 %v1751
    %1864 = vmatprep.subr.bf16.mxu0 %v1748
    %1865 = vmatpush1.bf16.msra.mxu0 %v1747
    %1866 = vmatprep.subr.bf16.mxu0 0
    %1867 = vmatpush2.bf16.msra.mxu0 0
    %1868 = vmatprep.subr.bf16.mxu0 0
    %1869 = vmatpush2.bf16.msra.mxu0 0
    %1870 = vmatprep.subr.bf16.mxu0 0
    %1871 = vmatpush2.bf16.msra.mxu0 0
    %1872 = vmatprep.subr.bf16.mxu0 0
    %1873 = vmatpush2.bf16.msra.mxu0 0
    %1874 = vmatprep.subr.bf16.mxu0 0
    %1875 = vmatpush2.bf16.msra.mxu0 0
    %1876 = vmatprep.subr.bf16.mxu0 0
    %1877 = vmatpush2.bf16.msra.mxu0 0
    %1878 = vmatprep.subr.bf16.mxu0 0
    %1879 = vmatpush2.bf16.msra.mxu0 0
    %1880 = vmatprep.subr.bf16.mxu0 0
    %1881 = vmatpush2.bf16.msra.mxu0 0
    %1882 = vmatprep.mubr.bf16.mxu0 0
    %1883 = vmatmul.mubr.bf16.gmra.mxu0 %v1616
    %v1884 = vpop.f32.mrf.mxu0
    %v1885 = vadd.f32 0.0, %v1884
    %v1886 = vpop.f32.mrf.mxu0
    %v1887 = vadd.f32 0.0, %v1886
    %v1888 = vpop.f32.mrf.mxu0
    %v1889 = vpop.f32.mrf.mxu0
    %1890 = vdwg.mxu0
    %v1891 = vadd.f32 %v241, %v1844
    %v1892 = vadd.f32 %v243, %v1846
    %v1893 = vadd.f32 %v354, %v1885
    %v1894 = vadd.f32 %v356, %v1887
    %v1895 = vmul.f32 %v1891, 0.5
    %v1896 = vtanh.pop %v1895
    %v1897 = vmul.f32 %v1896, 0.5
    %v1898 = vadd.f32 %v1897, 0.5
    %v1899 = vmul.f32 %v1892, 0.5
    %v1900 = vtanh.pop %v1899
    %v1901 = vmul.f32 %v1900, 0.5
    %v1902 = vadd.f32 %v1901, 0.5
    %v1903 = vtanh.pop %v1893
    %v1904 = vmul.f32 %v1894, 0.5
    %v1905 = vtanh.pop %v1904
    %v1906 = vmul.f32 %v1905, 0.5
    %v1907 = vadd.f32 %v1906, 0.5
    %v1908 = vld [vmem:[#allocation3] sm:$0xff]
    %v1909 = vmul.f32 %v1902, %v1908
    %v1910 = vmul.f32 %v1898, %v1903
    %v1911 = vadd.f32 %v1909, %v1910
    %1912 = vst [vmem:[#allocation3] sm:$0xff] %v1911
    %v1913 = vtanh.pop %v1911
    %v1914 = vmul.f32 %v1907, %v1913
    %v1915 = vpack.c.bf16 %v1914, %v1914
    %1916 = vst [vmem:[#allocation2] sm:$0xf] %v1915
    %v1917 = vld [vmem:[#allocation2] sm:$0xf]
    %v1918 = vld [vmem:[#allocation7] sm:$0xff]
    %v1919 = vld [vmem:[#allocation7 + $0x8] sm:$0xff]
    %v1920 = vld [vmem:[#allocation7 + $0x10] sm:$0xff]
    %v1921 = vld [vmem:[#allocation7 + $0x18] sm:$0xff]
    %v1922 = vld [vmem:[#allocation7 + $0x20] sm:$0xff]
    %v1923 = vld [vmem:[#allocation7 + $0x28] sm:$0xff]
    %v1924 = vld [vmem:[#allocation7 + $0x30] sm:$0xff]
    %v1925 = vld [vmem:[#allocation7 + $0x38] sm:$0xff]
    %v1926 = vld [vmem:[#allocation7 + $0x40] sm:$0xff]
    %v1927 = vld [vmem:[#allocation7 + $0x48] sm:$0xff]
    %v1928 = vld [vmem:[#allocation7 + $0x50] sm:$0xff]
    %v1929 = vld [vmem:[#allocation7 + $0x58] sm:$0xff]
    %v1930 = vld [vmem:[#allocation7 + $0x60] sm:$0xff]
    %v1931 = vld [vmem:[#allocation7 + $0x68] sm:$0xff]
    %v1932 = vld [vmem:[#allocation7 + $0x70] sm:$0xff]
    %v1933 = vld [vmem:[#allocation7 + $0x78] sm:$0xff]
    %v1934 = vld [vmem:[#allocation7 + $0x80] sm:$0xff]
    %v1935 = vld [vmem:[#allocation7 + $0x88] sm:$0xff]
    %v1936 = vld [vmem:[#allocation7 + $0x90] sm:$0xff]
    %v1937 = vld [vmem:[#allocation7 + $0x98] sm:$0xff]
    %v1938 = vld [vmem:[#allocation7 + $0xa0] sm:$0xff]
    %v1939 = vld [vmem:[#allocation7 + $0xa8] sm:$0xff]
    %v1940 = vld [vmem:[#allocation7 + $0xb0] sm:$0xff]
    %v1941 = vld [vmem:[#allocation7 + $0xb8] sm:$0xff]
    %v1942 = vld [vmem:[#allocation7 + $0xc0] sm:$0xff]
    %v1943 = vld [vmem:[#allocation7 + $0xc8] sm:$0xff]
    %v1944 = vld [vmem:[#allocation7 + $0xd0] sm:$0xff]
    %v1945 = vld [vmem:[#allocation7 + $0xd8] sm:$0xff]
    %v1946 = vld [vmem:[#allocation7 + $0xe0] sm:$0xff]
    %v1947 = vld [vmem:[#allocation7 + $0xe8] sm:$0xff]
    %v1948 = vld [vmem:[#allocation7 + $0xf0] sm:$0xff]
    %v1949 = vld [vmem:[#allocation7 + $0xf8] sm:$0xff]
    %v1982 = vunpack.c.l.b16 %v1918
    %v1983 = vunpack.c.h.b16 %v1918
    %v1984 = vunpack.c.l.b16 %v1919
    %v1985 = vunpack.c.h.b16 %v1919
    %v1986 = vunpack.c.l.b16 %v1920
    %v1987 = vunpack.c.h.b16 %v1920
    %v1988 = vunpack.c.l.b16 %v1921
    %v1989 = vunpack.c.h.b16 %v1921
    %v1990 = vunpack.c.l.b16 %v1922
    %v1991 = vunpack.c.h.b16 %v1922
    %v1992 = vunpack.c.l.b16 %v1923
    %v1993 = vunpack.c.h.b16 %v1923
    %v1994 = vunpack.c.l.b16 %v1924
    %v1995 = vunpack.c.h.b16 %v1924
    %v1996 = vunpack.c.l.b16 %v1925
    %v1997 = vunpack.c.h.b16 %v1925
    %v1998 = vunpack.c.l.b16 %v1926
    %v1999 = vunpack.c.h.b16 %v1926
    %v2000 = vunpack.c.l.b16 %v1927
    %v2001 = vunpack.c.h.b16 %v1927
    %v2002 = vunpack.c.l.b16 %v1928
    %v2003 = vunpack.c.h.b16 %v1928
    %v2004 = vunpack.c.l.b16 %v1929
    %v2005 = vunpack.c.h.b16 %v1929
    %v2006 = vunpack.c.l.b16 %v1930
    %v2007 = vunpack.c.h.b16 %v1930
    %v2008 = vunpack.c.l.b16 %v1931
    %v2009 = vunpack.c.h.b16 %v1931
    %v2010 = vunpack.c.l.b16 %v1932
    %v2011 = vunpack.c.h.b16 %v1932
    %v2012 = vunpack.c.l.b16 %v1933
    %v2013 = vunpack.c.h.b16 %v1933
    %v2014 = vunpack.c.l.b16 %v1934
    %v2015 = vunpack.c.h.b16 %v1934
    %v2016 = vunpack.c.l.b16 %v1935
    %v2017 = vunpack.c.h.b16 %v1935
    %v2018 = vunpack.c.l.b16 %v1936
    %v2019 = vunpack.c.h.b16 %v1936
    %v2020 = vunpack.c.l.b16 %v1937
    %v2021 = vunpack.c.h.b16 %v1937
    %v2022 = vunpack.c.l.b16 %v1938
    %v2023 = vunpack.c.h.b16 %v1938
    %v2024 = vunpack.c.l.b16 %v1939
    %v2025 = vunpack.c.h.b16 %v1939
    %v2026 = vunpack.c.l.b16 %v1940
    %v2027 = vunpack.c.h.b16 %v1940
    %v2028 = vunpack.c.l.b16 %v1941
    %v2029 = vunpack.c.h.b16 %v1941
    %v2030 = vunpack.c.l.b16 %v1942
    %v2031 = vunpack.c.h.b16 %v1942
    %v2032 = vunpack.c.l.b16 %v1943
    %v2033 = vunpack.c.h.b16 %v1943
    %v2034 = vunpack.c.l.b16 %v1944
    %v2035 = vunpack.c.h.b16 %v1944
    %v2036 = vunpack.c.l.b16 %v1945
    %v2037 = vunpack.c.h.b16 %v1945
    %v2038 = vunpack.c.l.b16 %v1946
    %v2039 = vunpack.c.h.b16 %v1946
    %v2040 = vunpack.c.l.b16 %v1947
    %v2041 = vunpack.c.h.b16 %v1947
    %v2042 = vunpack.c.l.b16 %v1948
    %v2043 = vunpack.c.h.b16 %v1948
    %v2044 = vunpack.c.l.b16 %v1949
    %v2045 = vunpack.c.h.b16 %v1949
    %v2046 = vpack.c.b16 %v1986, %v1982
    %v2047 = vpack.c.b16 %v1987, %v1983
    %v2048 = vpack.c.b16 %v1988, %v1984
    %v2049 = vpack.c.b16 %v1989, %v1985
    %v2050 = vpack.c.b16 %v1994, %v1990
    %v2051 = vpack.c.b16 %v1995, %v1991
    %v2052 = vpack.c.b16 %v1996, %v1992
    %v2053 = vpack.c.b16 %v1997, %v1993
    %v2054 = vpack.c.b16 %v2002, %v1998
    %v2055 = vpack.c.b16 %v2003, %v1999
    %v2056 = vpack.c.b16 %v2004, %v2000
    %v2057 = vpack.c.b16 %v2005, %v2001
    %v2058 = vpack.c.b16 %v2010, %v2006
    %v2059 = vpack.c.b16 %v2011, %v2007
    %v2060 = vpack.c.b16 %v2012, %v2008
    %v2061 = vpack.c.b16 %v2013, %v2009
    %v2062 = vpack.c.b16 %v2018, %v2014
    %v2063 = vpack.c.b16 %v2019, %v2015
    %v2064 = vpack.c.b16 %v2020, %v2016
    %v2065 = vpack.c.b16 %v2021, %v2017
    %v2066 = vpack.c.b16 %v2026, %v2022
    %v2067 = vpack.c.b16 %v2027, %v2023
    %v2068 = vpack.c.b16 %v2028, %v2024
    %v2069 = vpack.c.b16 %v2029, %v2025
    %v2070 = vpack.c.b16 %v2034, %v2030
    %v2071 = vpack.c.b16 %v2035, %v2031
    %v2072 = vpack.c.b16 %v2036, %v2032
    %v2073 = vpack.c.b16 %v2037, %v2033
    %v2074 = vpack.c.b16 %v2042, %v2038
    %v2075 = vpack.c.b16 %v2043, %v2039
    %v2076 = vpack.c.b16 %v2044, %v2040
    %v2077 = vpack.c.b16 %v2045, %v2041
    %2110 = vmatprep.subr.bf16.mxu0 %v2075
    %2111 = vmatpush1.bf16.msra.mxu0 %v2074
    %2112 = vmatprep.subr.bf16.mxu0 %v2071
    %2113 = vmatpush1.bf16.msra.mxu0 %v2070
    %2114 = vmatprep.subr.bf16.mxu0 %v2067
    %2115 = vmatpush1.bf16.msra.mxu0 %v2066
    %2116 = vmatprep.subr.bf16.mxu0 %v2063
    %2117 = vmatpush1.bf16.msra.mxu0 %v2062
    %2118 = vmatprep.subr.bf16.mxu0 %v2059
    %2119 = vmatpush1.bf16.msra.mxu0 %v2058
    %2120 = vmatprep.subr.bf16.mxu0 %v2055
    %2121 = vmatpush1.bf16.msra.mxu0 %v2054
    %2122 = vmatprep.subr.bf16.mxu0 %v2051
    %2123 = vmatpush1.bf16.msra.mxu0 %v2050
    %2124 = vmatprep.subr.bf16.mxu0 %v2047
    %2125 = vmatpush1.bf16.msra.mxu0 %v2046
    %2126 = vmatprep.subr.bf16.mxu0 0
    %2127 = vmatpush2.bf16.msra.mxu0 0
    %2128 = vmatprep.subr.bf16.mxu0 0
    %2129 = vmatpush2.bf16.msra.mxu0 0
    %2130 = vmatprep.subr.bf16.mxu0 0
    %2131 = vmatpush2.bf16.msra.mxu0 0
    %2132 = vmatprep.subr.bf16.mxu0 0
    %2133 = vmatpush2.bf16.msra.mxu0 0
    %2134 = vmatprep.subr.bf16.mxu0 0
    %2135 = vmatpush2.bf16.msra.mxu0 0
    %2136 = vmatprep.subr.bf16.mxu0 0
    %2137 = vmatpush2.bf16.msra.mxu0 0
    %2138 = vmatprep.subr.bf16.mxu0 0
    %2139 = vmatpush2.bf16.msra.mxu0 0
    %2140 = vmatprep.subr.bf16.mxu0 0
    %2141 = vmatpush2.bf16.msra.mxu0 0
    %2142 = vmatprep.mubr.bf16.mxu0 0
    %2143 = vmatmul.mubr.bf16.gmra.mxu0 %v1917
    %v2144 = vpop.f32.mrf.mxu0
    %v2145 = vadd.f32 0.0, %v2144
    %v2146 = vpop.f32.mrf.mxu0
    %v2147 = vadd.f32 0.0, %v2146
    %v2148 = vpop.f32.mrf.mxu0
    %v2149 = vpop.f32.mrf.mxu0
    %2150 = vdwg.mxu0
    %2151 = vmatprep.subr.bf16.mxu0 %v2077
    %2152 = vmatpush1.bf16.msra.mxu0 %v2076
    %2153 = vmatprep.subr.bf16.mxu0 %v2073
    %2154 = vmatpush1.bf16.msra.mxu0 %v2072
    %2155 = vmatprep.subr.bf16.mxu0 %v2069
    %2156 = vmatpush1.bf16.msra.mxu0 %v2068
    %2157 = vmatprep.subr.bf16.mxu0 %v2065
    %2158 = vmatpush1.bf16.msra.mxu0 %v2064
    %2159 = vmatprep.subr.bf16.mxu0 %v2061
    %2160 = vmatpush1.bf16.msra.mxu0 %v2060
    %2161 = vmatprep.subr.bf16.mxu0 %v2057
    %2162 = vmatpush1.bf16.msra.mxu0 %v2056
    %2163 = vmatprep.subr.bf16.mxu0 %v2053
    %2164 = vmatpush1.bf16.msra.mxu0 %v2052
    %2165 = vmatprep.subr.bf16.mxu0 %v2049
    %2166 = vmatpush1.bf16.msra.mxu0 %v2048
    %2167 = vmatprep.subr.bf16.mxu0 0
    %2168 = vmatpush2.bf16.msra.mxu0 0
    %2169 = vmatprep.subr.bf16.mxu0 0
    %2170 = vmatpush2.bf16.msra.mxu0 0
    %2171 = vmatprep.subr.bf16.mxu0 0
    %2172 = vmatpush2.bf16.msra.mxu0 0
    %2173 = vmatprep.subr.bf16.mxu0 0
    %2174 = vmatpush2.bf16.msra.mxu0 0
    %2175 = vmatprep.subr.bf16.mxu0 0
    %2176 = vmatpush2.bf16.msra.mxu0 0
    %2177 = vmatprep.subr.bf16.mxu0 0
    %2178 = vmatpush2.bf16.msra.mxu0 0
    %2179 = vmatprep.subr.bf16.mxu0 0
    %2180 = vmatpush2.bf16.msra.mxu0 0
    %2181 = vmatprep.subr.bf16.mxu0 0
    %2182 = vmatpush2.bf16.msra.mxu0 0
    %2183 = vmatprep.mubr.bf16.mxu0 0
    %2184 = vmatmul.mubr.bf16.gmra.mxu0 %v1917
    %v2185 = vpop.f32.mrf.mxu0
    %v2186 = vadd.f32 0.0, %v2185
    %v2187 = vpop.f32.mrf.mxu0
    %v2188 = vadd.f32 0.0, %v2187
    %v2189 = vpop.f32.mrf.mxu0
    %v2190 = vpop.f32.mrf.mxu0
    %2191 = vdwg.mxu0
    %v2192 = vadd.f32 %v245, %v2145
    %v2193 = vadd.f32 %v247, %v2147
    %v2194 = vadd.f32 %v358, %v2186
    %v2195 = vadd.f32 %v360, %v2188
    %v2196 = vmul.f32 %v2192, 0.5
    %v2197 = vtanh.pop %v2196
    %v2198 = vmul.f32 %v2197, 0.5
    %v2199 = vadd.f32 %v2198, 0.5
    %v2200 = vmul.f32 %v2193, 0.5
    %v2201 = vtanh.pop %v2200
    %v2202 = vmul.f32 %v2201, 0.5
    %v2203 = vadd.f32 %v2202, 0.5
    %v2204 = vtanh.pop %v2194
    %v2205 = vmul.f32 %v2195, 0.5
    %v2206 = vtanh.pop %v2205
    %v2207 = vmul.f32 %v2206, 0.5
    %v2208 = vadd.f32 %v2207, 0.5
    %v2209 = vld [vmem:[#allocation3] sm:$0xff]
    %v2210 = vmul.f32 %v2203, %v2209
    %v2211 = vmul.f32 %v2199, %v2204
    %v2212 = vadd.f32 %v2210, %v2211
    %2213 = vst [vmem:[#allocation3] sm:$0xff] %v2212
    %v2214 = vtanh.pop %v2212
    %v2215 = vmul.f32 %v2208, %v2214
    %v2216 = vpack.c.bf16 %v2215, %v2215
    %2217 = vst [vmem:[#allocation2] sm:$0xf] %v2216
    %v2218 = vld [vmem:[#allocation2] sm:$0xf]
    %v2219 = vld [vmem:[#allocation7] sm:$0xff]
    %v2220 = vld [vmem:[#allocation7 + $0x8] sm:$0xff]
    %v2221 = vld [vmem:[#allocation7 + $0x10] sm:$0xff]
    %v2222 = vld [vmem:[#allocation7 + $0x18] sm:$0xff]
    %v2223 = vld [vmem:[#allocation7 + $0x20] sm:$0xff]
    %v2224 = vld [vmem:[#allocation7 + $0x28] sm:$0xff]
    %v2225 = vld [vmem:[#allocation7 + $0x30] sm:$0xff]
    %v2226 = vld [vmem:[#allocation7 + $0x38] sm:$0xff]
    %v2227 = vld [vmem:[#allocation7 + $0x40] sm:$0xff]
    %v2228 = vld [vmem:[#allocation7 + $0x48] sm:$0xff]
    %v2229 = vld [vmem:[#allocation7 + $0x50] sm:$0xff]
    %v2230 = vld [vmem:[#allocation7 + $0x58] sm:$0xff]
    %v2231 = vld [vmem:[#allocation7 + $0x60] sm:$0xff]
    %v2232 = vld [vmem:[#allocation7 + $0x68] sm:$0xff]
    %v2233 = vld [vmem:[#allocation7 + $0x70] sm:$0xff]
    %v2234 = vld [vmem:[#allocation7 + $0x78] sm:$0xff]
    %v2235 = vld [vmem:[#allocation7 + $0x80] sm:$0xff]
    %v2236 = vld [vmem:[#allocation7 + $0x88] sm:$0xff]
    %v2237 = vld [vmem:[#allocation7 + $0x90] sm:$0xff]
    %v2238 = vld [vmem:[#allocation7 + $0x98] sm:$0xff]
    %v2239 = vld [vmem:[#allocation7 + $0xa0] sm:$0xff]
    %v2240 = vld [vmem:[#allocation7 + $0xa8] sm:$0xff]
    %v2241 = vld [vmem:[#allocation7 + $0xb0] sm:$0xff]
    %v2242 = vld [vmem:[#allocation7 + $0xb8] sm:$0xff]
    %v2243 = vld [vmem:[#allocation7 + $0xc0] sm:$0xff]
    %v2244 = vld [vmem:[#allocation7 + $0xc8] sm:$0xff]
    %v2245 = vld [vmem:[#allocation7 + $0xd0] sm:$0xff]
    %v2246 = vld [vmem:[#allocation7 + $0xd8] sm:$0xff]
    %v2247 = vld [vmem:[#allocation7 + $0xe0] sm:$0xff]
    %v2248 = vld [vmem:[#allocation7 + $0xe8] sm:$0xff]
    %v2249 = vld [vmem:[#allocation7 + $0xf0] sm:$0xff]
    %v2250 = vld [vmem:[#allocation7 + $0xf8] sm:$0xff]
    %v2283 = vunpack.c.l.b16 %v2219
    %v2284 = vunpack.c.h.b16 %v2219
    %v2285 = vunpack.c.l.b16 %v2220
    %v2286 = vunpack.c.h.b16 %v2220
    %v2287 = vunpack.c.l.b16 %v2221
    %v2288 = vunpack.c.h.b16 %v2221
    %v2289 = vunpack.c.l.b16 %v2222
    %v2290 = vunpack.c.h.b16 %v2222
    %v2291 = vunpack.c.l.b16 %v2223
    %v2292 = vunpack.c.h.b16 %v2223
    %v2293 = vunpack.c.l.b16 %v2224
    %v2294 = vunpack.c.h.b16 %v2224
    %v2295 = vunpack.c.l.b16 %v2225
    %v2296 = vunpack.c.h.b16 %v2225
    %v2297 = vunpack.c.l.b16 %v2226
    %v2298 = vunpack.c.h.b16 %v2226
    %v2299 = vunpack.c.l.b16 %v2227
    %v2300 = vunpack.c.h.b16 %v2227
    %v2301 = vunpack.c.l.b16 %v2228
    %v2302 = vunpack.c.h.b16 %v2228
    %v2303 = vunpack.c.l.b16 %v2229
    %v2304 = vunpack.c.h.b16 %v2229
    %v2305 = vunpack.c.l.b16 %v2230
    %v2306 = vunpack.c.h.b16 %v2230
    %v2307 = vunpack.c.l.b16 %v2231
    %v2308 = vunpack.c.h.b16 %v2231
    %v2309 = vunpack.c.l.b16 %v2232
    %v2310 = vunpack.c.h.b16 %v2232
    %v2311 = vunpack.c.l.b16 %v2233
    %v2312 = vunpack.c.h.b16 %v2233
    %v2313 = vunpack.c.l.b16 %v2234
    %v2314 = vunpack.c.h.b16 %v2234
    %v2315 = vunpack.c.l.b16 %v2235
    %v2316 = vunpack.c.h.b16 %v2235
    %v2317 = vunpack.c.l.b16 %v2236
    %v2318 = vunpack.c.h.b16 %v2236
    %v2319 = vunpack.c.l.b16 %v2237
    %v2320 = vunpack.c.h.b16 %v2237
    %v2321 = vunpack.c.l.b16 %v2238
    %v2322 = vunpack.c.h.b16 %v2238
    %v2323 = vunpack.c.l.b16 %v2239
    %v2324 = vunpack.c.h.b16 %v2239
    %v2325 = vunpack.c.l.b16 %v2240
    %v2326 = vunpack.c.h.b16 %v2240
    %v2327 = vunpack.c.l.b16 %v2241
    %v2328 = vunpack.c.h.b16 %v2241
    %v2329 = vunpack.c.l.b16 %v2242
    %v2330 = vunpack.c.h.b16 %v2242
    %v2331 = vunpack.c.l.b16 %v2243
    %v2332 = vunpack.c.h.b16 %v2243
    %v2333 = vunpack.c.l.b16 %v2244
    %v2334 = vunpack.c.h.b16 %v2244
    %v2335 = vunpack.c.l.b16 %v2245
    %v2336 = vunpack.c.h.b16 %v2245
    %v2337 = vunpack.c.l.b16 %v2246
    %v2338 = vunpack.c.h.b16 %v2246
    %v2339 = vunpack.c.l.b16 %v2247
    %v2340 = vunpack.c.h.b16 %v2247
    %v2341 = vunpack.c.l.b16 %v2248
    %v2342 = vunpack.c.h.b16 %v2248
    %v2343 = vunpack.c.l.b16 %v2249
    %v2344 = vunpack.c.h.b16 %v2249
    %v2345 = vunpack.c.l.b16 %v2250
    %v2346 = vunpack.c.h.b16 %v2250
    %v2347 = vpack.c.b16 %v2287, %v2283
    %v2348 = vpack.c.b16 %v2288, %v2284
    %v2349 = vpack.c.b16 %v2289, %v2285
    %v2350 = vpack.c.b16 %v2290, %v2286
    %v2351 = vpack.c.b16 %v2295, %v2291
    %v2352 = vpack.c.b16 %v2296, %v2292
    %v2353 = vpack.c.b16 %v2297, %v2293
    %v2354 = vpack.c.b16 %v2298, %v2294
    %v2355 = vpack.c.b16 %v2303, %v2299
    %v2356 = vpack.c.b16 %v2304, %v2300
    %v2357 = vpack.c.b16 %v2305, %v2301
    %v2358 = vpack.c.b16 %v2306, %v2302
    %v2359 = vpack.c.b16 %v2311, %v2307
    %v2360 = vpack.c.b16 %v2312, %v2308
    %v2361 = vpack.c.b16 %v2313, %v2309
    %v2362 = vpack.c.b16 %v2314, %v2310
    %v2363 = vpack.c.b16 %v2319, %v2315
    %v2364 = vpack.c.b16 %v2320, %v2316
    %v2365 = vpack.c.b16 %v2321, %v2317
    %v2366 = vpack.c.b16 %v2322, %v2318
    %v2367 = vpack.c.b16 %v2327, %v2323
    %v2368 = vpack.c.b16 %v2328, %v2324
    %v2369 = vpack.c.b16 %v2329, %v2325
    %v2370 = vpack.c.b16 %v2330, %v2326
    %v2371 = vpack.c.b16 %v2335, %v2331
    %v2372 = vpack.c.b16 %v2336, %v2332
    %v2373 = vpack.c.b16 %v2337, %v2333
    %v2374 = vpack.c.b16 %v2338, %v2334
    %v2375 = vpack.c.b16 %v2343, %v2339
    %v2376 = vpack.c.b16 %v2344, %v2340
    %v2377 = vpack.c.b16 %v2345, %v2341
    %v2378 = vpack.c.b16 %v2346, %v2342
    %2411 = vmatprep.subr.bf16.mxu0 %v2376
    %2412 = vmatpush1.bf16.msra.mxu0 %v2375
    %2413 = vmatprep.subr.bf16.mxu0 %v2372
    %2414 = vmatpush1.bf16.msra.mxu0 %v2371
    %2415 = vmatprep.subr.bf16.mxu0 %v2368
    %2416 = vmatpush1.bf16.msra.mxu0 %v2367
    %2417 = vmatprep.subr.bf16.mxu0 %v2364
    %2418 = vmatpush1.bf16.msra.mxu0 %v2363
    %2419 = vmatprep.subr.bf16.mxu0 %v2360
    %2420 = vmatpush1.bf16.msra.mxu0 %v2359
    %2421 = vmatprep.subr.bf16.mxu0 %v2356
    %2422 = vmatpush1.bf16.msra.mxu0 %v2355
    %2423 = vmatprep.subr.bf16.mxu0 %v2352
    %2424 = vmatpush1.bf16.msra.mxu0 %v2351
    %2425 = vmatprep.subr.bf16.mxu0 %v2348
    %2426 = vmatpush1.bf16.msra.mxu0 %v2347
    %2427 = vmatprep.subr.bf16.mxu0 0
    %2428 = vmatpush2.bf16.msra.mxu0 0
    %2429 = vmatprep.subr.bf16.mxu0 0
    %2430 = vmatpush2.bf16.msra.mxu0 0
    %2431 = vmatprep.subr.bf16.mxu0 0
    %2432 = vmatpush2.bf16.msra.mxu0 0
    %2433 = vmatprep.subr.bf16.mxu0 0
    %2434 = vmatpush2.bf16.msra.mxu0 0
    %2435 = vmatprep.subr.bf16.mxu0 0
    %2436 = vmatpush2.bf16.msra.mxu0 0
    %2437 = vmatprep.subr.bf16.mxu0 0
    %2438 = vmatpush2.bf16.msra.mxu0 0
    %2439 = vmatprep.subr.bf16.mxu0 0
    %2440 = vmatpush2.bf16.msra.mxu0 0
    %2441 = vmatprep.subr.bf16.mxu0 0
    %2442 = vmatpush2.bf16.msra.mxu0 0
    %2443 = vmatprep.mubr.bf16.mxu0 0
    %2444 = vmatmul.mubr.bf16.gmra.mxu0 %v2218
    %v2445 = vpop.f32.mrf.mxu0
    %v2446 = vadd.f32 0.0, %v2445
    %v2447 = vpop.f32.mrf.mxu0
    %v2448 = vadd.f32 0.0, %v2447
    %v2449 = vpop.f32.mrf.mxu0
    %v2450 = vpop.f32.mrf.mxu0
    %2451 = vdwg.mxu0
    %2452 = vmatprep.subr.bf16.mxu0 %v2378
    %2453 = vmatpush1.bf16.msra.mxu0 %v2377
    %2454 = vmatprep.subr.bf16.mxu0 %v2374
    %2455 = vmatpush1.bf16.msra.mxu0 %v2373
    %2456 = vmatprep.subr.bf16.mxu0 %v2370
    %2457 = vmatpush1.bf16.msra.mxu0 %v2369
    %2458 = vmatprep.subr.bf16.mxu0 %v2366
    %2459 = vmatpush1.bf16.msra.mxu0 %v2365
    %2460 = vmatprep.subr.bf16.mxu0 %v2362
    %2461 = vmatpush1.bf16.msra.mxu0 %v2361
    %2462 = vmatprep.subr.bf16.mxu0 %v2358
    %2463 = vmatpush1.bf16.msra.mxu0 %v2357
    %2464 = vmatprep.subr.bf16.mxu0 %v2354
    %2465 = vmatpush1.bf16.msra.mxu0 %v2353
    %2466 = vmatprep.subr.bf16.mxu0 %v2350
    %2467 = vmatpush1.bf16.msra.mxu0 %v2349
    %2468 = vmatprep.subr.bf16.mxu0 0
    %2469 = vmatpush2.bf16.msra.mxu0 0
    %2470 = vmatprep.subr.bf16.mxu0 0
    %2471 = vmatpush2.bf16.msra.mxu0 0
    %2472 = vmatprep.subr.bf16.mxu0 0
    %2473 = vmatpush2.bf16.msra.mxu0 0
    %2474 = vmatprep.subr.bf16.mxu0 0
    %2475 = vmatpush2.bf16.msra.mxu0 0
    %2476 = vmatprep.subr.bf16.mxu0 0
    %2477 = vmatpush2.bf16.msra.mxu0 0
    %2478 = vmatprep.subr.bf16.mxu0 0
    %2479 = vmatpush2.bf16.msra.mxu0 0
    %2480 = vmatprep.subr.bf16.mxu0 0
    %2481 = vmatpush2.bf16.msra.mxu0 0
    %2482 = vmatprep.subr.bf16.mxu0 0
    %2483 = vmatpush2.bf16.msra.mxu0 0
    %2484 = vmatprep.mubr.bf16.mxu0 0
    %2485 = vmatmul.mubr.bf16.gmra.mxu0 %v2218
    %v2486 = vpop.f32.mrf.mxu0
    %v2487 = vadd.f32 0.0, %v2486
    %v2488 = vpop.f32.mrf.mxu0
    %v2489 = vadd.f32 0.0, %v2488
    %v2490 = vpop.f32.mrf.mxu0
    %v2491 = vpop.f32.mrf.mxu0
    %2492 = vdwg.mxu0
    %v2493 = vadd.f32 %v251, %v2446
    %v2494 = vadd.f32 %v253, %v2448
    %v2495 = vadd.f32 %v364, %v2487
    %v2496 = vadd.f32 %v366, %v2489
    %v2497 = vmul.f32 %v2493, 0.5
    %v2498 = vtanh.pop %v2497
    %v2499 = vmul.f32 %v2498, 0.5
    %v2500 = vadd.f32 %v2499, 0.5
    %v2501 = vmul.f32 %v2494, 0.5
    %v2502 = vtanh.pop %v2501
    %v2503 = vmul.f32 %v2502, 0.5
    %v2504 = vadd.f32 %v2503, 0.5
    %v2505 = vtanh.pop %v2495
    %v2506 = vmul.f32 %v2496, 0.5
    %v2507 = vtanh.pop %v2506
    %v2508 = vmul.f32 %v2507, 0.5
    %v2509 = vadd.f32 %v2508, 0.5
    %v2510 = vld [vmem:[#allocation3] sm:$0xff]
    %v2511 = vmul.f32 %v2504, %v2510
    %v2512 = vmul.f32 %v2500, %v2505
    %v2513 = vadd.f32 %v2511, %v2512
    %2514 = vst [vmem:[#allocation3] sm:$0xff] %v2513
    %v2515 = vtanh.pop %v2513
    %v2516 = vmul.f32 %v2509, %v2515
    %v2517 = vpack.c.bf16 %v2516, %v2516
    %2518 = vst [vmem:[#allocation2] sm:$0xf] %v2517
    %v2519 = vld [vmem:[#allocation2] sm:$0xf]
    %v2520 = vld [vmem:[#allocation7] sm:$0xff]
    %v2521 = vld [vmem:[#allocation7 + $0x8] sm:$0xff]
    %v2522 = vld [vmem:[#allocation7 + $0x10] sm:$0xff]
    %v2523 = vld [vmem:[#allocation7 + $0x18] sm:$0xff]
    %v2524 = vld [vmem:[#allocation7 + $0x20] sm:$0xff]
    %v2525 = vld [vmem:[#allocation7 + $0x28] sm:$0xff]
    %v2526 = vld [vmem:[#allocation7 + $0x30] sm:$0xff]
    %v2527 = vld [vmem:[#allocation7 + $0x38] sm:$0xff]
    %v2528 = vld [vmem:[#allocation7 + $0x40] sm:$0xff]
    %v2529 = vld [vmem:[#allocation7 + $0x48] sm:$0xff]
    %v2530 = vld [vmem:[#allocation7 + $0x50] sm:$0xff]
    %v2531 = vld [vmem:[#allocation7 + $0x58] sm:$0xff]
    %v2532 = vld [vmem:[#allocation7 + $0x60] sm:$0xff]
    %v2533 = vld [vmem:[#allocation7 + $0x68] sm:$0xff]
    %v2534 = vld [vmem:[#allocation7 + $0x70] sm:$0xff]
    %v2535 = vld [vmem:[#allocation7 + $0x78] sm:$0xff]
    %v2536 = vld [vmem:[#allocation7 + $0x80] sm:$0xff]
    %v2537 = vld [vmem:[#allocation7 + $0x88] sm:$0xff]
    %v2538 = vld [vmem:[#allocation7 + $0x90] sm:$0xff]
    %v2539 = vld [vmem:[#allocation7 + $0x98] sm:$0xff]
    %v2540 = vld [vmem:[#allocation7 + $0xa0] sm:$0xff]
    %v2541 = vld [vmem:[#allocation7 + $0xa8] sm:$0xff]
    %v2542 = vld [vmem:[#allocation7 + $0xb0] sm:$0xff]
    %v2543 = vld [vmem:[#allocation7 + $0xb8] sm:$0xff]
    %v2544 = vld [vmem:[#allocation7 + $0xc0] sm:$0xff]
    %v2545 = vld [vmem:[#allocation7 + $0xc8] sm:$0xff]
    %v2546 = vld [vmem:[#allocation7 + $0xd0] sm:$0xff]
    %v2547 = vld [vmem:[#allocation7 + $0xd8] sm:$0xff]
    %v2548 = vld [vmem:[#allocation7 + $0xe0] sm:$0xff]
    %v2549 = vld [vmem:[#allocation7 + $0xe8] sm:$0xff]
    %v2550 = vld [vmem:[#allocation7 + $0xf0] sm:$0xff]
    %v2551 = vld [vmem:[#allocation7 + $0xf8] sm:$0xff]
    %v2584 = vunpack.c.l.b16 %v2520
    %v2585 = vunpack.c.h.b16 %v2520
    %v2586 = vunpack.c.l.b16 %v2521
    %v2587 = vunpack.c.h.b16 %v2521
    %v2588 = vunpack.c.l.b16 %v2522
    %v2589 = vunpack.c.h.b16 %v2522
    %v2590 = vunpack.c.l.b16 %v2523
    %v2591 = vunpack.c.h.b16 %v2523
    %v2592 = vunpack.c.l.b16 %v2524
    %v2593 = vunpack.c.h.b16 %v2524
    %v2594 = vunpack.c.l.b16 %v2525
    %v2595 = vunpack.c.h.b16 %v2525
    %v2596 = vunpack.c.l.b16 %v2526
    %v2597 = vunpack.c.h.b16 %v2526
    %v2598 = vunpack.c.l.b16 %v2527
    %v2599 = vunpack.c.h.b16 %v2527
    %v2600 = vunpack.c.l.b16 %v2528
    %v2601 = vunpack.c.h.b16 %v2528
    %v2602 = vunpack.c.l.b16 %v2529
    %v2603 = vunpack.c.h.b16 %v2529
    %v2604 = vunpack.c.l.b16 %v2530
    %v2605 = vunpack.c.h.b16 %v2530
    %v2606 = vunpack.c.l.b16 %v2531
    %v2607 = vunpack.c.h.b16 %v2531
    %v2608 = vunpack.c.l.b16 %v2532
    %v2609 = vunpack.c.h.b16 %v2532
    %v2610 = vunpack.c.l.b16 %v2533
    %v2611 = vunpack.c.h.b16 %v2533
    %v2612 = vunpack.c.l.b16 %v2534
    %v2613 = vunpack.c.h.b16 %v2534
    %v2614 = vunpack.c.l.b16 %v2535
    %v2615 = vunpack.c.h.b16 %v2535
    %v2616 = vunpack.c.l.b16 %v2536
    %v2617 = vunpack.c.h.b16 %v2536
    %v2618 = vunpack.c.l.b16 %v2537
    %v2619 = vunpack.c.h.b16 %v2537
    %v2620 = vunpack.c.l.b16 %v2538
    %v2621 = vunpack.c.h.b16 %v2538
    %v2622 = vunpack.c.l.b16 %v2539
    %v2623 = vunpack.c.h.b16 %v2539
    %v2624 = vunpack.c.l.b16 %v2540
    %v2625 = vunpack.c.h.b16 %v2540
    %v2626 = vunpack.c.l.b16 %v2541
    %v2627 = vunpack.c.h.b16 %v2541
    %v2628 = vunpack.c.l.b16 %v2542
    %v2629 = vunpack.c.h.b16 %v2542
    %v2630 = vunpack.c.l.b16 %v2543
    %v2631 = vunpack.c.h.b16 %v2543
    %v2632 = vunpack.c.l.b16 %v2544
    %v2633 = vunpack.c.h.b16 %v2544
    %v2634 = vunpack.c.l.b16 %v2545
    %v2635 = vunpack.c.h.b16 %v2545
    %v2636 = vunpack.c.l.b16 %v2546
    %v2637 = vunpack.c.h.b16 %v2546
    %v2638 = vunpack.c.l.b16 %v2547
    %v2639 = vunpack.c.h.b16 %v2547
    %v2640 = vunpack.c.l.b16 %v2548
    %v2641 = vunpack.c.h.b16 %v2548
    %v2642 = vunpack.c.l.b16 %v2549
    %v2643 = vunpack.c.h.b16 %v2549
    %v2644 = vunpack.c.l.b16 %v2550
    %v2645 = vunpack.c.h.b16 %v2550
    %v2646 = vunpack.c.l.b16 %v2551
    %v2647 = vunpack.c.h.b16 %v2551
    %v2648 = vpack.c.b16 %v2588, %v2584
    %v2649 = vpack.c.b16 %v2589, %v2585
    %v2650 = vpack.c.b16 %v2590, %v2586
    %v2651 = vpack.c.b16 %v2591, %v2587
    %v2652 = vpack.c.b16 %v2596, %v2592
    %v2653 = vpack.c.b16 %v2597, %v2593
    %v2654 = vpack.c.b16 %v2598, %v2594
    %v2655 = vpack.c.b16 %v2599, %v2595
    %v2656 = vpack.c.b16 %v2604, %v2600
    %v2657 = vpack.c.b16 %v2605, %v2601
    %v2658 = vpack.c.b16 %v2606, %v2602
    %v2659 = vpack.c.b16 %v2607, %v2603
    %v2660 = vpack.c.b16 %v2612, %v2608
    %v2661 = vpack.c.b16 %v2613, %v2609
    %v2662 = vpack.c.b16 %v2614, %v2610
    %v2663 = vpack.c.b16 %v2615, %v2611
    %v2664 = vpack.c.b16 %v2620, %v2616
    %v2665 = vpack.c.b16 %v2621, %v2617
    %v2666 = vpack.c.b16 %v2622, %v2618
    %v2667 = vpack.c.b16 %v2623, %v2619
    %v2668 = vpack.c.b16 %v2628, %v2624
    %v2669 = vpack.c.b16 %v2629, %v2625
    %v2670 = vpack.c.b16 %v2630, %v2626
    %v2671 = vpack.c.b16 %v2631, %v2627
    %v2672 = vpack.c.b16 %v2636, %v2632
    %v2673 = vpack.c.b16 %v2637, %v2633
    %v2674 = vpack.c.b16 %v2638, %v2634
    %v2675 = vpack.c.b16 %v2639, %v2635
    %v2676 = vpack.c.b16 %v2644, %v2640
    %v2677 = vpack.c.b16 %v2645, %v2641
    %v2678 = vpack.c.b16 %v2646, %v2642
    %v2679 = vpack.c.b16 %v2647, %v2643
    %2712 = vmatprep.subr.bf16.mxu0 %v2677
    %2713 = vmatpush1.bf16.msra.mxu0 %v2676
    %2714 = vmatprep.subr.bf16.mxu0 %v2673
    %2715 = vmatpush1.bf16.msra.mxu0 %v2672
    %2716 = vmatprep.subr.bf16.mxu0 %v2669
    %2717 = vmatpush1.bf16.msra.mxu0 %v2668
    %2718 = vmatprep.subr.bf16.mxu0 %v2665
    %2719 = vmatpush1.bf16.msra.mxu0 %v2664
    %2720 = vmatprep.subr.bf16.mxu0 %v2661
    %2721 = vmatpush1.bf16.msra.mxu0 %v2660
    %2722 = vmatprep.subr.bf16.mxu0 %v2657
    %2723 = vmatpush1.bf16.msra.mxu0 %v2656
    %2724 = vmatprep.subr.bf16.mxu0 %v2653
    %2725 = vmatpush1.bf16.msra.mxu0 %v2652
    %2726 = vmatprep.subr.bf16.mxu0 %v2649
    %2727 = vmatpush1.bf16.msra.mxu0 %v2648
    %2728 = vmatprep.subr.bf16.mxu0 0
    %2729 = vmatpush2.bf16.msra.mxu0 0
    %2730 = vmatprep.subr.bf16.mxu0 0
    %2731 = vmatpush2.bf16.msra.mxu0 0
    %2732 = vmatprep.subr.bf16.mxu0 0
    %2733 = vmatpush2.bf16.msra.mxu0 0
    %2734 = vmatprep.subr.bf16.mxu0 0
    %2735 = vmatpush2.bf16.msra.mxu0 0
    %2736 = vmatprep.subr.bf16.mxu0 0
    %2737 = vmatpush2.bf16.msra.mxu0 0
    %2738 = vmatprep.subr.bf16.mxu0 0
    %2739 = vmatpush2.bf16.msra.mxu0 0
    %2740 = vmatprep.subr.bf16.mxu0 0
    %2741 = vmatpush2.bf16.msra.mxu0 0
    %2742 = vmatprep.subr.bf16.mxu0 0
    %2743 = vmatpush2.bf16.msra.mxu0 0
    %2744 = vmatprep.mubr.bf16.mxu0 0
    %2745 = vmatmul.mubr.bf16.gmra.mxu0 %v2519
    %v2746 = vpop.f32.mrf.mxu0
    %v2747 = vadd.f32 0.0, %v2746
    %v2748 = vpop.f32.mrf.mxu0
    %v2749 = vadd.f32 0.0, %v2748
    %v2750 = vpop.f32.mrf.mxu0
    %v2751 = vpop.f32.mrf.mxu0
    %2752 = vdwg.mxu0
    %2753 = vmatprep.subr.bf16.mxu0 %v2679
    %2754 = vmatpush1.bf16.msra.mxu0 %v2678
    %2755 = vmatprep.subr.bf16.mxu0 %v2675
    %2756 = vmatpush1.bf16.msra.mxu0 %v2674
    %2757 = vmatprep.subr.bf16.mxu0 %v2671
    %2758 = vmatpush1.bf16.msra.mxu0 %v2670
    %2759 = vmatprep.subr.bf16.mxu0 %v2667
    %2760 = vmatpush1.bf16.msra.mxu0 %v2666
    %2761 = vmatprep.subr.bf16.mxu0 %v2663
    %2762 = vmatpush1.bf16.msra.mxu0 %v2662
    %2763 = vmatprep.subr.bf16.mxu0 %v2659
    %2764 = vmatpush1.bf16.msra.mxu0 %v2658
    %2765 = vmatprep.subr.bf16.mxu0 %v2655
    %2766 = vmatpush1.bf16.msra.mxu0 %v2654
    %2767 = vmatprep.subr.bf16.mxu0 %v2651
    %2768 = vmatpush1.bf16.msra.mxu0 %v2650
    %2769 = vmatprep.subr.bf16.mxu0 0
    %2770 = vmatpush2.bf16.msra.mxu0 0
    %2771 = vmatprep.subr.bf16.mxu0 0
    %2772 = vmatpush2.bf16.msra.mxu0 0
    %2773 = vmatprep.subr.bf16.mxu0 0
    %2774 = vmatpush2.bf16.msra.mxu0 0
    %2775 = vmatprep.subr.bf16.mxu0 0
    %2776 = vmatpush2.bf16.msra.mxu0 0
    %2777 = vmatprep.subr.bf16.mxu0 0
    %2778 = vmatpush2.bf16.msra.mxu0 0
    %2779 = vmatprep.subr.bf16.mxu0 0
    %2780 = vmatpush2.bf16.msra.mxu0 0
    %2781 = vmatprep.subr.bf16.mxu0 0
    %2782 = vmatpush2.bf16.msra.mxu0 0
    %2783 = vmatprep.subr.bf16.mxu0 0
    %2784 = vmatpush2.bf16.msra.mxu0 0
    %2785 = vmatprep.mubr.bf16.mxu0 0
    %2786 = vmatmul.mubr.bf16.gmra.mxu0 %v2519
    %v2787 = vpop.f32.mrf.mxu0
    %v2788 = vadd.f32 0.0, %v2787
    %v2789 = vpop.f32.mrf.mxu0
    %v2790 = vadd.f32 0.0, %v2789
    %v2791 = vpop.f32.mrf.mxu0
    %v2792 = vpop.f32.mrf.mxu0
    %2793 = vdwg.mxu0
    %v2794 = vadd.f32 %v255, %v2747
    %v2795 = vadd.f32 %v257, %v2749
    %v2796 = vadd.f32 %v368, %v2788
    %v2797 = vadd.f32 %v370, %v2790
    %v2798 = vmul.f32 %v2794, 0.5
    %v2799 = vtanh.pop %v2798
    %v2800 = vmul.f32 %v2799, 0.5
    %v2801 = vadd.f32 %v2800, 0.5
    %v2802 = vmul.f32 %v2795, 0.5
    %v2803 = vtanh.pop %v2802
    %v2804 = vmul.f32 %v2803, 0.5
    %v2805 = vadd.f32 %v2804, 0.5
    %v2806 = vtanh.pop %v2796
    %v2807 = vmul.f32 %v2797, 0.5
    %v2808 = vtanh.pop %v2807
    %v2809 = vmul.f32 %v2808, 0.5
    %v2810 = vadd.f32 %v2809, 0.5
    %v2811 = vld [vmem:[#allocation3] sm:$0xff]
    %v2812 = vmul.f32 %v2805, %v2811
    %v2813 = vmul.f32 %v2801, %v2806
    %v2814 = vadd.f32 %v2812, %v2813
    %2815 = vst [vmem:[#allocation3] sm:$0xff] %v2814
    %v2816 = vtanh.pop %v2814
    %v2817 = vmul.f32 %v2810, %v2816
    %v2818 = vpack.c.bf16 %v2817, %v2817
    %2819 = vst [vmem:[#allocation2] sm:$0xf] %v2818
    %s2820 = smul.u32 0, 16
    %s2821 = sadd.s32 %s2820, 8
    %p2822 = scmp.lt.s32.totalorder %s2821, 8
    // Predicated region
    $region38: #{tpu_custom_call.1} parent=1 // pred_check
      %p2823 = pneg %p2822
    $region39: #{tpu_custom_call.1} parent=1 // pred_check_branch
      %2825 = sbr.rel (%p2823) target = $region41
    $region40: #{tpu_custom_call.1} parent=1 // pred_region
      %v2826 = vld [vmem:[#allocation2] sm:$0xf]
      %v2827 = vld [vmem:[#allocation7] sm:$0xff]
      %v2828 = vld [vmem:[#allocation7 + $0x8] sm:$0xff]
      %v2829 = vld [vmem:[#allocation7 + $0x10] sm:$0xff]
      %v2830 = vld [vmem:[#allocation7 + $0x18] sm:$0xff]
      %v2831 = vld [vmem:[#allocation7 + $0x20] sm:$0xff]
      %v2832 = vld [vmem:[#allocation7 + $0x28] sm:$0xff]
      %v2833 = vld [vmem:[#allocation7 + $0x30] sm:$0xff]
      %v2834 = vld [vmem:[#allocation7 + $0x38] sm:$0xff]
      %v2835 = vld [vmem:[#allocation7 + $0x40] sm:$0xff]
      %v2836 = vld [vmem:[#allocation7 + $0x48] sm:$0xff]
      %v2837 = vld [vmem:[#allocation7 + $0x50] sm:$0xff]
      %v2838 = vld [vmem:[#allocation7 + $0x58] sm:$0xff]
      %v2839 = vld [vmem:[#allocation7 + $0x60] sm:$0xff]
      %v2840 = vld [vmem:[#allocation7 + $0x68] sm:$0xff]
      %v2841 = vld [vmem:[#allocation7 + $0x70] sm:$0xff]
      %v2842 = vld [vmem:[#allocation7 + $0x78] sm:$0xff]
      %v2843 = vld [vmem:[#allocation7 + $0x80] sm:$0xff]
      %v2844 = vld [vmem:[#allocation7 + $0x88] sm:$0xff]
      %v2845 = vld [vmem:[#allocation7 + $0x90] sm:$0xff]
      %v2846 = vld [vmem:[#allocation7 + $0x98] sm:$0xff]
      %v2847 = vld [vmem:[#allocation7 + $0xa0] sm:$0xff]
      %v2848 = vld [vmem:[#allocation7 + $0xa8] sm:$0xff]
      %v2849 = vld [vmem:[#allocation7 + $0xb0] sm:$0xff]
      %v2850 = vld [vmem:[#allocation7 + $0xb8] sm:$0xff]
      %v2851 = vld [vmem:[#allocation7 + $0xc0] sm:$0xff]
      %v2852 = vld [vmem:[#allocation7 + $0xc8] sm:$0xff]
      %v2853 = vld [vmem:[#allocation7 + $0xd0] sm:$0xff]
      %v2854 = vld [vmem:[#allocation7 + $0xd8] sm:$0xff]
      %v2855 = vld [vmem:[#allocation7 + $0xe0] sm:$0xff]
      %v2856 = vld [vmem:[#allocation7 + $0xe8] sm:$0xff]
      %v2857 = vld [vmem:[#allocation7 + $0xf0] sm:$0xff]
      %v2858 = vld [vmem:[#allocation7 + $0xf8] sm:$0xff]
      %v2891 = vunpack.c.l.b16 %v2827
      %v2892 = vunpack.c.h.b16 %v2827
      %v2893 = vunpack.c.l.b16 %v2828
      %v2894 = vunpack.c.h.b16 %v2828
      %v2895 = vunpack.c.l.b16 %v2829
      %v2896 = vunpack.c.h.b16 %v2829
      %v2897 = vunpack.c.l.b16 %v2830
      %v2898 = vunpack.c.h.b16 %v2830
      %v2899 = vunpack.c.l.b16 %v2831
      %v2900 = vunpack.c.h.b16 %v2831
      %v2901 = vunpack.c.l.b16 %v2832
      %v2902 = vunpack.c.h.b16 %v2832
      %v2903 = vunpack.c.l.b16 %v2833
      %v2904 = vunpack.c.h.b16 %v2833
      %v2905 = vunpack.c.l.b16 %v2834
      %v2906 = vunpack.c.h.b16 %v2834
      %v2907 = vunpack.c.l.b16 %v2835
      %v2908 = vunpack.c.h.b16 %v2835
      %v2909 = vunpack.c.l.b16 %v2836
      %v2910 = vunpack.c.h.b16 %v2836
      %v2911 = vunpack.c.l.b16 %v2837
      %v2912 = vunpack.c.h.b16 %v2837
      %v2913 = vunpack.c.l.b16 %v2838
      %v2914 = vunpack.c.h.b16 %v2838
      %v2915 = vunpack.c.l.b16 %v2839
      %v2916 = vunpack.c.h.b16 %v2839
      %v2917 = vunpack.c.l.b16 %v2840
      %v2918 = vunpack.c.h.b16 %v2840
      %v2919 = vunpack.c.l.b16 %v2841
      %v2920 = vunpack.c.h.b16 %v2841
      %v2921 = vunpack.c.l.b16 %v2842
      %v2922 = vunpack.c.h.b16 %v2842
      %v2923 = vunpack.c.l.b16 %v2843
      %v2924 = vunpack.c.h.b16 %v2843
      %v2925 = vunpack.c.l.b16 %v2844
      %v2926 = vunpack.c.h.b16 %v2844
      %v2927 = vunpack.c.l.b16 %v2845
      %v2928 = vunpack.c.h.b16 %v2845
      %v2929 = vunpack.c.l.b16 %v2846
      %v2930 = vunpack.c.h.b16 %v2846
      %v2931 = vunpack.c.l.b16 %v2847
      %v2932 = vunpack.c.h.b16 %v2847
      %v2933 = vunpack.c.l.b16 %v2848
      %v2934 = vunpack.c.h.b16 %v2848
      %v2935 = vunpack.c.l.b16 %v2849
      %v2936 = vunpack.c.h.b16 %v2849
      %v2937 = vunpack.c.l.b16 %v2850
      %v2938 = vunpack.c.h.b16 %v2850
      %v2939 = vunpack.c.l.b16 %v2851
      %v2940 = vunpack.c.h.b16 %v2851
      %v2941 = vunpack.c.l.b16 %v2852
      %v2942 = vunpack.c.h.b16 %v2852
      %v2943 = vunpack.c.l.b16 %v2853
      %v2944 = vunpack.c.h.b16 %v2853
      %v2945 = vunpack.c.l.b16 %v2854
      %v2946 = vunpack.c.h.b16 %v2854
      %v2947 = vunpack.c.l.b16 %v2855
      %v2948 = vunpack.c.h.b16 %v2855
      %v2949 = vunpack.c.l.b16 %v2856
      %v2950 = vunpack.c.h.b16 %v2856
      %v2951 = vunpack.c.l.b16 %v2857
      %v2952 = vunpack.c.h.b16 %v2857
      %v2953 = vunpack.c.l.b16 %v2858
      %v2954 = vunpack.c.h.b16 %v2858
      %v2955 = vpack.c.b16 %v2895, %v2891
      %v2956 = vpack.c.b16 %v2896, %v2892
      %v2957 = vpack.c.b16 %v2897, %v2893
      %v2958 = vpack.c.b16 %v2898, %v2894
      %v2959 = vpack.c.b16 %v2903, %v2899
      %v2960 = vpack.c.b16 %v2904, %v2900
      %v2961 = vpack.c.b16 %v2905, %v2901
      %v2962 = vpack.c.b16 %v2906, %v2902
      %v2963 = vpack.c.b16 %v2911, %v2907
      %v2964 = vpack.c.b16 %v2912, %v2908
      %v2965 = vpack.c.b16 %v2913, %v2909
      %v2966 = vpack.c.b16 %v2914, %v2910
      %v2967 = vpack.c.b16 %v2919, %v2915
      %v2968 = vpack.c.b16 %v2920, %v2916
      %v2969 = vpack.c.b16 %v2921, %v2917
      %v2970 = vpack.c.b16 %v2922, %v2918
      %v2971 = vpack.c.b16 %v2927, %v2923
      %v2972 = vpack.c.b16 %v2928, %v2924
      %v2973 = vpack.c.b16 %v2929, %v2925
      %v2974 = vpack.c.b16 %v2930, %v2926
      %v2975 = vpack.c.b16 %v2935, %v2931
      %v2976 = vpack.c.b16 %v2936, %v2932
      %v2977 = vpack.c.b16 %v2937, %v2933
      %v2978 = vpack.c.b16 %v2938, %v2934
      %v2979 = vpack.c.b16 %v2943, %v2939
      %v2980 = vpack.c.b16 %v2944, %v2940
      %v2981 = vpack.c.b16 %v2945, %v2941
      %v2982 = vpack.c.b16 %v2946, %v2942
      %v2983 = vpack.c.b16 %v2951, %v2947
      %v2984 = vpack.c.b16 %v2952, %v2948
      %v2985 = vpack.c.b16 %v2953, %v2949
      %v2986 = vpack.c.b16 %v2954, %v2950
      %3019 = vmatprep.subr.bf16.mxu0 %v2984
      %3020 = vmatpush1.bf16.msra.mxu0 %v2983
      %3021 = vmatprep.subr.bf16.mxu0 %v2980
      %3022 = vmatpush1.bf16.msra.mxu0 %v2979
      %3023 = vmatprep.subr.bf16.mxu0 %v2976
      %3024 = vmatpush1.bf16.msra.mxu0 %v2975
      %3025 = vmatprep.subr.bf16.mxu0 %v2972
      %3026 = vmatpush1.bf16.msra.mxu0 %v2971
      %3027 = vmatprep.subr.bf16.mxu0 %v2968
      %3028 = vmatpush1.bf16.msra.mxu0 %v2967
      %3029 = vmatprep.subr.bf16.mxu0 %v2964
      %3030 = vmatpush1.bf16.msra.mxu0 %v2963
      %3031 = vmatprep.subr.bf16.mxu0 %v2960
      %3032 = vmatpush1.bf16.msra.mxu0 %v2959
      %3033 = vmatprep.subr.bf16.mxu0 %v2956
      %3034 = vmatpush1.bf16.msra.mxu0 %v2955
      %3035 = vmatprep.subr.bf16.mxu0 0
      %3036 = vmatpush2.bf16.msra.mxu0 0
      %3037 = vmatprep.subr.bf16.mxu0 0
      %3038 = vmatpush2.bf16.msra.mxu0 0
      %3039 = vmatprep.subr.bf16.mxu0 0
      %3040 = vmatpush2.bf16.msra.mxu0 0
      %3041 = vmatprep.subr.bf16.mxu0 0
      %3042 = vmatpush2.bf16.msra.mxu0 0
      %3043 = vmatprep.subr.bf16.mxu0 0
      %3044 = vmatpush2.bf16.msra.mxu0 0
      %3045 = vmatprep.subr.bf16.mxu0 0
      %3046 = vmatpush2.bf16.msra.mxu0 0
      %3047 = vmatprep.subr.bf16.mxu0 0
      %3048 = vmatpush2.bf16.msra.mxu0 0
      %3049 = vmatprep.subr.bf16.mxu0 0
      %3050 = vmatpush2.bf16.msra.mxu0 0
      %3051 = vmatprep.mubr.bf16.mxu0 0
      %3052 = vmatmul.mubr.bf16.gmra.mxu0 %v2826
      %v3053 = vpop.f32.mrf.mxu0
      %v3054 = vadd.f32 0.0, %v3053
      %v3055 = vpop.f32.mrf.mxu0
      %v3056 = vadd.f32 0.0, %v3055
      %v3057 = vpop.f32.mrf.mxu0
      %v3058 = vpop.f32.mrf.mxu0
      %3059 = vdwg.mxu0
      %3060 = vmatprep.subr.bf16.mxu0 %v2986
      %3061 = vmatpush1.bf16.msra.mxu0 %v2985
      %3062 = vmatprep.subr.bf16.mxu0 %v2982
      %3063 = vmatpush1.bf16.msra.mxu0 %v2981
      %3064 = vmatprep.subr.bf16.mxu0 %v2978
      %3065 = vmatpush1.bf16.msra.mxu0 %v2977
      %3066 = vmatprep.subr.bf16.mxu0 %v2974
      %3067 = vmatpush1.bf16.msra.mxu0 %v2973
      %3068 = vmatprep.subr.bf16.mxu0 %v2970
      %3069 = vmatpush1.bf16.msra.mxu0 %v2969
      %3070 = vmatprep.subr.bf16.mxu0 %v2966
      %3071 = vmatpush1.bf16.msra.mxu0 %v2965
      %3072 = vmatprep.subr.bf16.mxu0 %v2962
      %3073 = vmatpush1.bf16.msra.mxu0 %v2961
      %3074 = vmatprep.subr.bf16.mxu0 %v2958
      %3075 = vmatpush1.bf16.msra.mxu0 %v2957
      %3076 = vmatprep.subr.bf16.mxu0 0
      %3077 = vmatpush2.bf16.msra.mxu0 0
      %3078 = vmatprep.subr.bf16.mxu0 0
      %3079 = vmatpush2.bf16.msra.mxu0 0
      %3080 = vmatprep.subr.bf16.mxu0 0
      %3081 = vmatpush2.bf16.msra.mxu0 0
      %3082 = vmatprep.subr.bf16.mxu0 0
      %3083 = vmatpush2.bf16.msra.mxu0 0
      %3084 = vmatprep.subr.bf16.mxu0 0
      %3085 = vmatpush2.bf16.msra.mxu0 0
      %3086 = vmatprep.subr.bf16.mxu0 0
      %3087 = vmatpush2.bf16.msra.mxu0 0
      %3088 = vmatprep.subr.bf16.mxu0 0
      %3089 = vmatpush2.bf16.msra.mxu0 0
      %3090 = vmatprep.subr.bf16.mxu0 0
      %3091 = vmatpush2.bf16.msra.mxu0 0
      %3092 = vmatprep.mubr.bf16.mxu0 0
      %3093 = vmatmul.mubr.bf16.gmra.mxu0 %v2826
      %v3094 = vpop.f32.mrf.mxu0
      %v3095 = vadd.f32 0.0, %v3094
      %v3096 = vpop.f32.mrf.mxu0
      %v3097 = vadd.f32 0.0, %v3096
      %v3098 = vpop.f32.mrf.mxu0
      %v3099 = vpop.f32.mrf.mxu0
      %3100 = vdwg.mxu0
      %v3101 = vadd.f32 %v261, %v3054
      %v3102 = vadd.f32 %v263, %v3056
      %v3103 = vadd.f32 %v374, %v3095
      %v3104 = vadd.f32 %v376, %v3097
      %v3105 = vmul.f32 %v3101, 0.5
      %v3106 = vtanh.pop %v3105
      %v3107 = vmul.f32 %v3106, 0.5
      %v3108 = vadd.f32 %v3107, 0.5
      %v3109 = vmul.f32 %v3102, 0.5
      %v3110 = vtanh.pop %v3109
      %v3111 = vmul.f32 %v3110, 0.5
      %v3112 = vadd.f32 %v3111, 0.5
      %v3113 = vtanh.pop %v3103
      %v3114 = vmul.f32 %v3104, 0.5
      %v3115 = vtanh.pop %v3114
      %v3116 = vmul.f32 %v3115, 0.5
      %v3117 = vadd.f32 %v3116, 0.5
      %v3118 = vld [vmem:[#allocation3] sm:$0xff]
      %v3119 = vmul.f32 %v3112, %v3118
      %v3120 = vmul.f32 %v3108, %v3113
      %v3121 = vadd.f32 %v3119, %v3120
      %3122 = vst [vmem:[#allocation3] sm:$0xff] %v3121
      %v3123 = vtanh.pop %v3121
      %v3124 = vmul.f32 %v3117, %v3123
      %v3125 = vpack.c.bf16 %v3124, %v3124
      %3126 = vst [vmem:[#allocation2] sm:$0xf] %v3125
    $region41: #{tpu_custom_call.1} parent=1 // pred_fallthru
      _
    %s3127 = sadd.s32 %s2820, 9
    %p3128 = scmp.lt.s32.totalorder %s3127, 8
    // Predicated region
    $region42: #{tpu_custom_call.1} parent=1 // pred_check
      %p3129 = pneg %p3128
    $region43: #{tpu_custom_call.1} parent=1 // pred_check_branch
      %3131 = sbr.rel (%p3129) target = $region45
    $region44: #{tpu_custom_call.1} parent=1 // pred_region
      %v3132 = vld [vmem:[#allocation2] sm:$0xf]
      %v3133 = vld [vmem:[#allocation7] sm:$0xff]
      %v3134 = vld [vmem:[#allocation7 + $0x8] sm:$0xff]
      %v3135 = vld [vmem:[#allocation7 + $0x10] sm:$0xff]
      %v3136 = vld [vmem:[#allocation7 + $0x18] sm:$0xff]
      %v3137 = vld [vmem:[#allocation7 + $0x20] sm:$0xff]
      %v3138 = vld [vmem:[#allocation7 + $0x28] sm:$0xff]
      %v3139 = vld [vmem:[#allocation7 + $0x30] sm:$0xff]
      %v3140 = vld [vmem:[#allocation7 + $0x38] sm:$0xff]
      %v3141 = vld [vmem:[#allocation7 + $0x40] sm:$0xff]
      %v3142 = vld [vmem:[#allocation7 + $0x48] sm:$0xff]
      %v3143 = vld [vmem:[#allocation7 + $0x50] sm:$0xff]
      %v3144 = vld [vmem:[#allocation7 + $0x58] sm:$0xff]
      %v3145 = vld [vmem:[#allocation7 + $0x60] sm:$0xff]
      %v3146 = vld [vmem:[#allocation7 + $0x68] sm:$0xff]
      %v3147 = vld [vmem:[#allocation7 + $0x70] sm:$0xff]
      %v3148 = vld [vmem:[#allocation7 + $0x78] sm:$0xff]
      %v3149 = vld [vmem:[#allocation7 + $0x80] sm:$0xff]
      %v3150 = vld [vmem:[#allocation7 + $0x88] sm:$0xff]
      %v3151 = vld [vmem:[#allocation7 + $0x90] sm:$0xff]
      %v3152 = vld [vmem:[#allocation7 + $0x98] sm:$0xff]
      %v3153 = vld [vmem:[#allocation7 + $0xa0] sm:$0xff]
      %v3154 = vld [vmem:[#allocation7 + $0xa8] sm:$0xff]
      %v3155 = vld [vmem:[#allocation7 + $0xb0] sm:$0xff]
      %v3156 = vld [vmem:[#allocation7 + $0xb8] sm:$0xff]
      %v3157 = vld [vmem:[#allocation7 + $0xc0] sm:$0xff]
      %v3158 = vld [vmem:[#allocation7 + $0xc8] sm:$0xff]
      %v3159 = vld [vmem:[#allocation7 + $0xd0] sm:$0xff]
      %v3160 = vld [vmem:[#allocation7 + $0xd8] sm:$0xff]
      %v3161 = vld [vmem:[#allocation7 + $0xe0] sm:$0xff]
      %v3162 = vld [vmem:[#allocation7 + $0xe8] sm:$0xff]
      %v3163 = vld [vmem:[#allocation7 + $0xf0] sm:$0xff]
      %v3164 = vld [vmem:[#allocation7 + $0xf8] sm:$0xff]
      %v3197 = vunpack.c.l.b16 %v3133
      %v3198 = vunpack.c.h.b16 %v3133
      %v3199 = vunpack.c.l.b16 %v3134
      %v3200 = vunpack.c.h.b16 %v3134
      %v3201 = vunpack.c.l.b16 %v3135
      %v3202 = vunpack.c.h.b16 %v3135
      %v3203 = vunpack.c.l.b16 %v3136
      %v3204 = vunpack.c.h.b16 %v3136
      %v3205 = vunpack.c.l.b16 %v3137
      %v3206 = vunpack.c.h.b16 %v3137
      %v3207 = vunpack.c.l.b16 %v3138
      %v3208 = vunpack.c.h.b16 %v3138
      %v3209 = vunpack.c.l.b16 %v3139
      %v3210 = vunpack.c.h.b16 %v3139
      %v3211 = vunpack.c.l.b16 %v3140
      %v3212 = vunpack.c.h.b16 %v3140
      %v3213 = vunpack.c.l.b16 %v3141
      %v3214 = vunpack.c.h.b16 %v3141
      %v3215 = vunpack.c.l.b16 %v3142
      %v3216 = vunpack.c.h.b16 %v3142
      %v3217 = vunpack.c.l.b16 %v3143
      %v3218 = vunpack.c.h.b16 %v3143
      %v3219 = vunpack.c.l.b16 %v3144
      %v3220 = vunpack.c.h.b16 %v3144
      %v3221 = vunpack.c.l.b16 %v3145
      %v3222 = vunpack.c.h.b16 %v3145
      %v3223 = vunpack.c.l.b16 %v3146
      %v3224 = vunpack.c.h.b16 %v3146
      %v3225 = vunpack.c.l.b16 %v3147
      %v3226 = vunpack.c.h.b16 %v3147
      %v3227 = vunpack.c.l.b16 %v3148
      %v3228 = vunpack.c.h.b16 %v3148
      %v3229 = vunpack.c.l.b16 %v3149
      %v3230 = vunpack.c.h.b16 %v3149
      %v3231 = vunpack.c.l.b16 %v3150
      %v3232 = vunpack.c.h.b16 %v3150
      %v3233 = vunpack.c.l.b16 %v3151
      %v3234 = vunpack.c.h.b16 %v3151
      %v3235 = vunpack.c.l.b16 %v3152
      %v3236 = vunpack.c.h.b16 %v3152
      %v3237 = vunpack.c.l.b16 %v3153
      %v3238 = vunpack.c.h.b16 %v3153
      %v3239 = vunpack.c.l.b16 %v3154
      %v3240 = vunpack.c.h.b16 %v3154
      %v3241 = vunpack.c.l.b16 %v3155
      %v3242 = vunpack.c.h.b16 %v3155
      %v3243 = vunpack.c.l.b16 %v3156
      %v3244 = vunpack.c.h.b16 %v3156
      %v3245 = vunpack.c.l.b16 %v3157
      %v3246 = vunpack.c.h.b16 %v3157
      %v3247 = vunpack.c.l.b16 %v3158
      %v3248 = vunpack.c.h.b16 %v3158
      %v3249 = vunpack.c.l.b16 %v3159
      %v3250 = vunpack.c.h.b16 %v3159
      %v3251 = vunpack.c.l.b16 %v3160
      %v3252 = vunpack.c.h.b16 %v3160
      %v3253 = vunpack.c.l.b16 %v3161
      %v3254 = vunpack.c.h.b16 %v3161
      %v3255 = vunpack.c.l.b16 %v3162
      %v3256 = vunpack.c.h.b16 %v3162
      %v3257 = vunpack.c.l.b16 %v3163
      %v3258 = vunpack.c.h.b16 %v3163
      %v3259 = vunpack.c.l.b16 %v3164
      %v3260 = vunpack.c.h.b16 %v3164
      %v3261 = vpack.c.b16 %v3201, %v3197
      %v3262 = vpack.c.b16 %v3202, %v3198
      %v3263 = vpack.c.b16 %v3203, %v3199
      %v3264 = vpack.c.b16 %v3204, %v3200
      %v3265 = vpack.c.b16 %v3209, %v3205
      %v3266 = vpack.c.b16 %v3210, %v3206
      %v3267 = vpack.c.b16 %v3211, %v3207
      %v3268 = vpack.c.b16 %v3212, %v3208
      %v3269 = vpack.c.b16 %v3217, %v3213
      %v3270 = vpack.c.b16 %v3218, %v3214
      %v3271 = vpack.c.b16 %v3219, %v3215
      %v3272 = vpack.c.b16 %v3220, %v3216
      %v3273 = vpack.c.b16 %v3225, %v3221
      %v3274 = vpack.c.b16 %v3226, %v3222
      %v3275 = vpack.c.b16 %v3227, %v3223
      %v3276 = vpack.c.b16 %v3228, %v3224
      %v3277 = vpack.c.b16 %v3233, %v3229
      %v3278 = vpack.c.b16 %v3234, %v3230
      %v3279 = vpack.c.b16 %v3235, %v3231
      %v3280 = vpack.c.b16 %v3236, %v3232
      %v3281 = vpack.c.b16 %v3241, %v3237
      %v3282 = vpack.c.b16 %v3242, %v3238
      %v3283 = vpack.c.b16 %v3243, %v3239
      %v3284 = vpack.c.b16 %v3244, %v3240
      %v3285 = vpack.c.b16 %v3249, %v3245
      %v3286 = vpack.c.b16 %v3250, %v3246
      %v3287 = vpack.c.b16 %v3251, %v3247
      %v3288 = vpack.c.b16 %v3252, %v3248
      %v3289 = vpack.c.b16 %v3257, %v3253
      %v3290 = vpack.c.b16 %v3258, %v3254
      %v3291 = vpack.c.b16 %v3259, %v3255
      %v3292 = vpack.c.b16 %v3260, %v3256
      %3325 = vmatprep.subr.bf16.mxu0 %v3290
      %3326 = vmatpush1.bf16.msra.mxu0 %v3289
      %3327 = vmatprep.subr.bf16.mxu0 %v3286
      %3328 = vmatpush1.bf16.msra.mxu0 %v3285
      %3329 = vmatprep.subr.bf16.mxu0 %v3282
      %3330 = vmatpush1.bf16.msra.mxu0 %v3281
      %3331 = vmatprep.subr.bf16.mxu0 %v3278
      %3332 = vmatpush1.bf16.msra.mxu0 %v3277
      %3333 = vmatprep.subr.bf16.mxu0 %v3274
      %3334 = vmatpush1.bf16.msra.mxu0 %v3273
      %3335 = vmatprep.subr.bf16.mxu0 %v3270
      %3336 = vmatpush1.bf16.msra.mxu0 %v3269
      %3337 = vmatprep.subr.bf16.mxu0 %v3266
      %3338 = vmatpush1.bf16.msra.mxu0 %v3265
      %3339 = vmatprep.subr.bf16.mxu0 %v3262
      %3340 = vmatpush1.bf16.msra.mxu0 %v3261
      %3341 = vmatprep.subr.bf16.mxu0 0
      %3342 = vmatpush2.bf16.msra.mxu0 0
      %3343 = vmatprep.subr.bf16.mxu0 0
      %3344 = vmatpush2.bf16.msra.mxu0 0
      %3345 = vmatprep.subr.bf16.mxu0 0
      %3346 = vmatpush2.bf16.msra.mxu0 0
      %3347 = vmatprep.subr.bf16.mxu0 0
      %3348 = vmatpush2.bf16.msra.mxu0 0
      %3349 = vmatprep.subr.bf16.mxu0 0
      %3350 = vmatpush2.bf16.msra.mxu0 0
      %3351 = vmatprep.subr.bf16.mxu0 0
      %3352 = vmatpush2.bf16.msra.mxu0 0
      %3353 = vmatprep.subr.bf16.mxu0 0
      %3354 = vmatpush2.bf16.msra.mxu0 0
      %3355 = vmatprep.subr.bf16.mxu0 0
      %3356 = vmatpush2.bf16.msra.mxu0 0
      %3357 = vmatprep.mubr.bf16.mxu0 0
      %3358 = vmatmul.mubr.bf16.gmra.mxu0 %v3132
      %v3359 = vpop.f32.mrf.mxu0
      %v3360 = vadd.f32 0.0, %v3359
      %v3361 = vpop.f32.mrf.mxu0
      %v3362 = vadd.f32 0.0, %v3361
      %v3363 = vpop.f32.mrf.mxu0
      %v3364 = vpop.f32.mrf.mxu0
      %3365 = vdwg.mxu0
      %3366 = vmatprep.subr.bf16.mxu0 %v3292
      %3367 = vmatpush1.bf16.msra.mxu0 %v3291
      %3368 = vmatprep.subr.bf16.mxu0 %v3288
      %3369 = vmatpush1.bf16.msra.mxu0 %v3287
      %3370 = vmatprep.subr.bf16.mxu0 %v3284
      %3371 = vmatpush1.bf16.msra.mxu0 %v3283
      %3372 = vmatprep.subr.bf16.mxu0 %v3280
      %3373 = vmatpush1.bf16.msra.mxu0 %v3279
      %3374 = vmatprep.subr.bf16.mxu0 %v3276
      %3375 = vmatpush1.bf16.msra.mxu0 %v3275
      %3376 = vmatprep.subr.bf16.mxu0 %v3272
      %3377 = vmatpush1.bf16.msra.mxu0 %v3271
      %3378 = vmatprep.subr.bf16.mxu0 %v3268
      %3379 = vmatpush1.bf16.msra.mxu0 %v3267
      %3380 = vmatprep.subr.bf16.mxu0 %v3264
      %3381 = vmatpush1.bf16.msra.mxu0 %v3263
      %3382 = vmatprep.subr.bf16.mxu0 0
      %3383 = vmatpush2.bf16.msra.mxu0 0
      %3384 = vmatprep.subr.bf16.mxu0 0
      %3385 = vmatpush2.bf16.msra.mxu0 0
      %3386 = vmatprep.subr.bf16.mxu0 0
      %3387 = vmatpush2.bf16.msra.mxu0 0
      %3388 = vmatprep.subr.bf16.mxu0 0
      %3389 = vmatpush2.bf16.msra.mxu0 0
      %3390 = vmatprep.subr.bf16.mxu0 0
      %3391 = vmatpush2.bf16.msra.mxu0 0
      %3392 = vmatprep.subr.bf16.mxu0 0
      %3393 = vmatpush2.bf16.msra.mxu0 0
      %3394 = vmatprep.subr.bf16.mxu0 0
      %3395 = vmatpush2.bf16.msra.mxu0 0
      %3396 = vmatprep.subr.bf16.mxu0 0
      %3397 = vmatpush2.bf16.msra.mxu0 0
      %3398 = vmatprep.mubr.bf16.mxu0 0
      %3399 = vmatmul.mubr.bf16.gmra.mxu0 %v3132
      %v3400 = vpop.f32.mrf.mxu0
      %v3401 = vadd.f32 0.0, %v3400
      %v3402 = vpop.f32.mrf.mxu0
      %v3403 = vadd.f32 0.0, %v3402
      %v3404 = vpop.f32.mrf.mxu0
      %v3405 = vpop.f32.mrf.mxu0
      %3406 = vdwg.mxu0
      %v3407 = vadd.f32 %v265, %v3360
      %v3408 = vadd.f32 %v267, %v3362
      %v3409 = vadd.f32 %v378, %v3401
      %v3410 = vadd.f32 %v380, %v3403
      %v3411 = vmul.f32 %v3407, 0.5
      %v3412 = vtanh.pop %v3411
      %v3413 = vmul.f32 %v3412, 0.5
      %v3414 = vadd.f32 %v3413, 0.5
      %v3415 = vmul.f32 %v3408, 0.5
      %v3416 = vtanh.pop %v3415
      %v3417 = vmul.f32 %v3416, 0.5
      %v3418 = vadd.f32 %v3417, 0.5
      %v3419 = vtanh.pop %v3409
      %v3420 = vmul.f32 %v3410, 0.5
      %v3421 = vtanh.pop %v3420
      %v3422 = vmul.f32 %v3421, 0.5
      %v3423 = vadd.f32 %v3422, 0.5
      %v3424 = vld [vmem:[#allocation3] sm:$0xff]
      %v3425 = vmul.f32 %v3418, %v3424
      %v3426 = vmul.f32 %v3414, %v3419
      %v3427 = vadd.f32 %v3425, %v3426
      %3428 = vst [vmem:[#allocation3] sm:$0xff] %v3427
      %v3429 = vtanh.pop %v3427
      %v3430 = vmul.f32 %v3423, %v3429
      %v3431 = vpack.c.bf16 %v3430, %v3430
      %3432 = vst [vmem:[#allocation2] sm:$0xf] %v3431
    $region45: #{tpu_custom_call.1} parent=1 // pred_fallthru
      _
    %s3433 = sadd.s32 %s2820, 10
    %p3434 = scmp.lt.s32.totalorder %s3433, 8
    // Predicated region
    $region46: #{tpu_custom_call.1} parent=1 // pred_check
      %p3435 = pneg %p3434
    $region47: #{tpu_custom_call.1} parent=1 // pred_check_branch
      %3437 = sbr.rel (%p3435) target = $region49
    $region48: #{tpu_custom_call.1} parent=1 // pred_region
      %v3438 = vld [vmem:[#allocation2] sm:$0xf]
      %v3439 = vld [vmem:[#allocation7] sm:$0xff]
      %v3440 = vld [vmem:[#allocation7 + $0x8] sm:$0xff]
      %v3441 = vld [vmem:[#allocation7 + $0x10] sm:$0xff]
      %v3442 = vld [vmem:[#allocation7 + $0x18] sm:$0xff]
      %v3443 = vld [vmem:[#allocation7 + $0x20] sm:$0xff]
      %v3444 = vld [vmem:[#allocation7 + $0x28] sm:$0xff]
      %v3445 = vld [vmem:[#allocation7 + $0x30] sm:$0xff]
      %v3446 = vld [vmem:[#allocation7 + $0x38] sm:$0xff]
      %v3447 = vld [vmem:[#allocation7 + $0x40] sm:$0xff]
      %v3448 = vld [vmem:[#allocation7 + $0x48] sm:$0xff]
      %v3449 = vld [vmem:[#allocation7 + $0x50] sm:$0xff]
      %v3450 = vld [vmem:[#allocation7 + $0x58] sm:$0xff]
      %v3451 = vld [vmem:[#allocation7 + $0x60] sm:$0xff]
      %v3452 = vld [vmem:[#allocation7 + $0x68] sm:$0xff]
      %v3453 = vld [vmem:[#allocation7 + $0x70] sm:$0xff]
      %v3454 = vld [vmem:[#allocation7 + $0x78] sm:$0xff]
      %v3455 = vld [vmem:[#allocation7 + $0x80] sm:$0xff]
      %v3456 = vld [vmem:[#allocation7 + $0x88] sm:$0xff]
      %v3457 = vld [vmem:[#allocation7 + $0x90] sm:$0xff]
      %v3458 = vld [vmem:[#allocation7 + $0x98] sm:$0xff]
      %v3459 = vld [vmem:[#allocation7 + $0xa0] sm:$0xff]
      %v3460 = vld [vmem:[#allocation7 + $0xa8] sm:$0xff]
      %v3461 = vld [vmem:[#allocation7 + $0xb0] sm:$0xff]
      %v3462 = vld [vmem:[#allocation7 + $0xb8] sm:$0xff]
      %v3463 = vld [vmem:[#allocation7 + $0xc0] sm:$0xff]
      %v3464 = vld [vmem:[#allocation7 + $0xc8] sm:$0xff]
      %v3465 = vld [vmem:[#allocation7 + $0xd0] sm:$0xff]
      %v3466 = vld [vmem:[#allocation7 + $0xd8] sm:$0xff]
      %v3467 = vld [vmem:[#allocation7 + $0xe0] sm:$0xff]
      %v3468 = vld [vmem:[#allocation7 + $0xe8] sm:$0xff]
      %v3469 = vld [vmem:[#allocation7 + $0xf0] sm:$0xff]
      %v3470 = vld [vmem:[#allocation7 + $0xf8] sm:$0xff]
      %v3503 = vunpack.c.l.b16 %v3439
      %v3504 = vunpack.c.h.b16 %v3439
      %v3505 = vunpack.c.l.b16 %v3440
      %v3506 = vunpack.c.h.b16 %v3440
      %v3507 = vunpack.c.l.b16 %v3441
      %v3508 = vunpack.c.h.b16 %v3441
      %v3509 = vunpack.c.l.b16 %v3442
      %v3510 = vunpack.c.h.b16 %v3442
      %v3511 = vunpack.c.l.b16 %v3443
      %v3512 = vunpack.c.h.b16 %v3443
      %v3513 = vunpack.c.l.b16 %v3444
      %v3514 = vunpack.c.h.b16 %v3444
      %v3515 = vunpack.c.l.b16 %v3445
      %v3516 = vunpack.c.h.b16 %v3445
      %v3517 = vunpack.c.l.b16 %v3446
      %v3518 = vunpack.c.h.b16 %v3446
      %v3519 = vunpack.c.l.b16 %v3447
      %v3520 = vunpack.c.h.b16 %v3447
      %v3521 = vunpack.c.l.b16 %v3448
      %v3522 = vunpack.c.h.b16 %v3448
      %v3523 = vunpack.c.l.b16 %v3449
      %v3524 = vunpack.c.h.b16 %v3449
      %v3525 = vunpack.c.l.b16 %v3450
      %v3526 = vunpack.c.h.b16 %v3450
      %v3527 = vunpack.c.l.b16 %v3451
      %v3528 = vunpack.c.h.b16 %v3451
      %v3529 = vunpack.c.l.b16 %v3452
      %v3530 = vunpack.c.h.b16 %v3452
      %v3531 = vunpack.c.l.b16 %v3453
      %v3532 = vunpack.c.h.b16 %v3453
      %v3533 = vunpack.c.l.b16 %v3454
      %v3534 = vunpack.c.h.b16 %v3454
      %v3535 = vunpack.c.l.b16 %v3455
      %v3536 = vunpack.c.h.b16 %v3455
      %v3537 = vunpack.c.l.b16 %v3456
      %v3538 = vunpack.c.h.b16 %v3456
      %v3539 = vunpack.c.l.b16 %v3457
      %v3540 = vunpack.c.h.b16 %v3457
      %v3541 = vunpack.c.l.b16 %v3458
      %v3542 = vunpack.c.h.b16 %v3458
      %v3543 = vunpack.c.l.b16 %v3459
      %v3544 = vunpack.c.h.b16 %v3459
      %v3545 = vunpack.c.l.b16 %v3460
      %v3546 = vunpack.c.h.b16 %v3460
      %v3547 = vunpack.c.l.b16 %v3461
      %v3548 = vunpack.c.h.b16 %v3461
      %v3549 = vunpack.c.l.b16 %v3462
      %v3550 = vunpack.c.h.b16 %v3462
      %v3551 = vunpack.c.l.b16 %v3463
      %v3552 = vunpack.c.h.b16 %v3463
      %v3553 = vunpack.c.l.b16 %v3464
      %v3554 = vunpack.c.h.b16 %v3464
      %v3555 = vunpack.c.l.b16 %v3465
      %v3556 = vunpack.c.h.b16 %v3465
      %v3557 = vunpack.c.l.b16 %v3466
      %v3558 = vunpack.c.h.b16 %v3466
      %v3559 = vunpack.c.l.b16 %v3467
      %v3560 = vunpack.c.h.b16 %v3467
      %v3561 = vunpack.c.l.b16 %v3468
      %v3562 = vunpack.c.h.b16 %v3468
      %v3563 = vunpack.c.l.b16 %v3469
      %v3564 = vunpack.c.h.b16 %v3469
      %v3565 = vunpack.c.l.b16 %v3470
      %v3566 = vunpack.c.h.b16 %v3470
      %v3567 = vpack.c.b16 %v3507, %v3503
      %v3568 = vpack.c.b16 %v3508, %v3504
      %v3569 = vpack.c.b16 %v3509, %v3505
      %v3570 = vpack.c.b16 %v3510, %v3506
      %v3571 = vpack.c.b16 %v3515, %v3511
      %v3572 = vpack.c.b16 %v3516, %v3512
      %v3573 = vpack.c.b16 %v3517, %v3513
      %v3574 = vpack.c.b16 %v3518, %v3514
      %v3575 = vpack.c.b16 %v3523, %v3519
      %v3576 = vpack.c.b16 %v3524, %v3520
      %v3577 = vpack.c.b16 %v3525, %v3521
      %v3578 = vpack.c.b16 %v3526, %v3522
      %v3579 = vpack.c.b16 %v3531, %v3527
      %v3580 = vpack.c.b16 %v3532, %v3528
      %v3581 = vpack.c.b16 %v3533, %v3529
      %v3582 = vpack.c.b16 %v3534, %v3530
      %v3583 = vpack.c.b16 %v3539, %v3535
      %v3584 = vpack.c.b16 %v3540, %v3536
      %v3585 = vpack.c.b16 %v3541, %v3537
      %v3586 = vpack.c.b16 %v3542, %v3538
      %v3587 = vpack.c.b16 %v3547, %v3543
      %v3588 = vpack.c.b16 %v3548, %v3544
      %v3589 = vpack.c.b16 %v3549, %v3545
      %v3590 = vpack.c.b16 %v3550, %v3546
      %v3591 = vpack.c.b16 %v3555, %v3551
      %v3592 = vpack.c.b16 %v3556, %v3552
      %v3593 = vpack.c.b16 %v3557, %v3553
      %v3594 = vpack.c.b16 %v3558, %v3554
      %v3595 = vpack.c.b16 %v3563, %v3559
      %v3596 = vpack.c.b16 %v3564, %v3560
      %v3597 = vpack.c.b16 %v3565, %v3561
      %v3598 = vpack.c.b16 %v3566, %v3562
      %3631 = vmatprep.subr.bf16.mxu0 %v3596
      %3632 = vmatpush1.bf16.msra.mxu0 %v3595
      %3633 = vmatprep.subr.bf16.mxu0 %v3592
      %3634 = vmatpush1.bf16.msra.mxu0 %v3591
      %3635 = vmatprep.subr.bf16.mxu0 %v3588
      %3636 = vmatpush1.bf16.msra.mxu0 %v3587
      %3637 = vmatprep.subr.bf16.mxu0 %v3584
      %3638 = vmatpush1.bf16.msra.mxu0 %v3583
      %3639 = vmatprep.subr.bf16.mxu0 %v3580
      %3640 = vmatpush1.bf16.msra.mxu0 %v3579
      %3641 = vmatprep.subr.bf16.mxu0 %v3576
      %3642 = vmatpush1.bf16.msra.mxu0 %v3575
      %3643 = vmatprep.subr.bf16.mxu0 %v3572
      %3644 = vmatpush1.bf16.msra.mxu0 %v3571
      %3645 = vmatprep.subr.bf16.mxu0 %v3568
      %3646 = vmatpush1.bf16.msra.mxu0 %v3567
      %3647 = vmatprep.subr.bf16.mxu0 0
      %3648 = vmatpush2.bf16.msra.mxu0 0
      %3649 = vmatprep.subr.bf16.mxu0 0
      %3650 = vmatpush2.bf16.msra.mxu0 0
      %3651 = vmatprep.subr.bf16.mxu0 0
      %3652 = vmatpush2.bf16.msra.mxu0 0
      %3653 = vmatprep.subr.bf16.mxu0 0
      %3654 = vmatpush2.bf16.msra.mxu0 0
      %3655 = vmatprep.subr.bf16.mxu0 0
      %3656 = vmatpush2.bf16.msra.mxu0 0
      %3657 = vmatprep.subr.bf16.mxu0 0
      %3658 = vmatpush2.bf16.msra.mxu0 0
      %3659 = vmatprep.subr.bf16.mxu0 0
      %3660 = vmatpush2.bf16.msra.mxu0 0
      %3661 = vmatprep.subr.bf16.mxu0 0
      %3662 = vmatpush2.bf16.msra.mxu0 0
      %3663 = vmatprep.mubr.bf16.mxu0 0
      %3664 = vmatmul.mubr.bf16.gmra.mxu0 %v3438
      %v3665 = vpop.f32.mrf.mxu0
      %v3666 = vadd.f32 0.0, %v3665
      %v3667 = vpop.f32.mrf.mxu0
      %v3668 = vadd.f32 0.0, %v3667
      %v3669 = vpop.f32.mrf.mxu0
      %v3670 = vpop.f32.mrf.mxu0
      %3671 = vdwg.mxu0
      %3672 = vmatprep.subr.bf16.mxu0 %v3598
      %3673 = vmatpush1.bf16.msra.mxu0 %v3597
      %3674 = vmatprep.subr.bf16.mxu0 %v3594
      %3675 = vmatpush1.bf16.msra.mxu0 %v3593
      %3676 = vmatprep.subr.bf16.mxu0 %v3590
      %3677 = vmatpush1.bf16.msra.mxu0 %v3589
      %3678 = vmatprep.subr.bf16.mxu0 %v3586
      %3679 = vmatpush1.bf16.msra.mxu0 %v3585
      %3680 = vmatprep.subr.bf16.mxu0 %v3582
      %3681 = vmatpush1.bf16.msra.mxu0 %v3581
      %3682 = vmatprep.subr.bf16.mxu0 %v3578
      %3683 = vmatpush1.bf16.msra.mxu0 %v3577
      %3684 = vmatprep.subr.bf16.mxu0 %v3574
      %3685 = vmatpush1.bf16.msra.mxu0 %v3573
      %3686 = vmatprep.subr.bf16.mxu0 %v3570
      %3687 = vmatpush1.bf16.msra.mxu0 %v3569
      %3688 = vmatprep.subr.bf16.mxu0 0
      %3689 = vmatpush2.bf16.msra.mxu0 0
      %3690 = vmatprep.subr.bf16.mxu0 0
      %3691 = vmatpush2.bf16.msra.mxu0 0
      %3692 = vmatprep.subr.bf16.mxu0 0
      %3693 = vmatpush2.bf16.msra.mxu0 0
      %3694 = vmatprep.subr.bf16.mxu0 0
      %3695 = vmatpush2.bf16.msra.mxu0 0
      %3696 = vmatprep.subr.bf16.mxu0 0
      %3697 = vmatpush2.bf16.msra.mxu0 0
      %3698 = vmatprep.subr.bf16.mxu0 0
      %3699 = vmatpush2.bf16.msra.mxu0 0
      %3700 = vmatprep.subr.bf16.mxu0 0
      %3701 = vmatpush2.bf16.msra.mxu0 0
      %3702 = vmatprep.subr.bf16.mxu0 0
      %3703 = vmatpush2.bf16.msra.mxu0 0
      %3704 = vmatprep.mubr.bf16.mxu0 0
      %3705 = vmatmul.mubr.bf16.gmra.mxu0 %v3438
      %v3706 = vpop.f32.mrf.mxu0
      %v3707 = vadd.f32 0.0, %v3706
      %v3708 = vpop.f32.mrf.mxu0
      %v3709 = vadd.f32 0.0, %v3708
      %v3710 = vpop.f32.mrf.mxu0
      %v3711 = vpop.f32.mrf.mxu0
      %3712 = vdwg.mxu0
      %v3713 = vadd.f32 %v271, %v3666
      %v3714 = vadd.f32 %v273, %v3668
      %v3715 = vadd.f32 %v384, %v3707
      %v3716 = vadd.f32 %v386, %v3709
      %v3717 = vmul.f32 %v3713, 0.5
      %v3718 = vtanh.pop %v3717
      %v3719 = vmul.f32 %v3718, 0.5
      %v3720 = vadd.f32 %v3719, 0.5
      %v3721 = vmul.f32 %v3714, 0.5
      %v3722 = vtanh.pop %v3721
      %v3723 = vmul.f32 %v3722, 0.5
      %v3724 = vadd.f32 %v3723, 0.5
      %v3725 = vtanh.pop %v3715
      %v3726 = vmul.f32 %v3716, 0.5
      %v3727 = vtanh.pop %v3726
      %v3728 = vmul.f32 %v3727, 0.5
      %v3729 = vadd.f32 %v3728, 0.5
      %v3730 = vld [vmem:[#allocation3] sm:$0xff]
      %v3731 = vmul.f32 %v3724, %v3730
      %v3732 = vmul.f32 %v3720, %v3725
      %v3733 = vadd.f32 %v3731, %v3732
      %3734 = vst [vmem:[#allocation3] sm:$0xff] %v3733
      %v3735 = vtanh.pop %v3733
      %v3736 = vmul.f32 %v3729, %v3735
      %v3737 = vpack.c.bf16 %v3736, %v3736
      %3738 = vst [vmem:[#allocation2] sm:$0xf] %v3737
    $region49: #{tpu_custom_call.1} parent=1 // pred_fallthru
      _
    %s3739 = sadd.s32 %s2820, 11
    %p3740 = scmp.lt.s32.totalorder %s3739, 8
    // Predicated region
    $region50: #{tpu_custom_call.1} parent=1 // pred_check
      %p3741 = pneg %p3740
    $region51: #{tpu_custom_call.1} parent=1 // pred_check_branch
      %3743 = sbr.rel (%p3741) target = $region53
    $region52: #{tpu_custom_call.1} parent=1 // pred_region
      %v3744 = vld [vmem:[#allocation2] sm:$0xf]
      %v3745 = vld [vmem:[#allocation7] sm:$0xff]
      %v3746 = vld [vmem:[#allocation7 + $0x8] sm:$0xff]
      %v3747 = vld [vmem:[#allocation7 + $0x10] sm:$0xff]
      %v3748 = vld [vmem:[#allocation7 + $0x18] sm:$0xff]
      %v3749 = vld [vmem:[#allocation7 + $0x20] sm:$0xff]
      %v3750 = vld [vmem:[#allocation7 + $0x28] sm:$0xff]
      %v3751 = vld [vmem:[#allocation7 + $0x30] sm:$0xff]
      %v3752 = vld [vmem:[#allocation7 + $0x38] sm:$0xff]
      %v3753 = vld [vmem:[#allocation7 + $0x40] sm:$0xff]
      %v3754 = vld [vmem:[#allocation7 + $0x48] sm:$0xff]
      %v3755 = vld [vmem:[#allocation7 + $0x50] sm:$0xff]
      %v3756 = vld [vmem:[#allocation7 + $0x58] sm:$0xff]
      %v3757 = vld [vmem:[#allocation7 + $0x60] sm:$0xff]
      %v3758 = vld [vmem:[#allocation7 + $0x68] sm:$0xff]
      %v3759 = vld [vmem:[#allocation7 + $0x70] sm:$0xff]
      %v3760 = vld [vmem:[#allocation7 + $0x78] sm:$0xff]
      %v3761 = vld [vmem:[#allocation7 + $0x80] sm:$0xff]
      %v3762 = vld [vmem:[#allocation7 + $0x88] sm:$0xff]
      %v3763 = vld [vmem:[#allocation7 + $0x90] sm:$0xff]
      %v3764 = vld [vmem:[#allocation7 + $0x98] sm:$0xff]
      %v3765 = vld [vmem:[#allocation7 + $0xa0] sm:$0xff]
      %v3766 = vld [vmem:[#allocation7 + $0xa8] sm:$0xff]
      %v3767 = vld [vmem:[#allocation7 + $0xb0] sm:$0xff]
      %v3768 = vld [vmem:[#allocation7 + $0xb8] sm:$0xff]
      %v3769 = vld [vmem:[#allocation7 + $0xc0] sm:$0xff]
      %v3770 = vld [vmem:[#allocation7 + $0xc8] sm:$0xff]
      %v3771 = vld [vmem:[#allocation7 + $0xd0] sm:$0xff]
      %v3772 = vld [vmem:[#allocation7 + $0xd8] sm:$0xff]
      %v3773 = vld [vmem:[#allocation7 + $0xe0] sm:$0xff]
      %v3774 = vld [vmem:[#allocation7 + $0xe8] sm:$0xff]
      %v3775 = vld [vmem:[#allocation7 + $0xf0] sm:$0xff]
      %v3776 = vld [vmem:[#allocation7 + $0xf8] sm:$0xff]
      %v3809 = vunpack.c.l.b16 %v3745
      %v3810 = vunpack.c.h.b16 %v3745
      %v3811 = vunpack.c.l.b16 %v3746
      %v3812 = vunpack.c.h.b16 %v3746
      %v3813 = vunpack.c.l.b16 %v3747
      %v3814 = vunpack.c.h.b16 %v3747
      %v3815 = vunpack.c.l.b16 %v3748
      %v3816 = vunpack.c.h.b16 %v3748
      %v3817 = vunpack.c.l.b16 %v3749
      %v3818 = vunpack.c.h.b16 %v3749
      %v3819 = vunpack.c.l.b16 %v3750
      %v3820 = vunpack.c.h.b16 %v3750
      %v3821 = vunpack.c.l.b16 %v3751
      %v3822 = vunpack.c.h.b16 %v3751
      %v3823 = vunpack.c.l.b16 %v3752
      %v3824 = vunpack.c.h.b16 %v3752
      %v3825 = vunpack.c.l.b16 %v3753
      %v3826 = vunpack.c.h.b16 %v3753
      %v3827 = vunpack.c.l.b16 %v3754
      %v3828 = vunpack.c.h.b16 %v3754
      %v3829 = vunpack.c.l.b16 %v3755
      %v3830 = vunpack.c.h.b16 %v3755
      %v3831 = vunpack.c.l.b16 %v3756
      %v3832 = vunpack.c.h.b16 %v3756
      %v3833 = vunpack.c.l.b16 %v3757
      %v3834 = vunpack.c.h.b16 %v3757
      %v3835 = vunpack.c.l.b16 %v3758
      %v3836 = vunpack.c.h.b16 %v3758
      %v3837 = vunpack.c.l.b16 %v3759
      %v3838 = vunpack.c.h.b16 %v3759
      %v3839 = vunpack.c.l.b16 %v3760
      %v3840 = vunpack.c.h.b16 %v3760
      %v3841 = vunpack.c.l.b16 %v3761
      %v3842 = vunpack.c.h.b16 %v3761
      %v3843 = vunpack.c.l.b16 %v3762
      %v3844 = vunpack.c.h.b16 %v3762
      %v3845 = vunpack.c.l.b16 %v3763
      %v3846 = vunpack.c.h.b16 %v3763
      %v3847 = vunpack.c.l.b16 %v3764
      %v3848 = vunpack.c.h.b16 %v3764
      %v3849 = vunpack.c.l.b16 %v3765
      %v3850 = vunpack.c.h.b16 %v3765
      %v3851 = vunpack.c.l.b16 %v3766
      %v3852 = vunpack.c.h.b16 %v3766
      %v3853 = vunpack.c.l.b16 %v3767
      %v3854 = vunpack.c.h.b16 %v3767
      %v3855 = vunpack.c.l.b16 %v3768
      %v3856 = vunpack.c.h.b16 %v3768
      %v3857 = vunpack.c.l.b16 %v3769
      %v3858 = vunpack.c.h.b16 %v3769
      %v3859 = vunpack.c.l.b16 %v3770
      %v3860 = vunpack.c.h.b16 %v3770
      %v3861 = vunpack.c.l.b16 %v3771
      %v3862 = vunpack.c.h.b16 %v3771
      %v3863 = vunpack.c.l.b16 %v3772
      %v3864 = vunpack.c.h.b16 %v3772
      %v3865 = vunpack.c.l.b16 %v3773
      %v3866 = vunpack.c.h.b16 %v3773
      %v3867 = vunpack.c.l.b16 %v3774
      %v3868 = vunpack.c.h.b16 %v3774
      %v3869 = vunpack.c.l.b16 %v3775
      %v3870 = vunpack.c.h.b16 %v3775
      %v3871 = vunpack.c.l.b16 %v3776
      %v3872 = vunpack.c.h.b16 %v3776
      %v3873 = vpack.c.b16 %v3813, %v3809
      %v3874 = vpack.c.b16 %v3814, %v3810
      %v3875 = vpack.c.b16 %v3815, %v3811
      %v3876 = vpack.c.b16 %v3816, %v3812
      %v3877 = vpack.c.b16 %v3821, %v3817
      %v3878 = vpack.c.b16 %v3822, %v3818
      %v3879 = vpack.c.b16 %v3823, %v3819
      %v3880 = vpack.c.b16 %v3824, %v3820
      %v3881 = vpack.c.b16 %v3829, %v3825
      %v3882 = vpack.c.b16 %v3830, %v3826
      %v3883 = vpack.c.b16 %v3831, %v3827
      %v3884 = vpack.c.b16 %v3832, %v3828
      %v3885 = vpack.c.b16 %v3837, %v3833
      %v3886 = vpack.c.b16 %v3838, %v3834
      %v3887 = vpack.c.b16 %v3839, %v3835
      %v3888 = vpack.c.b16 %v3840, %v3836
      %v3889 = vpack.c.b16 %v3845, %v3841
      %v3890 = vpack.c.b16 %v3846, %v3842
      %v3891 = vpack.c.b16 %v3847, %v3843
      %v3892 = vpack.c.b16 %v3848, %v3844
      %v3893 = vpack.c.b16 %v3853, %v3849
      %v3894 = vpack.c.b16 %v3854, %v3850
      %v3895 = vpack.c.b16 %v3855, %v3851
      %v3896 = vpack.c.b16 %v3856, %v3852
      %v3897 = vpack.c.b16 %v3861, %v3857
      %v3898 = vpack.c.b16 %v3862, %v3858
      %v3899 = vpack.c.b16 %v3863, %v3859
      %v3900 = vpack.c.b16 %v3864, %v3860
      %v3901 = vpack.c.b16 %v3869, %v3865
      %v3902 = vpack.c.b16 %v3870, %v3866
      %v3903 = vpack.c.b16 %v3871, %v3867
      %v3904 = vpack.c.b16 %v3872, %v3868
      %3937 = vmatprep.subr.bf16.mxu0 %v3902
      %3938 = vmatpush1.bf16.msra.mxu0 %v3901
      %3939 = vmatprep.subr.bf16.mxu0 %v3898
      %3940 = vmatpush1.bf16.msra.mxu0 %v3897
      %3941 = vmatprep.subr.bf16.mxu0 %v3894
      %3942 = vmatpush1.bf16.msra.mxu0 %v3893
      %3943 = vmatprep.subr.bf16.mxu0 %v3890
      %3944 = vmatpush1.bf16.msra.mxu0 %v3889
      %3945 = vmatprep.subr.bf16.mxu0 %v3886
      %3946 = vmatpush1.bf16.msra.mxu0 %v3885
      %3947 = vmatprep.subr.bf16.mxu0 %v3882
      %3948 = vmatpush1.bf16.msra.mxu0 %v3881
      %3949 = vmatprep.subr.bf16.mxu0 %v3878
      %3950 = vmatpush1.bf16.msra.mxu0 %v3877
      %3951 = vmatprep.subr.bf16.mxu0 %v3874
      %3952 = vmatpush1.bf16.msra.mxu0 %v3873
      %3953 = vmatprep.subr.bf16.mxu0 0
      %3954 = vmatpush2.bf16.msra.mxu0 0
      %3955 = vmatprep.subr.bf16.mxu0 0
      %3956 = vmatpush2.bf16.msra.mxu0 0
      %3957 = vmatprep.subr.bf16.mxu0 0
      %3958 = vmatpush2.bf16.msra.mxu0 0
      %3959 = vmatprep.subr.bf16.mxu0 0
      %3960 = vmatpush2.bf16.msra.mxu0 0
      %3961 = vmatprep.subr.bf16.mxu0 0
      %3962 = vmatpush2.bf16.msra.mxu0 0
      %3963 = vmatprep.subr.bf16.mxu0 0
      %3964 = vmatpush2.bf16.msra.mxu0 0
      %3965 = vmatprep.subr.bf16.mxu0 0
      %3966 = vmatpush2.bf16.msra.mxu0 0
      %3967 = vmatprep.subr.bf16.mxu0 0
      %3968 = vmatpush2.bf16.msra.mxu0 0
      %3969 = vmatprep.mubr.bf16.mxu0 0
      %3970 = vmatmul.mubr.bf16.gmra.mxu0 %v3744
      %v3971 = vpop.f32.mrf.mxu0
      %v3972 = vadd.f32 0.0, %v3971
      %v3973 = vpop.f32.mrf.mxu0
      %v3974 = vadd.f32 0.0, %v3973
      %v3975 = vpop.f32.mrf.mxu0
      %v3976 = vpop.f32.mrf.mxu0
      %3977 = vdwg.mxu0
      %3978 = vmatprep.subr.bf16.mxu0 %v3904
      %3979 = vmatpush1.bf16.msra.mxu0 %v3903
      %3980 = vmatprep.subr.bf16.mxu0 %v3900
      %3981 = vmatpush1.bf16.msra.mxu0 %v3899
      %3982 = vmatprep.subr.bf16.mxu0 %v3896
      %3983 = vmatpush1.bf16.msra.mxu0 %v3895
      %3984 = vmatprep.subr.bf16.mxu0 %v3892
      %3985 = vmatpush1.bf16.msra.mxu0 %v3891
      %3986 = vmatprep.subr.bf16.mxu0 %v3888
      %3987 = vmatpush1.bf16.msra.mxu0 %v3887
      %3988 = vmatprep.subr.bf16.mxu0 %v3884
      %3989 = vmatpush1.bf16.msra.mxu0 %v3883
      %3990 = vmatprep.subr.bf16.mxu0 %v3880
      %3991 = vmatpush1.bf16.msra.mxu0 %v3879
      %3992 = vmatprep.subr.bf16.mxu0 %v3876
      %3993 = vmatpush1.bf16.msra.mxu0 %v3875
      %3994 = vmatprep.subr.bf16.mxu0 0
      %3995 = vmatpush2.bf16.msra.mxu0 0
      %3996 = vmatprep.subr.bf16.mxu0 0
      %3997 = vmatpush2.bf16.msra.mxu0 0
      %3998 = vmatprep.subr.bf16.mxu0 0
      %3999 = vmatpush2.bf16.msra.mxu0 0
      %4000 = vmatprep.subr.bf16.mxu0 0
      %4001 = vmatpush2.bf16.msra.mxu0 0
      %4002 = vmatprep.subr.bf16.mxu0 0
      %4003 = vmatpush2.bf16.msra.mxu0 0
      %4004 = vmatprep.subr.bf16.mxu0 0
      %4005 = vmatpush2.bf16.msra.mxu0 0
      %4006 = vmatprep.subr.bf16.mxu0 0
      %4007 = vmatpush2.bf16.msra.mxu0 0
      %4008 = vmatprep.subr.bf16.mxu0 0
      %4009 = vmatpush2.bf16.msra.mxu0 0
      %4010 = vmatprep.mubr.bf16.mxu0 0
      %4011 = vmatmul.mubr.bf16.gmra.mxu0 %v3744
      %v4012 = vpop.f32.mrf.mxu0
      %v4013 = vadd.f32 0.0, %v4012
      %v4014 = vpop.f32.mrf.mxu0
      %v4015 = vadd.f32 0.0, %v4014
      %v4016 = vpop.f32.mrf.mxu0
      %v4017 = vpop.f32.mrf.mxu0
      %4018 = vdwg.mxu0
      %v4019 = vadd.f32 %v275, %v3972
      %v4020 = vadd.f32 %v277, %v3974
      %v4021 = vadd.f32 %v388, %v4013
      %v4022 = vadd.f32 %v390, %v4015
      %v4023 = vmul.f32 %v4019, 0.5
      %v4024 = vtanh.pop %v4023
      %v4025 = vmul.f32 %v4024, 0.5
      %v4026 = vadd.f32 %v4025, 0.5
      %v4027 = vmul.f32 %v4020, 0.5
      %v4028 = vtanh.pop %v4027
      %v4029 = vmul.f32 %v4028, 0.5
      %v4030 = vadd.f32 %v4029, 0.5
      %v4031 = vtanh.pop %v4021
      %v4032 = vmul.f32 %v4022, 0.5
      %v4033 = vtanh.pop %v4032
      %v4034 = vmul.f32 %v4033, 0.5
      %v4035 = vadd.f32 %v4034, 0.5
      %v4036 = vld [vmem:[#allocation3] sm:$0xff]
      %v4037 = vmul.f32 %v4030, %v4036
      %v4038 = vmul.f32 %v4026, %v4031
      %v4039 = vadd.f32 %v4037, %v4038
      %4040 = vst [vmem:[#allocation3] sm:$0xff] %v4039
      %v4041 = vtanh.pop %v4039
      %v4042 = vmul.f32 %v4035, %v4041
      %v4043 = vpack.c.bf16 %v4042, %v4042
      %4044 = vst [vmem:[#allocation2] sm:$0xf] %v4043
    $region53: #{tpu_custom_call.1} parent=1 // pred_fallthru
      _
    %s4045 = sadd.s32 %s2820, 12
    %p4046 = scmp.lt.s32.totalorder %s4045, 8
    // Predicated region
    $region54: #{tpu_custom_call.1} parent=1 // pred_check
      %p4047 = pneg %p4046
    $region55: #{tpu_custom_call.1} parent=1 // pred_check_branch
      %4049 = sbr.rel (%p4047) target = $region57
    $region56: #{tpu_custom_call.1} parent=1 // pred_region
      %v4050 = vld [vmem:[#allocation2] sm:$0xf]
      %v4051 = vld [vmem:[#allocation7] sm:$0xff]
      %v4052 = vld [vmem:[#allocation7 + $0x8] sm:$0xff]
      %v4053 = vld [vmem:[#allocation7 + $0x10] sm:$0xff]
      %v4054 = vld [vmem:[#allocation7 + $0x18] sm:$0xff]
      %v4055 = vld [vmem:[#allocation7 + $0x20] sm:$0xff]
      %v4056 = vld [vmem:[#allocation7 + $0x28] sm:$0xff]
      %v4057 = vld [vmem:[#allocation7 + $0x30] sm:$0xff]
      %v4058 = vld [vmem:[#allocation7 + $0x38] sm:$0xff]
      %v4059 = vld [vmem:[#allocation7 + $0x40] sm:$0xff]
      %v4060 = vld [vmem:[#allocation7 + $0x48] sm:$0xff]
      %v4061 = vld [vmem:[#allocation7 + $0x50] sm:$0xff]
      %v4062 = vld [vmem:[#allocation7 + $0x58] sm:$0xff]
      %v4063 = vld [vmem:[#allocation7 + $0x60] sm:$0xff]
      %v4064 = vld [vmem:[#allocation7 + $0x68] sm:$0xff]
      %v4065 = vld [vmem:[#allocation7 + $0x70] sm:$0xff]
      %v4066 = vld [vmem:[#allocation7 + $0x78] sm:$0xff]
      %v4067 = vld [vmem:[#allocation7 + $0x80] sm:$0xff]
      %v4068 = vld [vmem:[#allocation7 + $0x88] sm:$0xff]
      %v4069 = vld [vmem:[#allocation7 + $0x90] sm:$0xff]
      %v4070 = vld [vmem:[#allocation7 + $0x98] sm:$0xff]
      %v4071 = vld [vmem:[#allocation7 + $0xa0] sm:$0xff]
      %v4072 = vld [vmem:[#allocation7 + $0xa8] sm:$0xff]
      %v4073 = vld [vmem:[#allocation7 + $0xb0] sm:$0xff]
      %v4074 = vld [vmem:[#allocation7 + $0xb8] sm:$0xff]
      %v4075 = vld [vmem:[#allocation7 + $0xc0] sm:$0xff]
      %v4076 = vld [vmem:[#allocation7 + $0xc8] sm:$0xff]
      %v4077 = vld [vmem:[#allocation7 + $0xd0] sm:$0xff]
      %v4078 = vld [vmem:[#allocation7 + $0xd8] sm:$0xff]
      %v4079 = vld [vmem:[#allocation7 + $0xe0] sm:$0xff]
      %v4080 = vld [vmem:[#allocation7 + $0xe8] sm:$0xff]
      %v4081 = vld [vmem:[#allocation7 + $0xf0] sm:$0xff]
      %v4082 = vld [vmem:[#allocation7 + $0xf8] sm:$0xff]
      %v4115 = vunpack.c.l.b16 %v4051
      %v4116 = vunpack.c.h.b16 %v4051
      %v4117 = vunpack.c.l.b16 %v4052
      %v4118 = vunpack.c.h.b16 %v4052
      %v4119 = vunpack.c.l.b16 %v4053
      %v4120 = vunpack.c.h.b16 %v4053
      %v4121 = vunpack.c.l.b16 %v4054
      %v4122 = vunpack.c.h.b16 %v4054
      %v4123 = vunpack.c.l.b16 %v4055
      %v4124 = vunpack.c.h.b16 %v4055
      %v4125 = vunpack.c.l.b16 %v4056
      %v4126 = vunpack.c.h.b16 %v4056
      %v4127 = vunpack.c.l.b16 %v4057
      %v4128 = vunpack.c.h.b16 %v4057
      %v4129 = vunpack.c.l.b16 %v4058
      %v4130 = vunpack.c.h.b16 %v4058
      %v4131 = vunpack.c.l.b16 %v4059
      %v4132 = vunpack.c.h.b16 %v4059
      %v4133 = vunpack.c.l.b16 %v4060
      %v4134 = vunpack.c.h.b16 %v4060
      %v4135 = vunpack.c.l.b16 %v4061
      %v4136 = vunpack.c.h.b16 %v4061
      %v4137 = vunpack.c.l.b16 %v4062
      %v4138 = vunpack.c.h.b16 %v4062
      %v4139 = vunpack.c.l.b16 %v4063
      %v4140 = vunpack.c.h.b16 %v4063
      %v4141 = vunpack.c.l.b16 %v4064
      %v4142 = vunpack.c.h.b16 %v4064
      %v4143 = vunpack.c.l.b16 %v4065
      %v4144 = vunpack.c.h.b16 %v4065
      %v4145 = vunpack.c.l.b16 %v4066
      %v4146 = vunpack.c.h.b16 %v4066
      %v4147 = vunpack.c.l.b16 %v4067
      %v4148 = vunpack.c.h.b16 %v4067
      %v4149 = vunpack.c.l.b16 %v4068
      %v4150 = vunpack.c.h.b16 %v4068
      %v4151 = vunpack.c.l.b16 %v4069
      %v4152 = vunpack.c.h.b16 %v4069
      %v4153 = vunpack.c.l.b16 %v4070
      %v4154 = vunpack.c.h.b16 %v4070
      %v4155 = vunpack.c.l.b16 %v4071
      %v4156 = vunpack.c.h.b16 %v4071
      %v4157 = vunpack.c.l.b16 %v4072
      %v4158 = vunpack.c.h.b16 %v4072
      %v4159 = vunpack.c.l.b16 %v4073
      %v4160 = vunpack.c.h.b16 %v4073
      %v4161 = vunpack.c.l.b16 %v4074
      %v4162 = vunpack.c.h.b16 %v4074
      %v4163 = vunpack.c.l.b16 %v4075
      %v4164 = vunpack.c.h.b16 %v4075
      %v4165 = vunpack.c.l.b16 %v4076
      %v4166 = vunpack.c.h.b16 %v4076
      %v4167 = vunpack.c.l.b16 %v4077
      %v4168 = vunpack.c.h.b16 %v4077
      %v4169 = vunpack.c.l.b16 %v4078
      %v4170 = vunpack.c.h.b16 %v4078
      %v4171 = vunpack.c.l.b16 %v4079
      %v4172 = vunpack.c.h.b16 %v4079
      %v4173 = vunpack.c.l.b16 %v4080
      %v4174 = vunpack.c.h.b16 %v4080
      %v4175 = vunpack.c.l.b16 %v4081
      %v4176 = vunpack.c.h.b16 %v4081
      %v4177 = vunpack.c.l.b16 %v4082
      %v4178 = vunpack.c.h.b16 %v4082
      %v4179 = vpack.c.b16 %v4119, %v4115
      %v4180 = vpack.c.b16 %v4120, %v4116
      %v4181 = vpack.c.b16 %v4121, %v4117
      %v4182 = vpack.c.b16 %v4122, %v4118
      %v4183 = vpack.c.b16 %v4127, %v4123
      %v4184 = vpack.c.b16 %v4128, %v4124
      %v4185 = vpack.c.b16 %v4129, %v4125
      %v4186 = vpack.c.b16 %v4130, %v4126
      %v4187 = vpack.c.b16 %v4135, %v4131
      %v4188 = vpack.c.b16 %v4136, %v4132
      %v4189 = vpack.c.b16 %v4137, %v4133
      %v4190 = vpack.c.b16 %v4138, %v4134
      %v4191 = vpack.c.b16 %v4143, %v4139
      %v4192 = vpack.c.b16 %v4144, %v4140
      %v4193 = vpack.c.b16 %v4145, %v4141
      %v4194 = vpack.c.b16 %v4146, %v4142
      %v4195 = vpack.c.b16 %v4151, %v4147
      %v4196 = vpack.c.b16 %v4152, %v4148
      %v4197 = vpack.c.b16 %v4153, %v4149
      %v4198 = vpack.c.b16 %v4154, %v4150
      %v4199 = vpack.c.b16 %v4159, %v4155
      %v4200 = vpack.c.b16 %v4160, %v4156
      %v4201 = vpack.c.b16 %v4161, %v4157
      %v4202 = vpack.c.b16 %v4162, %v4158
      %v4203 = vpack.c.b16 %v4167, %v4163
      %v4204 = vpack.c.b16 %v4168, %v4164
      %v4205 = vpack.c.b16 %v4169, %v4165
      %v4206 = vpack.c.b16 %v4170, %v4166
      %v4207 = vpack.c.b16 %v4175, %v4171
      %v4208 = vpack.c.b16 %v4176, %v4172
      %v4209 = vpack.c.b16 %v4177, %v4173
      %v4210 = vpack.c.b16 %v4178, %v4174
      %4243 = vmatprep.subr.bf16.mxu0 %v4208
      %4244 = vmatpush1.bf16.msra.mxu0 %v4207
      %4245 = vmatprep.subr.bf16.mxu0 %v4204
      %4246 = vmatpush1.bf16.msra.mxu0 %v4203
      %4247 = vmatprep.subr.bf16.mxu0 %v4200
      %4248 = vmatpush1.bf16.msra.mxu0 %v4199
      %4249 = vmatprep.subr.bf16.mxu0 %v4196
      %4250 = vmatpush1.bf16.msra.mxu0 %v4195
      %4251 = vmatprep.subr.bf16.mxu0 %v4192
      %4252 = vmatpush1.bf16.msra.mxu0 %v4191
      %4253 = vmatprep.subr.bf16.mxu0 %v4188
      %4254 = vmatpush1.bf16.msra.mxu0 %v4187
      %4255 = vmatprep.subr.bf16.mxu0 %v4184
      %4256 = vmatpush1.bf16.msra.mxu0 %v4183
      %4257 = vmatprep.subr.bf16.mxu0 %v4180
      %4258 = vmatpush1.bf16.msra.mxu0 %v4179
      %4259 = vmatprep.subr.bf16.mxu0 0
      %4260 = vmatpush2.bf16.msra.mxu0 0
      %4261 = vmatprep.subr.bf16.mxu0 0
      %4262 = vmatpush2.bf16.msra.mxu0 0
      %4263 = vmatprep.subr.bf16.mxu0 0
      %4264 = vmatpush2.bf16.msra.mxu0 0
      %4265 = vmatprep.subr.bf16.mxu0 0
      %4266 = vmatpush2.bf16.msra.mxu0 0
      %4267 = vmatprep.subr.bf16.mxu0 0
      %4268 = vmatpush2.bf16.msra.mxu0 0
      %4269 = vmatprep.subr.bf16.mxu0 0
      %4270 = vmatpush2.bf16.msra.mxu0 0
      %4271 = vmatprep.subr.bf16.mxu0 0
      %4272 = vmatpush2.bf16.msra.mxu0 0
      %4273 = vmatprep.subr.bf16.mxu0 0
      %4274 = vmatpush2.bf16.msra.mxu0 0
      %4275 = vmatprep.mubr.bf16.mxu0 0
      %4276 = vmatmul.mubr.bf16.gmra.mxu0 %v4050
      %v4277 = vpop.f32.mrf.mxu0
      %v4278 = vadd.f32 0.0, %v4277
      %v4279 = vpop.f32.mrf.mxu0
      %v4280 = vadd.f32 0.0, %v4279
      %v4281 = vpop.f32.mrf.mxu0
      %v4282 = vpop.f32.mrf.mxu0
      %4283 = vdwg.mxu0
      %4284 = vmatprep.subr.bf16.mxu0 %v4210
      %4285 = vmatpush1.bf16.msra.mxu0 %v4209
      %4286 = vmatprep.subr.bf16.mxu0 %v4206
      %4287 = vmatpush1.bf16.msra.mxu0 %v4205
      %4288 = vmatprep.subr.bf16.mxu0 %v4202
      %4289 = vmatpush1.bf16.msra.mxu0 %v4201
      %4290 = vmatprep.subr.bf16.mxu0 %v4198
      %4291 = vmatpush1.bf16.msra.mxu0 %v4197
      %4292 = vmatprep.subr.bf16.mxu0 %v4194
      %4293 = vmatpush1.bf16.msra.mxu0 %v4193
      %4294 = vmatprep.subr.bf16.mxu0 %v4190
      %4295 = vmatpush1.bf16.msra.mxu0 %v4189
      %4296 = vmatprep.subr.bf16.mxu0 %v4186
      %4297 = vmatpush1.bf16.msra.mxu0 %v4185
      %4298 = vmatprep.subr.bf16.mxu0 %v4182
      %4299 = vmatpush1.bf16.msra.mxu0 %v4181
      %4300 = vmatprep.subr.bf16.mxu0 0
      %4301 = vmatpush2.bf16.msra.mxu0 0
      %4302 = vmatprep.subr.bf16.mxu0 0
      %4303 = vmatpush2.bf16.msra.mxu0 0
      %4304 = vmatprep.subr.bf16.mxu0 0
      %4305 = vmatpush2.bf16.msra.mxu0 0
      %4306 = vmatprep.subr.bf16.mxu0 0
      %4307 = vmatpush2.bf16.msra.mxu0 0
      %4308 = vmatprep.subr.bf16.mxu0 0
      %4309 = vmatpush2.bf16.msra.mxu0 0
      %4310 = vmatprep.subr.bf16.mxu0 0
      %4311 = vmatpush2.bf16.msra.mxu0 0
      %4312 = vmatprep.subr.bf16.mxu0 0
      %4313 = vmatpush2.bf16.msra.mxu0 0
      %4314 = vmatprep.subr.bf16.mxu0 0
      %4315 = vmatpush2.bf16.msra.mxu0 0
      %4316 = vmatprep.mubr.bf16.mxu0 0
      %4317 = vmatmul.mubr.bf16.gmra.mxu0 %v4050
      %v4318 = vpop.f32.mrf.mxu0
      %v4319 = vadd.f32 0.0, %v4318
      %v4320 = vpop.f32.mrf.mxu0
      %v4321 = vadd.f32 0.0, %v4320
      %v4322 = vpop.f32.mrf.mxu0
      %v4323 = vpop.f32.mrf.mxu0
      %4324 = vdwg.mxu0
      %v4325 = vadd.f32 %v281, %v4278
      %v4326 = vadd.f32 %v283, %v4280
      %v4327 = vadd.f32 %v394, %v4319
      %v4328 = vadd.f32 %v396, %v4321
      %v4329 = vmul.f32 %v4325, 0.5
      %v4330 = vtanh.pop %v4329
      %v4331 = vmul.f32 %v4330, 0.5
      %v4332 = vadd.f32 %v4331, 0.5
      %v4333 = vmul.f32 %v4326, 0.5
      %v4334 = vtanh.pop %v4333
      %v4335 = vmul.f32 %v4334, 0.5
      %v4336 = vadd.f32 %v4335, 0.5
      %v4337 = vtanh.pop %v4327
      %v4338 = vmul.f32 %v4328, 0.5
      %v4339 = vtanh.pop %v4338
      %v4340 = vmul.f32 %v4339, 0.5
      %v4341 = vadd.f32 %v4340, 0.5
      %v4342 = vld [vmem:[#allocation3] sm:$0xff]
      %v4343 = vmul.f32 %v4336, %v4342
      %v4344 = vmul.f32 %v4332, %v4337
      %v4345 = vadd.f32 %v4343, %v4344
      %4346 = vst [vmem:[#allocation3] sm:$0xff] %v4345
      %v4347 = vtanh.pop %v4345
      %v4348 = vmul.f32 %v4341, %v4347
      %v4349 = vpack.c.bf16 %v4348, %v4348
      %4350 = vst [vmem:[#allocation2] sm:$0xf] %v4349
    $region57: #{tpu_custom_call.1} parent=1 // pred_fallthru
      _
    %s4351 = sadd.s32 %s2820, 13
    %p4352 = scmp.lt.s32.totalorder %s4351, 8
    // Predicated region
    $region58: #{tpu_custom_call.1} parent=1 // pred_check
      %p4353 = pneg %p4352
    $region59: #{tpu_custom_call.1} parent=1 // pred_check_branch
      %4355 = sbr.rel (%p4353) target = $region61
    $region60: #{tpu_custom_call.1} parent=1 // pred_region
      %v4356 = vld [vmem:[#allocation2] sm:$0xf]
      %v4357 = vld [vmem:[#allocation7] sm:$0xff]
      %v4358 = vld [vmem:[#allocation7 + $0x8] sm:$0xff]
      %v4359 = vld [vmem:[#allocation7 + $0x10] sm:$0xff]
      %v4360 = vld [vmem:[#allocation7 + $0x18] sm:$0xff]
      %v4361 = vld [vmem:[#allocation7 + $0x20] sm:$0xff]
      %v4362 = vld [vmem:[#allocation7 + $0x28] sm:$0xff]
      %v4363 = vld [vmem:[#allocation7 + $0x30] sm:$0xff]
      %v4364 = vld [vmem:[#allocation7 + $0x38] sm:$0xff]
      %v4365 = vld [vmem:[#allocation7 + $0x40] sm:$0xff]
      %v4366 = vld [vmem:[#allocation7 + $0x48] sm:$0xff]
      %v4367 = vld [vmem:[#allocation7 + $0x50] sm:$0xff]
      %v4368 = vld [vmem:[#allocation7 + $0x58] sm:$0xff]
      %v4369 = vld [vmem:[#allocation7 + $0x60] sm:$0xff]
      %v4370 = vld [vmem:[#allocation7 + $0x68] sm:$0xff]
      %v4371 = vld [vmem:[#allocation7 + $0x70] sm:$0xff]
      %v4372 = vld [vmem:[#allocation7 + $0x78] sm:$0xff]
      %v4373 = vld [vmem:[#allocation7 + $0x80] sm:$0xff]
      %v4374 = vld [vmem:[#allocation7 + $0x88] sm:$0xff]
      %v4375 = vld [vmem:[#allocation7 + $0x90] sm:$0xff]
      %v4376 = vld [vmem:[#allocation7 + $0x98] sm:$0xff]
      %v4377 = vld [vmem:[#allocation7 + $0xa0] sm:$0xff]
      %v4378 = vld [vmem:[#allocation7 + $0xa8] sm:$0xff]
      %v4379 = vld [vmem:[#allocation7 + $0xb0] sm:$0xff]
      %v4380 = vld [vmem:[#allocation7 + $0xb8] sm:$0xff]
      %v4381 = vld [vmem:[#allocation7 + $0xc0] sm:$0xff]
      %v4382 = vld [vmem:[#allocation7 + $0xc8] sm:$0xff]
      %v4383 = vld [vmem:[#allocation7 + $0xd0] sm:$0xff]
      %v4384 = vld [vmem:[#allocation7 + $0xd8] sm:$0xff]
      %v4385 = vld [vmem:[#allocation7 + $0xe0] sm:$0xff]
      %v4386 = vld [vmem:[#allocation7 + $0xe8] sm:$0xff]
      %v4387 = vld [vmem:[#allocation7 + $0xf0] sm:$0xff]
      %v4388 = vld [vmem:[#allocation7 + $0xf8] sm:$0xff]
      %v4421 = vunpack.c.l.b16 %v4357
      %v4422 = vunpack.c.h.b16 %v4357
      %v4423 = vunpack.c.l.b16 %v4358
      %v4424 = vunpack.c.h.b16 %v4358
      %v4425 = vunpack.c.l.b16 %v4359
      %v4426 = vunpack.c.h.b16 %v4359
      %v4427 = vunpack.c.l.b16 %v4360
      %v4428 = vunpack.c.h.b16 %v4360
      %v4429 = vunpack.c.l.b16 %v4361
      %v4430 = vunpack.c.h.b16 %v4361
      %v4431 = vunpack.c.l.b16 %v4362
      %v4432 = vunpack.c.h.b16 %v4362
      %v4433 = vunpack.c.l.b16 %v4363
      %v4434 = vunpack.c.h.b16 %v4363
      %v4435 = vunpack.c.l.b16 %v4364
      %v4436 = vunpack.c.h.b16 %v4364
      %v4437 = vunpack.c.l.b16 %v4365
      %v4438 = vunpack.c.h.b16 %v4365
      %v4439 = vunpack.c.l.b16 %v4366
      %v4440 = vunpack.c.h.b16 %v4366
      %v4441 = vunpack.c.l.b16 %v4367
      %v4442 = vunpack.c.h.b16 %v4367
      %v4443 = vunpack.c.l.b16 %v4368
      %v4444 = vunpack.c.h.b16 %v4368
      %v4445 = vunpack.c.l.b16 %v4369
      %v4446 = vunpack.c.h.b16 %v4369
      %v4447 = vunpack.c.l.b16 %v4370
      %v4448 = vunpack.c.h.b16 %v4370
      %v4449 = vunpack.c.l.b16 %v4371
      %v4450 = vunpack.c.h.b16 %v4371
      %v4451 = vunpack.c.l.b16 %v4372
      %v4452 = vunpack.c.h.b16 %v4372
      %v4453 = vunpack.c.l.b16 %v4373
      %v4454 = vunpack.c.h.b16 %v4373
      %v4455 = vunpack.c.l.b16 %v4374
      %v4456 = vunpack.c.h.b16 %v4374
      %v4457 = vunpack.c.l.b16 %v4375
      %v4458 = vunpack.c.h.b16 %v4375
      %v4459 = vunpack.c.l.b16 %v4376
      %v4460 = vunpack.c.h.b16 %v4376
      %v4461 = vunpack.c.l.b16 %v4377
      %v4462 = vunpack.c.h.b16 %v4377
      %v4463 = vunpack.c.l.b16 %v4378
      %v4464 = vunpack.c.h.b16 %v4378
      %v4465 = vunpack.c.l.b16 %v4379
      %v4466 = vunpack.c.h.b16 %v4379
      %v4467 = vunpack.c.l.b16 %v4380
      %v4468 = vunpack.c.h.b16 %v4380
      %v4469 = vunpack.c.l.b16 %v4381
      %v4470 = vunpack.c.h.b16 %v4381
      %v4471 = vunpack.c.l.b16 %v4382
      %v4472 = vunpack.c.h.b16 %v4382
      %v4473 = vunpack.c.l.b16 %v4383
      %v4474 = vunpack.c.h.b16 %v4383
      %v4475 = vunpack.c.l.b16 %v4384
      %v4476 = vunpack.c.h.b16 %v4384
      %v4477 = vunpack.c.l.b16 %v4385
      %v4478 = vunpack.c.h.b16 %v4385
      %v4479 = vunpack.c.l.b16 %v4386
      %v4480 = vunpack.c.h.b16 %v4386
      %v4481 = vunpack.c.l.b16 %v4387
      %v4482 = vunpack.c.h.b16 %v4387
      %v4483 = vunpack.c.l.b16 %v4388
      %v4484 = vunpack.c.h.b16 %v4388
      %v4485 = vpack.c.b16 %v4425, %v4421
      %v4486 = vpack.c.b16 %v4426, %v4422
      %v4487 = vpack.c.b16 %v4427, %v4423
      %v4488 = vpack.c.b16 %v4428, %v4424
      %v4489 = vpack.c.b16 %v4433, %v4429
      %v4490 = vpack.c.b16 %v4434, %v4430
      %v4491 = vpack.c.b16 %v4435, %v4431
      %v4492 = vpack.c.b16 %v4436, %v4432
      %v4493 = vpack.c.b16 %v4441, %v4437
      %v4494 = vpack.c.b16 %v4442, %v4438
      %v4495 = vpack.c.b16 %v4443, %v4439
      %v4496 = vpack.c.b16 %v4444, %v4440
      %v4497 = vpack.c.b16 %v4449, %v4445
      %v4498 = vpack.c.b16 %v4450, %v4446
      %v4499 = vpack.c.b16 %v4451, %v4447
      %v4500 = vpack.c.b16 %v4452, %v4448
      %v4501 = vpack.c.b16 %v4457, %v4453
      %v4502 = vpack.c.b16 %v4458, %v4454
      %v4503 = vpack.c.b16 %v4459, %v4455
      %v4504 = vpack.c.b16 %v4460, %v4456
      %v4505 = vpack.c.b16 %v4465, %v4461
      %v4506 = vpack.c.b16 %v4466, %v4462
      %v4507 = vpack.c.b16 %v4467, %v4463
      %v4508 = vpack.c.b16 %v4468, %v4464
      %v4509 = vpack.c.b16 %v4473, %v4469
      %v4510 = vpack.c.b16 %v4474, %v4470
      %v4511 = vpack.c.b16 %v4475, %v4471
      %v4512 = vpack.c.b16 %v4476, %v4472
      %v4513 = vpack.c.b16 %v4481, %v4477
      %v4514 = vpack.c.b16 %v4482, %v4478
      %v4515 = vpack.c.b16 %v4483, %v4479
      %v4516 = vpack.c.b16 %v4484, %v4480
      %4549 = vmatprep.subr.bf16.mxu0 %v4514
      %4550 = vmatpush1.bf16.msra.mxu0 %v4513
      %4551 = vmatprep.subr.bf16.mxu0 %v4510
      %4552 = vmatpush1.bf16.msra.mxu0 %v4509
      %4553 = vmatprep.subr.bf16.mxu0 %v4506
      %4554 = vmatpush1.bf16.msra.mxu0 %v4505
      %4555 = vmatprep.subr.bf16.mxu0 %v4502
      %4556 = vmatpush1.bf16.msra.mxu0 %v4501
      %4557 = vmatprep.subr.bf16.mxu0 %v4498
      %4558 = vmatpush1.bf16.msra.mxu0 %v4497
      %4559 = vmatprep.subr.bf16.mxu0 %v4494
      %4560 = vmatpush1.bf16.msra.mxu0 %v4493
      %4561 = vmatprep.subr.bf16.mxu0 %v4490
      %4562 = vmatpush1.bf16.msra.mxu0 %v4489
      %4563 = vmatprep.subr.bf16.mxu0 %v4486
      %4564 = vmatpush1.bf16.msra.mxu0 %v4485
      %4565 = vmatprep.subr.bf16.mxu0 0
      %4566 = vmatpush2.bf16.msra.mxu0 0
      %4567 = vmatprep.subr.bf16.mxu0 0
      %4568 = vmatpush2.bf16.msra.mxu0 0
      %4569 = vmatprep.subr.bf16.mxu0 0
      %4570 = vmatpush2.bf16.msra.mxu0 0
      %4571 = vmatprep.subr.bf16.mxu0 0
      %4572 = vmatpush2.bf16.msra.mxu0 0
      %4573 = vmatprep.subr.bf16.mxu0 0
      %4574 = vmatpush2.bf16.msra.mxu0 0
      %4575 = vmatprep.subr.bf16.mxu0 0
      %4576 = vmatpush2.bf16.msra.mxu0 0
      %4577 = vmatprep.subr.bf16.mxu0 0
      %4578 = vmatpush2.bf16.msra.mxu0 0
      %4579 = vmatprep.subr.bf16.mxu0 0
      %4580 = vmatpush2.bf16.msra.mxu0 0
      %4581 = vmatprep.mubr.bf16.mxu0 0
      %4582 = vmatmul.mubr.bf16.gmra.mxu0 %v4356
      %v4583 = vpop.f32.mrf.mxu0
      %v4584 = vadd.f32 0.0, %v4583
      %v4585 = vpop.f32.mrf.mxu0
      %v4586 = vadd.f32 0.0, %v4585
      %v4587 = vpop.f32.mrf.mxu0
      %v4588 = vpop.f32.mrf.mxu0
      %4589 = vdwg.mxu0
      %4590 = vmatprep.subr.bf16.mxu0 %v4516
      %4591 = vmatpush1.bf16.msra.mxu0 %v4515
      %4592 = vmatprep.subr.bf16.mxu0 %v4512
      %4593 = vmatpush1.bf16.msra.mxu0 %v4511
      %4594 = vmatprep.subr.bf16.mxu0 %v4508
      %4595 = vmatpush1.bf16.msra.mxu0 %v4507
      %4596 = vmatprep.subr.bf16.mxu0 %v4504
      %4597 = vmatpush1.bf16.msra.mxu0 %v4503
      %4598 = vmatprep.subr.bf16.mxu0 %v4500
      %4599 = vmatpush1.bf16.msra.mxu0 %v4499
      %4600 = vmatprep.subr.bf16.mxu0 %v4496
      %4601 = vmatpush1.bf16.msra.mxu0 %v4495
      %4602 = vmatprep.subr.bf16.mxu0 %v4492
      %4603 = vmatpush1.bf16.msra.mxu0 %v4491
      %4604 = vmatprep.subr.bf16.mxu0 %v4488
      %4605 = vmatpush1.bf16.msra.mxu0 %v4487
      %4606 = vmatprep.subr.bf16.mxu0 0
      %4607 = vmatpush2.bf16.msra.mxu0 0
      %4608 = vmatprep.subr.bf16.mxu0 0
      %4609 = vmatpush2.bf16.msra.mxu0 0
      %4610 = vmatprep.subr.bf16.mxu0 0
      %4611 = vmatpush2.bf16.msra.mxu0 0
      %4612 = vmatprep.subr.bf16.mxu0 0
      %4613 = vmatpush2.bf16.msra.mxu0 0
      %4614 = vmatprep.subr.bf16.mxu0 0
      %4615 = vmatpush2.bf16.msra.mxu0 0
      %4616 = vmatprep.subr.bf16.mxu0 0
      %4617 = vmatpush2.bf16.msra.mxu0 0
      %4618 = vmatprep.subr.bf16.mxu0 0
      %4619 = vmatpush2.bf16.msra.mxu0 0
      %4620 = vmatprep.subr.bf16.mxu0 0
      %4621 = vmatpush2.bf16.msra.mxu0 0
      %4622 = vmatprep.mubr.bf16.mxu0 0
      %4623 = vmatmul.mubr.bf16.gmra.mxu0 %v4356
      %v4624 = vpop.f32.mrf.mxu0
      %v4625 = vadd.f32 0.0, %v4624
      %v4626 = vpop.f32.mrf.mxu0
      %v4627 = vadd.f32 0.0, %v4626
      %v4628 = vpop.f32.mrf.mxu0
      %v4629 = vpop.f32.mrf.mxu0
      %4630 = vdwg.mxu0
      %v4631 = vadd.f32 %v285, %v4584
      %v4632 = vadd.f32 %v287, %v4586
      %v4633 = vadd.f32 %v398, %v4625
      %v4634 = vadd.f32 %v400, %v4627
      %v4635 = vmul.f32 %v4631, 0.5
      %v4636 = vtanh.pop %v4635
      %v4637 = vmul.f32 %v4636, 0.5
      %v4638 = vadd.f32 %v4637, 0.5
      %v4639 = vmul.f32 %v4632, 0.5
      %v4640 = vtanh.pop %v4639
      %v4641 = vmul.f32 %v4640, 0.5
      %v4642 = vadd.f32 %v4641, 0.5
      %v4643 = vtanh.pop %v4633
      %v4644 = vmul.f32 %v4634, 0.5
      %v4645 = vtanh.pop %v4644
      %v4646 = vmul.f32 %v4645, 0.5
      %v4647 = vadd.f32 %v4646, 0.5
      %v4648 = vld [vmem:[#allocation3] sm:$0xff]
      %v4649 = vmul.f32 %v4642, %v4648
      %v4650 = vmul.f32 %v4638, %v4643
      %v4651 = vadd.f32 %v4649, %v4650
      %4652 = vst [vmem:[#allocation3] sm:$0xff] %v4651
      %v4653 = vtanh.pop %v4651
      %v4654 = vmul.f32 %v4647, %v4653
      %v4655 = vpack.c.bf16 %v4654, %v4654
      %4656 = vst [vmem:[#allocation2] sm:$0xf] %v4655
    $region61: #{tpu_custom_call.1} parent=1 // pred_fallthru
      _
    %s4657 = sadd.s32 %s2820, 14
    %p4658 = scmp.lt.s32.totalorder %s4657, 8
    // Predicated region
    $region62: #{tpu_custom_call.1} parent=1 // pred_check
      %p4659 = pneg %p4658
    $region63: #{tpu_custom_call.1} parent=1 // pred_check_branch
      %4661 = sbr.rel (%p4659) target = $region65
    $region64: #{tpu_custom_call.1} parent=1 // pred_region
      %v4662 = vld [vmem:[#allocation2] sm:$0xf]
      %v4663 = vld [vmem:[#allocation7] sm:$0xff]
      %v4664 = vld [vmem:[#allocation7 + $0x8] sm:$0xff]
      %v4665 = vld [vmem:[#allocation7 + $0x10] sm:$0xff]
      %v4666 = vld [vmem:[#allocation7 + $0x18] sm:$0xff]
      %v4667 = vld [vmem:[#allocation7 + $0x20] sm:$0xff]
      %v4668 = vld [vmem:[#allocation7 + $0x28] sm:$0xff]
      %v4669 = vld [vmem:[#allocation7 + $0x30] sm:$0xff]
      %v4670 = vld [vmem:[#allocation7 + $0x38] sm:$0xff]
      %v4671 = vld [vmem:[#allocation7 + $0x40] sm:$0xff]
      %v4672 = vld [vmem:[#allocation7 + $0x48] sm:$0xff]
      %v4673 = vld [vmem:[#allocation7 + $0x50] sm:$0xff]
      %v4674 = vld [vmem:[#allocation7 + $0x58] sm:$0xff]
      %v4675 = vld [vmem:[#allocation7 + $0x60] sm:$0xff]
      %v4676 = vld [vmem:[#allocation7 + $0x68] sm:$0xff]
      %v4677 = vld [vmem:[#allocation7 + $0x70] sm:$0xff]
      %v4678 = vld [vmem:[#allocation7 + $0x78] sm:$0xff]
      %v4679 = vld [vmem:[#allocation7 + $0x80] sm:$0xff]
      %v4680 = vld [vmem:[#allocation7 + $0x88] sm:$0xff]
      %v4681 = vld [vmem:[#allocation7 + $0x90] sm:$0xff]
      %v4682 = vld [vmem:[#allocation7 + $0x98] sm:$0xff]
      %v4683 = vld [vmem:[#allocation7 + $0xa0] sm:$0xff]
      %v4684 = vld [vmem:[#allocation7 + $0xa8] sm:$0xff]
      %v4685 = vld [vmem:[#allocation7 + $0xb0] sm:$0xff]
      %v4686 = vld [vmem:[#allocation7 + $0xb8] sm:$0xff]
      %v4687 = vld [vmem:[#allocation7 + $0xc0] sm:$0xff]
      %v4688 = vld [vmem:[#allocation7 + $0xc8] sm:$0xff]
      %v4689 = vld [vmem:[#allocation7 + $0xd0] sm:$0xff]
      %v4690 = vld [vmem:[#allocation7 + $0xd8] sm:$0xff]
      %v4691 = vld [vmem:[#allocation7 + $0xe0] sm:$0xff]
      %v4692 = vld [vmem:[#allocation7 + $0xe8] sm:$0xff]
      %v4693 = vld [vmem:[#allocation7 + $0xf0] sm:$0xff]
      %v4694 = vld [vmem:[#allocation7 + $0xf8] sm:$0xff]
      %v4727 = vunpack.c.l.b16 %v4663
      %v4728 = vunpack.c.h.b16 %v4663
      %v4729 = vunpack.c.l.b16 %v4664
      %v4730 = vunpack.c.h.b16 %v4664
      %v4731 = vunpack.c.l.b16 %v4665
      %v4732 = vunpack.c.h.b16 %v4665
      %v4733 = vunpack.c.l.b16 %v4666
      %v4734 = vunpack.c.h.b16 %v4666
      %v4735 = vunpack.c.l.b16 %v4667
      %v4736 = vunpack.c.h.b16 %v4667
      %v4737 = vunpack.c.l.b16 %v4668
      %v4738 = vunpack.c.h.b16 %v4668
      %v4739 = vunpack.c.l.b16 %v4669
      %v4740 = vunpack.c.h.b16 %v4669
      %v4741 = vunpack.c.l.b16 %v4670
      %v4742 = vunpack.c.h.b16 %v4670
      %v4743 = vunpack.c.l.b16 %v4671
      %v4744 = vunpack.c.h.b16 %v4671
      %v4745 = vunpack.c.l.b16 %v4672
      %v4746 = vunpack.c.h.b16 %v4672
      %v4747 = vunpack.c.l.b16 %v4673
      %v4748 = vunpack.c.h.b16 %v4673
      %v4749 = vunpack.c.l.b16 %v4674
      %v4750 = vunpack.c.h.b16 %v4674
      %v4751 = vunpack.c.l.b16 %v4675
      %v4752 = vunpack.c.h.b16 %v4675
      %v4753 = vunpack.c.l.b16 %v4676
      %v4754 = vunpack.c.h.b16 %v4676
      %v4755 = vunpack.c.l.b16 %v4677
      %v4756 = vunpack.c.h.b16 %v4677
      %v4757 = vunpack.c.l.b16 %v4678
      %v4758 = vunpack.c.h.b16 %v4678
      %v4759 = vunpack.c.l.b16 %v4679
      %v4760 = vunpack.c.h.b16 %v4679
      %v4761 = vunpack.c.l.b16 %v4680
      %v4762 = vunpack.c.h.b16 %v4680
      %v4763 = vunpack.c.l.b16 %v4681
      %v4764 = vunpack.c.h.b16 %v4681
      %v4765 = vunpack.c.l.b16 %v4682
      %v4766 = vunpack.c.h.b16 %v4682
      %v4767 = vunpack.c.l.b16 %v4683
      %v4768 = vunpack.c.h.b16 %v4683
      %v4769 = vunpack.c.l.b16 %v4684
      %v4770 = vunpack.c.h.b16 %v4684
      %v4771 = vunpack.c.l.b16 %v4685
      %v4772 = vunpack.c.h.b16 %v4685
      %v4773 = vunpack.c.l.b16 %v4686
      %v4774 = vunpack.c.h.b16 %v4686
      %v4775 = vunpack.c.l.b16 %v4687
      %v4776 = vunpack.c.h.b16 %v4687
      %v4777 = vunpack.c.l.b16 %v4688
      %v4778 = vunpack.c.h.b16 %v4688
      %v4779 = vunpack.c.l.b16 %v4689
      %v4780 = vunpack.c.h.b16 %v4689
      %v4781 = vunpack.c.l.b16 %v4690
      %v4782 = vunpack.c.h.b16 %v4690
      %v4783 = vunpack.c.l.b16 %v4691
      %v4784 = vunpack.c.h.b16 %v4691
      %v4785 = vunpack.c.l.b16 %v4692
      %v4786 = vunpack.c.h.b16 %v4692
      %v4787 = vunpack.c.l.b16 %v4693
      %v4788 = vunpack.c.h.b16 %v4693
      %v4789 = vunpack.c.l.b16 %v4694
      %v4790 = vunpack.c.h.b16 %v4694
      %v4791 = vpack.c.b16 %v4731, %v4727
      %v4792 = vpack.c.b16 %v4732, %v4728
      %v4793 = vpack.c.b16 %v4733, %v4729
      %v4794 = vpack.c.b16 %v4734, %v4730
      %v4795 = vpack.c.b16 %v4739, %v4735
      %v4796 = vpack.c.b16 %v4740, %v4736
      %v4797 = vpack.c.b16 %v4741, %v4737
      %v4798 = vpack.c.b16 %v4742, %v4738
      %v4799 = vpack.c.b16 %v4747, %v4743
      %v4800 = vpack.c.b16 %v4748, %v4744
      %v4801 = vpack.c.b16 %v4749, %v4745
      %v4802 = vpack.c.b16 %v4750, %v4746
      %v4803 = vpack.c.b16 %v4755, %v4751
      %v4804 = vpack.c.b16 %v4756, %v4752
      %v4805 = vpack.c.b16 %v4757, %v4753
      %v4806 = vpack.c.b16 %v4758, %v4754
      %v4807 = vpack.c.b16 %v4763, %v4759
      %v4808 = vpack.c.b16 %v4764, %v4760
      %v4809 = vpack.c.b16 %v4765, %v4761
      %v4810 = vpack.c.b16 %v4766, %v4762
      %v4811 = vpack.c.b16 %v4771, %v4767
      %v4812 = vpack.c.b16 %v4772, %v4768
      %v4813 = vpack.c.b16 %v4773, %v4769
      %v4814 = vpack.c.b16 %v4774, %v4770
      %v4815 = vpack.c.b16 %v4779, %v4775
      %v4816 = vpack.c.b16 %v4780, %v4776
      %v4817 = vpack.c.b16 %v4781, %v4777
      %v4818 = vpack.c.b16 %v4782, %v4778
      %v4819 = vpack.c.b16 %v4787, %v4783
      %v4820 = vpack.c.b16 %v4788, %v4784
      %v4821 = vpack.c.b16 %v4789, %v4785
      %v4822 = vpack.c.b16 %v4790, %v4786
      %4855 = vmatprep.subr.bf16.mxu0 %v4820
      %4856 = vmatpush1.bf16.msra.mxu0 %v4819
      %4857 = vmatprep.subr.bf16.mxu0 %v4816
      %4858 = vmatpush1.bf16.msra.mxu0 %v4815
      %4859 = vmatprep.subr.bf16.mxu0 %v4812
      %4860 = vmatpush1.bf16.msra.mxu0 %v4811
      %4861 = vmatprep.subr.bf16.mxu0 %v4808
      %4862 = vmatpush1.bf16.msra.mxu0 %v4807
      %4863 = vmatprep.subr.bf16.mxu0 %v4804
      %4864 = vmatpush1.bf16.msra.mxu0 %v4803
      %4865 = vmatprep.subr.bf16.mxu0 %v4800
      %4866 = vmatpush1.bf16.msra.mxu0 %v4799
      %4867 = vmatprep.subr.bf16.mxu0 %v4796
      %4868 = vmatpush1.bf16.msra.mxu0 %v4795
      %4869 = vmatprep.subr.bf16.mxu0 %v4792
      %4870 = vmatpush1.bf16.msra.mxu0 %v4791
      %4871 = vmatprep.subr.bf16.mxu0 0
      %4872 = vmatpush2.bf16.msra.mxu0 0
      %4873 = vmatprep.subr.bf16.mxu0 0
      %4874 = vmatpush2.bf16.msra.mxu0 0
      %4875 = vmatprep.subr.bf16.mxu0 0
      %4876 = vmatpush2.bf16.msra.mxu0 0
      %4877 = vmatprep.subr.bf16.mxu0 0
      %4878 = vmatpush2.bf16.msra.mxu0 0
      %4879 = vmatprep.subr.bf16.mxu0 0
      %4880 = vmatpush2.bf16.msra.mxu0 0
      %4881 = vmatprep.subr.bf16.mxu0 0
      %4882 = vmatpush2.bf16.msra.mxu0 0
      %4883 = vmatprep.subr.bf16.mxu0 0
      %4884 = vmatpush2.bf16.msra.mxu0 0
      %4885 = vmatprep.subr.bf16.mxu0 0
      %4886 = vmatpush2.bf16.msra.mxu0 0
      %4887 = vmatprep.mubr.bf16.mxu0 0
      %4888 = vmatmul.mubr.bf16.gmra.mxu0 %v4662
      %v4889 = vpop.f32.mrf.mxu0
      %v4890 = vadd.f32 0.0, %v4889
      %v4891 = vpop.f32.mrf.mxu0
      %v4892 = vadd.f32 0.0, %v4891
      %v4893 = vpop.f32.mrf.mxu0
      %v4894 = vpop.f32.mrf.mxu0
      %4895 = vdwg.mxu0
      %4896 = vmatprep.subr.bf16.mxu0 %v4822
      %4897 = vmatpush1.bf16.msra.mxu0 %v4821
      %4898 = vmatprep.subr.bf16.mxu0 %v4818
      %4899 = vmatpush1.bf16.msra.mxu0 %v4817
      %4900 = vmatprep.subr.bf16.mxu0 %v4814
      %4901 = vmatpush1.bf16.msra.mxu0 %v4813
      %4902 = vmatprep.subr.bf16.mxu0 %v4810
      %4903 = vmatpush1.bf16.msra.mxu0 %v4809
      %4904 = vmatprep.subr.bf16.mxu0 %v4806
      %4905 = vmatpush1.bf16.msra.mxu0 %v4805
      %4906 = vmatprep.subr.bf16.mxu0 %v4802
      %4907 = vmatpush1.bf16.msra.mxu0 %v4801
      %4908 = vmatprep.subr.bf16.mxu0 %v4798
      %4909 = vmatpush1.bf16.msra.mxu0 %v4797
      %4910 = vmatprep.subr.bf16.mxu0 %v4794
      %4911 = vmatpush1.bf16.msra.mxu0 %v4793
      %4912 = vmatprep.subr.bf16.mxu0 0
      %4913 = vmatpush2.bf16.msra.mxu0 0
      %4914 = vmatprep.subr.bf16.mxu0 0
      %4915 = vmatpush2.bf16.msra.mxu0 0
      %4916 = vmatprep.subr.bf16.mxu0 0
      %4917 = vmatpush2.bf16.msra.mxu0 0
      %4918 = vmatprep.subr.bf16.mxu0 0
      %4919 = vmatpush2.bf16.msra.mxu0 0
      %4920 = vmatprep.subr.bf16.mxu0 0
      %4921 = vmatpush2.bf16.msra.mxu0 0
      %4922 = vmatprep.subr.bf16.mxu0 0
      %4923 = vmatpush2.bf16.msra.mxu0 0
      %4924 = vmatprep.subr.bf16.mxu0 0
      %4925 = vmatpush2.bf16.msra.mxu0 0
      %4926 = vmatprep.subr.bf16.mxu0 0
      %4927 = vmatpush2.bf16.msra.mxu0 0
      %4928 = vmatprep.mubr.bf16.mxu0 0
      %4929 = vmatmul.mubr.bf16.gmra.mxu0 %v4662
      %v4930 = vpop.f32.mrf.mxu0
      %v4931 = vadd.f32 0.0, %v4930
      %v4932 = vpop.f32.mrf.mxu0
      %v4933 = vadd.f32 0.0, %v4932
      %v4934 = vpop.f32.mrf.mxu0
      %v4935 = vpop.f32.mrf.mxu0
      %4936 = vdwg.mxu0
      %v4937 = vadd.f32 %v291, %v4890
      %v4938 = vadd.f32 %v293, %v4892
      %v4939 = vadd.f32 %v404, %v4931
      %v4940 = vadd.f32 %v406, %v4933
      %v4941 = vmul.f32 %v4937, 0.5
      %v4942 = vtanh.pop %v4941
      %v4943 = vmul.f32 %v4942, 0.5
      %v4944 = vadd.f32 %v4943, 0.5
      %v4945 = vmul.f32 %v4938, 0.5
      %v4946 = vtanh.pop %v4945
      %v4947 = vmul.f32 %v4946, 0.5
      %v4948 = vadd.f32 %v4947, 0.5
      %v4949 = vtanh.pop %v4939
      %v4950 = vmul.f32 %v4940, 0.5
      %v4951 = vtanh.pop %v4950
      %v4952 = vmul.f32 %v4951, 0.5
      %v4953 = vadd.f32 %v4952, 0.5
      %v4954 = vld [vmem:[#allocation3] sm:$0xff]
      %v4955 = vmul.f32 %v4948, %v4954
      %v4956 = vmul.f32 %v4944, %v4949
      %v4957 = vadd.f32 %v4955, %v4956
      %4958 = vst [vmem:[#allocation3] sm:$0xff] %v4957
      %v4959 = vtanh.pop %v4957
      %v4960 = vmul.f32 %v4953, %v4959
      %v4961 = vpack.c.bf16 %v4960, %v4960
      %4962 = vst [vmem:[#allocation2] sm:$0xf] %v4961
    $region65: #{tpu_custom_call.1} parent=1 // pred_fallthru
      _
    %s4963 = sadd.s32 %s2820, 15
    %p4964 = scmp.lt.s32.totalorder %s4963, 8
    // Predicated region
    $region66: #{tpu_custom_call.1} parent=1 // pred_check
      %p4965 = pneg %p4964
    $region67: #{tpu_custom_call.1} parent=1 // pred_check_branch
      %4967 = sbr.rel (%p4965) target = $region69
    $region68: #{tpu_custom_call.1} parent=1 // pred_region
      %v4968 = vld [vmem:[#allocation2] sm:$0xf]
      %v4969 = vld [vmem:[#allocation7] sm:$0xff]
      %v4970 = vld [vmem:[#allocation7 + $0x8] sm:$0xff]
      %v4971 = vld [vmem:[#allocation7 + $0x10] sm:$0xff]
      %v4972 = vld [vmem:[#allocation7 + $0x18] sm:$0xff]
      %v4973 = vld [vmem:[#allocation7 + $0x20] sm:$0xff]
      %v4974 = vld [vmem:[#allocation7 + $0x28] sm:$0xff]
      %v4975 = vld [vmem:[#allocation7 + $0x30] sm:$0xff]
      %v4976 = vld [vmem:[#allocation7 + $0x38] sm:$0xff]
      %v4977 = vld [vmem:[#allocation7 + $0x40] sm:$0xff]
      %v4978 = vld [vmem:[#allocation7 + $0x48] sm:$0xff]
      %v4979 = vld [vmem:[#allocation7 + $0x50] sm:$0xff]
      %v4980 = vld [vmem:[#allocation7 + $0x58] sm:$0xff]
      %v4981 = vld [vmem:[#allocation7 + $0x60] sm:$0xff]
      %v4982 = vld [vmem:[#allocation7 + $0x68] sm:$0xff]
      %v4983 = vld [vmem:[#allocation7 + $0x70] sm:$0xff]
      %v4984 = vld [vmem:[#allocation7 + $0x78] sm:$0xff]
      %v4985 = vld [vmem:[#allocation7 + $0x80] sm:$0xff]
      %v4986 = vld [vmem:[#allocation7 + $0x88] sm:$0xff]
      %v4987 = vld [vmem:[#allocation7 + $0x90] sm:$0xff]
      %v4988 = vld [vmem:[#allocation7 + $0x98] sm:$0xff]
      %v4989 = vld [vmem:[#allocation7 + $0xa0] sm:$0xff]
      %v4990 = vld [vmem:[#allocation7 + $0xa8] sm:$0xff]
      %v4991 = vld [vmem:[#allocation7 + $0xb0] sm:$0xff]
      %v4992 = vld [vmem:[#allocation7 + $0xb8] sm:$0xff]
      %v4993 = vld [vmem:[#allocation7 + $0xc0] sm:$0xff]
      %v4994 = vld [vmem:[#allocation7 + $0xc8] sm:$0xff]
      %v4995 = vld [vmem:[#allocation7 + $0xd0] sm:$0xff]
      %v4996 = vld [vmem:[#allocation7 + $0xd8] sm:$0xff]
      %v4997 = vld [vmem:[#allocation7 + $0xe0] sm:$0xff]
      %v4998 = vld [vmem:[#allocation7 + $0xe8] sm:$0xff]
      %v4999 = vld [vmem:[#allocation7 + $0xf0] sm:$0xff]
      %v5000 = vld [vmem:[#allocation7 + $0xf8] sm:$0xff]
      %v5033 = vunpack.c.l.b16 %v4969
      %v5034 = vunpack.c.h.b16 %v4969
      %v5035 = vunpack.c.l.b16 %v4970
      %v5036 = vunpack.c.h.b16 %v4970
      %v5037 = vunpack.c.l.b16 %v4971
      %v5038 = vunpack.c.h.b16 %v4971
      %v5039 = vunpack.c.l.b16 %v4972
      %v5040 = vunpack.c.h.b16 %v4972
      %v5041 = vunpack.c.l.b16 %v4973
      %v5042 = vunpack.c.h.b16 %v4973
      %v5043 = vunpack.c.l.b16 %v4974
      %v5044 = vunpack.c.h.b16 %v4974
      %v5045 = vunpack.c.l.b16 %v4975
      %v5046 = vunpack.c.h.b16 %v4975
      %v5047 = vunpack.c.l.b16 %v4976
      %v5048 = vunpack.c.h.b16 %v4976
      %v5049 = vunpack.c.l.b16 %v4977
      %v5050 = vunpack.c.h.b16 %v4977
      %v5051 = vunpack.c.l.b16 %v4978
      %v5052 = vunpack.c.h.b16 %v4978
      %v5053 = vunpack.c.l.b16 %v4979
      %v5054 = vunpack.c.h.b16 %v4979
      %v5055 = vunpack.c.l.b16 %v4980
      %v5056 = vunpack.c.h.b16 %v4980
      %v5057 = vunpack.c.l.b16 %v4981
      %v5058 = vunpack.c.h.b16 %v4981
      %v5059 = vunpack.c.l.b16 %v4982
      %v5060 = vunpack.c.h.b16 %v4982
      %v5061 = vunpack.c.l.b16 %v4983
      %v5062 = vunpack.c.h.b16 %v4983
      %v5063 = vunpack.c.l.b16 %v4984
      %v5064 = vunpack.c.h.b16 %v4984
      %v5065 = vunpack.c.l.b16 %v4985
      %v5066 = vunpack.c.h.b16 %v4985
      %v5067 = vunpack.c.l.b16 %v4986
      %v5068 = vunpack.c.h.b16 %v4986
      %v5069 = vunpack.c.l.b16 %v4987
      %v5070 = vunpack.c.h.b16 %v4987
      %v5071 = vunpack.c.l.b16 %v4988
      %v5072 = vunpack.c.h.b16 %v4988
      %v5073 = vunpack.c.l.b16 %v4989
      %v5074 = vunpack.c.h.b16 %v4989
      %v5075 = vunpack.c.l.b16 %v4990
      %v5076 = vunpack.c.h.b16 %v4990
      %v5077 = vunpack.c.l.b16 %v4991
      %v5078 = vunpack.c.h.b16 %v4991
      %v5079 = vunpack.c.l.b16 %v4992
      %v5080 = vunpack.c.h.b16 %v4992
      %v5081 = vunpack.c.l.b16 %v4993
      %v5082 = vunpack.c.h.b16 %v4993
      %v5083 = vunpack.c.l.b16 %v4994
      %v5084 = vunpack.c.h.b16 %v4994
      %v5085 = vunpack.c.l.b16 %v4995
      %v5086 = vunpack.c.h.b16 %v4995
      %v5087 = vunpack.c.l.b16 %v4996
      %v5088 = vunpack.c.h.b16 %v4996
      %v5089 = vunpack.c.l.b16 %v4997
      %v5090 = vunpack.c.h.b16 %v4997
      %v5091 = vunpack.c.l.b16 %v4998
      %v5092 = vunpack.c.h.b16 %v4998
      %v5093 = vunpack.c.l.b16 %v4999
      %v5094 = vunpack.c.h.b16 %v4999
      %v5095 = vunpack.c.l.b16 %v5000
      %v5096 = vunpack.c.h.b16 %v5000
      %v5097 = vpack.c.b16 %v5037, %v5033
      %v5098 = vpack.c.b16 %v5038, %v5034
      %v5099 = vpack.c.b16 %v5039, %v5035
      %v5100 = vpack.c.b16 %v5040, %v5036
      %v5101 = vpack.c.b16 %v5045, %v5041
      %v5102 = vpack.c.b16 %v5046, %v5042
      %v5103 = vpack.c.b16 %v5047, %v5043
      %v5104 = vpack.c.b16 %v5048, %v5044
      %v5105 = vpack.c.b16 %v5053, %v5049
      %v5106 = vpack.c.b16 %v5054, %v5050
      %v5107 = vpack.c.b16 %v5055, %v5051
      %v5108 = vpack.c.b16 %v5056, %v5052
      %v5109 = vpack.c.b16 %v5061, %v5057
      %v5110 = vpack.c.b16 %v5062, %v5058
      %v5111 = vpack.c.b16 %v5063, %v5059
      %v5112 = vpack.c.b16 %v5064, %v5060
      %v5113 = vpack.c.b16 %v5069, %v5065
      %v5114 = vpack.c.b16 %v5070, %v5066
      %v5115 = vpack.c.b16 %v5071, %v5067
      %v5116 = vpack.c.b16 %v5072, %v5068
      %v5117 = vpack.c.b16 %v5077, %v5073
      %v5118 = vpack.c.b16 %v5078, %v5074
      %v5119 = vpack.c.b16 %v5079, %v5075
      %v5120 = vpack.c.b16 %v5080, %v5076
      %v5121 = vpack.c.b16 %v5085, %v5081
      %v5122 = vpack.c.b16 %v5086, %v5082
      %v5123 = vpack.c.b16 %v5087, %v5083
      %v5124 = vpack.c.b16 %v5088, %v5084
      %v5125 = vpack.c.b16 %v5093, %v5089
      %v5126 = vpack.c.b16 %v5094, %v5090
      %v5127 = vpack.c.b16 %v5095, %v5091
      %v5128 = vpack.c.b16 %v5096, %v5092
      %5161 = vmatprep.subr.bf16.mxu0 %v5126
      %5162 = vmatpush1.bf16.msra.mxu0 %v5125
      %5163 = vmatprep.subr.bf16.mxu0 %v5122
      %5164 = vmatpush1.bf16.msra.mxu0 %v5121
      %5165 = vmatprep.subr.bf16.mxu0 %v5118
      %5166 = vmatpush1.bf16.msra.mxu0 %v5117
      %5167 = vmatprep.subr.bf16.mxu0 %v5114
      %5168 = vmatpush1.bf16.msra.mxu0 %v5113
      %5169 = vmatprep.subr.bf16.mxu0 %v5110
      %5170 = vmatpush1.bf16.msra.mxu0 %v5109
      %5171 = vmatprep.subr.bf16.mxu0 %v5106
      %5172 = vmatpush1.bf16.msra.mxu0 %v5105
      %5173 = vmatprep.subr.bf16.mxu0 %v5102
      %5174 = vmatpush1.bf16.msra.mxu0 %v5101
      %5175 = vmatprep.subr.bf16.mxu0 %v5098
      %5176 = vmatpush1.bf16.msra.mxu0 %v5097
      %5177 = vmatprep.subr.bf16.mxu0 0
      %5178 = vmatpush2.bf16.msra.mxu0 0
      %5179 = vmatprep.subr.bf16.mxu0 0
      %5180 = vmatpush2.bf16.msra.mxu0 0
      %5181 = vmatprep.subr.bf16.mxu0 0
      %5182 = vmatpush2.bf16.msra.mxu0 0
      %5183 = vmatprep.subr.bf16.mxu0 0
      %5184 = vmatpush2.bf16.msra.mxu0 0
      %5185 = vmatprep.subr.bf16.mxu0 0
      %5186 = vmatpush2.bf16.msra.mxu0 0
      %5187 = vmatprep.subr.bf16.mxu0 0
      %5188 = vmatpush2.bf16.msra.mxu0 0
      %5189 = vmatprep.subr.bf16.mxu0 0
      %5190 = vmatpush2.bf16.msra.mxu0 0
      %5191 = vmatprep.subr.bf16.mxu0 0
      %5192 = vmatpush2.bf16.msra.mxu0 0
      %5193 = vmatprep.mubr.bf16.mxu0 0
      %5194 = vmatmul.mubr.bf16.gmra.mxu0 %v4968
      %v5195 = vpop.f32.mrf.mxu0
      %v5196 = vadd.f32 0.0, %v5195
      %v5197 = vpop.f32.mrf.mxu0
      %v5198 = vadd.f32 0.0, %v5197
      %v5199 = vpop.f32.mrf.mxu0
      %v5200 = vpop.f32.mrf.mxu0
      %5201 = vdwg.mxu0
      %5202 = vmatprep.subr.bf16.mxu0 %v5128
      %5203 = vmatpush1.bf16.msra.mxu0 %v5127
      %5204 = vmatprep.subr.bf16.mxu0 %v5124
      %5205 = vmatpush1.bf16.msra.mxu0 %v5123
      %5206 = vmatprep.subr.bf16.mxu0 %v5120
      %5207 = vmatpush1.bf16.msra.mxu0 %v5119
      %5208 = vmatprep.subr.bf16.mxu0 %v5116
      %5209 = vmatpush1.bf16.msra.mxu0 %v5115
      %5210 = vmatprep.subr.bf16.mxu0 %v5112
      %5211 = vmatpush1.bf16.msra.mxu0 %v5111
      %5212 = vmatprep.subr.bf16.mxu0 %v5108
      %5213 = vmatpush1.bf16.msra.mxu0 %v5107
      %5214 = vmatprep.subr.bf16.mxu0 %v5104
      %5215 = vmatpush1.bf16.msra.mxu0 %v5103
      %5216 = vmatprep.subr.bf16.mxu0 %v5100
      %5217 = vmatpush1.bf16.msra.mxu0 %v5099
      %5218 = vmatprep.subr.bf16.mxu0 0
      %5219 = vmatpush2.bf16.msra.mxu0 0
      %5220 = vmatprep.subr.bf16.mxu0 0
      %5221 = vmatpush2.bf16.msra.mxu0 0
      %5222 = vmatprep.subr.bf16.mxu0 0
      %5223 = vmatpush2.bf16.msra.mxu0 0
      %5224 = vmatprep.subr.bf16.mxu0 0
      %5225 = vmatpush2.bf16.msra.mxu0 0
      %5226 = vmatprep.subr.bf16.mxu0 0
      %5227 = vmatpush2.bf16.msra.mxu0 0
      %5228 = vmatprep.subr.bf16.mxu0 0
      %5229 = vmatpush2.bf16.msra.mxu0 0
      %5230 = vmatprep.subr.bf16.mxu0 0
      %5231 = vmatpush2.bf16.msra.mxu0 0
      %5232 = vmatprep.subr.bf16.mxu0 0
      %5233 = vmatpush2.bf16.msra.mxu0 0
      %5234 = vmatprep.mubr.bf16.mxu0 0
      %5235 = vmatmul.mubr.bf16.gmra.mxu0 %v4968
      %v5236 = vpop.f32.mrf.mxu0
      %v5237 = vadd.f32 0.0, %v5236
      %v5238 = vpop.f32.mrf.mxu0
      %v5239 = vadd.f32 0.0, %v5238
      %v5240 = vpop.f32.mrf.mxu0
      %v5241 = vpop.f32.mrf.mxu0
      %5242 = vdwg.mxu0
      %v5243 = vadd.f32 %v295, %v5196
      %v5244 = vadd.f32 %v297, %v5198
      %v5245 = vadd.f32 %v408, %v5237
      %v5246 = vadd.f32 %v410, %v5239
      %v5247 = vmul.f32 %v5243, 0.5
      %v5248 = vtanh.pop %v5247
      %v5249 = vmul.f32 %v5248, 0.5
      %v5250 = vadd.f32 %v5249, 0.5
      %v5251 = vmul.f32 %v5244, 0.5
      %v5252 = vtanh.pop %v5251
      %v5253 = vmul.f32 %v5252, 0.5
      %v5254 = vadd.f32 %v5253, 0.5
      %v5255 = vtanh.pop %v5245
      %v5256 = vmul.f32 %v5246, 0.5
      %v5257 = vtanh.pop %v5256
      %v5258 = vmul.f32 %v5257, 0.5
      %v5259 = vadd.f32 %v5258, 0.5
      %v5260 = vld [vmem:[#allocation3] sm:$0xff]
      %v5261 = vmul.f32 %v5254, %v5260
      %v5262 = vmul.f32 %v5250, %v5255
      %v5263 = vadd.f32 %v5261, %v5262
      %5264 = vst [vmem:[#allocation3] sm:$0xff] %v5263
      %v5265 = vtanh.pop %v5263
      %v5266 = vmul.f32 %v5259, %v5265
      %v5267 = vpack.c.bf16 %v5266, %v5266
      %5268 = vst [vmem:[#allocation2] sm:$0xf] %v5267
    $region69: #{tpu_custom_call.1} parent=1 // pred_fallthru
      _
    // Predicated region
    $region70: #{tpu_custom_call.1} parent=1 // pred_check
      %p5269 = pneg %p53
    $region71: #{tpu_custom_call.1} parent=1 // pred_check_branch
      %5271 = sbr.rel (%p5269) target = $region73
    $region72: #{tpu_custom_call.1} parent=1 // pred_region
      %v5272 = vld [vmem:[#allocation2] sm:$0xf]
      %v5273 = vld [vmem:[%s4] sm:$0xf]
      %v5274 = vld [vmem:[%s4 + $0x4] sm:$0xf]
      %v5275 = vld [vmem:[%s4 + $0x8] sm:$0xf]
      %v5276 = vld [vmem:[%s4 + $0xc] sm:$0xf]
      %v5277 = vld [vmem:[%s4 + $0x10] sm:$0xf]
      %v5278 = vld [vmem:[%s4 + $0x14] sm:$0xf]
      %v5279 = vld [vmem:[%s4 + $0x18] sm:$0xf]
      %v5280 = vld [vmem:[%s4 + $0x1c] sm:$0xf]
      %v5281 = vld [vmem:[%s4 + $0x20] sm:$0xf]
      %v5282 = vld [vmem:[%s4 + $0x24] sm:$0xf]
      %v5283 = vld [vmem:[%s4 + $0x28] sm:$0xf]
      %v5284 = vld [vmem:[%s4 + $0x2c] sm:$0xf]
      %v5285 = vld [vmem:[%s4 + $0x30] sm:$0xf]
      %v5286 = vld [vmem:[%s4 + $0x34] sm:$0xf]
      %v5287 = vld [vmem:[%s4 + $0x38] sm:$0xf]
      %v5288 = vld [vmem:[%s4 + $0x3c] sm:$0xf]
      %v5289 = vld [vmem:[%s5] sm:$0x1]
      %v5291 = vlaneseq
      %v5292 = vshrl.u32 %v5291, 7
      %v5293 = vsub.s32 0, %v5292
      %v5294 = vrot.slane %v5289, %v5293
      %v5312 = vunpack.c.l.b16 %v5273
      %v5313 = vunpack.c.l.b16 %v5274
      %v5314 = vunpack.c.l.b16 %v5275
      %v5315 = vunpack.c.l.b16 %v5276
      %v5316 = vunpack.c.l.b16 %v5277
      %v5317 = vunpack.c.l.b16 %v5278
      %v5318 = vunpack.c.l.b16 %v5279
      %v5319 = vunpack.c.l.b16 %v5280
      %v5320 = vunpack.c.l.b16 %v5281
      %v5321 = vunpack.c.l.b16 %v5282
      %v5322 = vunpack.c.l.b16 %v5283
      %v5323 = vunpack.c.l.b16 %v5284
      %v5324 = vunpack.c.l.b16 %v5285
      %v5325 = vunpack.c.l.b16 %v5286
      %v5326 = vunpack.c.l.b16 %v5287
      %v5327 = vunpack.c.l.b16 %v5288
      %v5328 = vpack.c.b16 %v5313, %v5312
      %v5329 = vpack.c.b16 %v5315, %v5314
      %v5330 = vpack.c.b16 %v5317, %v5316
      %v5331 = vpack.c.b16 %v5319, %v5318
      %v5332 = vpack.c.b16 %v5321, %v5320
      %v5333 = vpack.c.b16 %v5323, %v5322
      %v5334 = vpack.c.b16 %v5325, %v5324
      %v5335 = vpack.c.b16 %v5327, %v5326
      %5344 = vmatprep.subr.bf16.mxu0 0
      %5345 = vmatpush1.bf16.msra.mxu0 %v5335
      %5346 = vmatprep.subr.bf16.mxu0 0
      %5347 = vmatpush1.bf16.msra.mxu0 %v5334
      %5348 = vmatprep.subr.bf16.mxu0 0
      %5349 = vmatpush1.bf16.msra.mxu0 %v5333
      %5350 = vmatprep.subr.bf16.mxu0 0
      %5351 = vmatpush1.bf16.msra.mxu0 %v5332
      %5352 = vmatprep.subr.bf16.mxu0 0
      %5353 = vmatpush1.bf16.msra.mxu0 %v5331
      %5354 = vmatprep.subr.bf16.mxu0 0
      %5355 = vmatpush1.bf16.msra.mxu0 %v5330
      %5356 = vmatprep.subr.bf16.mxu0 0
      %5357 = vmatpush1.bf16.msra.mxu0 %v5329
      %5358 = vmatprep.subr.bf16.mxu0 0
      %5359 = vmatpush1.bf16.msra.mxu0 %v5328
      %5360 = vmatprep.subr.bf16.mxu0 0
      %5361 = vmatpush2.bf16.msra.mxu0 0
      %5362 = vmatprep.subr.bf16.mxu0 0
      %5363 = vmatpush2.bf16.msra.mxu0 0
      %5364 = vmatprep.subr.bf16.mxu0 0
      %5365 = vmatpush2.bf16.msra.mxu0 0
      %5366 = vmatprep.subr.bf16.mxu0 0
      %5367 = vmatpush2.bf16.msra.mxu0 0
      %5368 = vmatprep.subr.bf16.mxu0 0
      %5369 = vmatpush2.bf16.msra.mxu0 0
      %5370 = vmatprep.subr.bf16.mxu0 0
      %5371 = vmatpush2.bf16.msra.mxu0 0
      %5372 = vmatprep.subr.bf16.mxu0 0
      %5373 = vmatpush2.bf16.msra.mxu0 0
      %5374 = vmatprep.subr.bf16.mxu0 0
      %5375 = vmatpush2.bf16.msra.mxu0 0
      %5376 = vmatprep.mubr.bf16.mxu0 0
      %5377 = vmatmul.mubr.bf16.gmra.mxu0 %v5272
      %v5378 = vpop.f32.mrf.mxu0
      %v5379 = vadd.f32 %v5294, %v5378
      %v5380 = vpop.f32.mrf.mxu0
      %v5381 = vpop.f32.mrf.mxu0
      %v5382 = vpop.f32.mrf.mxu0
      %5383 = vdwg.mxu0
      %vm5384 = vcmask 64512
      %5385 = vst.msk [vmem:[#allocation9] sm:$0xff] %vm5384, %v5379
    $region73: #{tpu_custom_call.1} parent=1 // pred_fallthru
      _
    // Predicated region
    $region74: #{tpu_custom_call.1} parent=1 // pred_check
      _
    $region75: #{tpu_custom_call.1} parent=1 // pred_check_branch
      %5387 = sbr.rel (0) target = $region77
    $region76: #{tpu_custom_call.1} parent=1 // pred_region
      %s5389 = ssub.s32 128, 128
      %5390 = vsyncadd [#allocation6], %s5389
      %s5392 = sshll.u32 [#allocation9], 4
      %s5393 = int_to_ptr.vmem [resolvable:$true] %s5392
      %5395 = dma.vmem_to_hbm [thread:$0]  %s5393, 128, %s6, [#allocation6]
    $region77: #{tpu_custom_call.1} parent=1 // pred_fallthru
      _
    // Predicated region
    $region78: #{tpu_custom_call.1} parent=1 // pred_check
      _
    $region79: #{tpu_custom_call.1} parent=1 // pred_check_branch
      %5397 = sbr.rel (0) target = $region81
    $region80: #{tpu_custom_call.1} parent=1 // pred_region
      %5398 = dma.done [#allocation6], 128
    $region81: #{tpu_custom_call.1} parent=1 // pred_fallthru
      _
    %5399 = vsyncpa [#allocation5], 1
    %5400 = vsyncpa [#allocation8], 1
    %5401 = vsyncpa [#allocation6], 1

</llo_original>
